<compile_context>
chip_gen: v6e
topology: v6e:2x2x1
jax: 0.10.0
libtpu: 0.0.40
codegen_flags: <defaults>
</compile_context>

<pallas_src>
import functools

import jax
import jax.numpy as jnp
from jax.experimental import pallas as pl
from jax.experimental.pallas import tpu as pltpu

EPS = 1e-5


def _fused_kernel(x_ref, w_ref, res_ref, gamma_ref, beta_ref, o_ref):
    # x_ref:     (N, Cin, HW)   full input, grid-invariant across Cout tiles
    # w_ref:     (TCo, Cin)     bf16 weight tile of the 1x1 conv
    # res_ref:   (N, TCo, HW)   residual tile (f32 or bf16)
    # gamma_ref: (TCo, 1)       f32
    # beta_ref:  (TCo, 1)       f32
    # o_ref:     (N, TCo, HW)   output tile (f32 or bf16)
    n_batch, cin, hw = x_ref.shape
    inv_count = jnp.float32(1.0 / (n_batch * hw))

    w = w_ref[...]                                          # (TCo, Cin) bf16

    # ---- Stats pre-pass on x's sufficient statistics (no y retained) ----
    #   mean_c   = w_c . xsum / M
    #   E[y_c^2] = w_c (X X^T / M) w_c^T
    xsum = jnp.zeros((cin, 1), jnp.float32)
    gram = jnp.zeros((cin, cin), jnp.float32)
    for n in range(n_batch):                                 # static, tiny trip count
        xn = x_ref[n]                                        # (Cin, HW)
        xsum = xsum + jnp.sum(xn.astype(jnp.float32), axis=1, keepdims=True)
        xnb = xn.astype(jnp.bfloat16)
        gram = gram + jax.lax.dot_general(                   # X X^T (contract HW)
            xnb, xnb, dimension_numbers=(((1,), (1,)), ((), ())),
            preferred_element_type=jnp.float32)

    mean = jnp.dot(w, xsum.astype(jnp.bfloat16),
                   preferred_element_type=jnp.float32) * inv_count     # (TCo, 1)
    t = jnp.dot(w, gram.astype(jnp.bfloat16),
                preferred_element_type=jnp.float32)                    # (TCo, Cin)
    ey2 = jnp.sum(t * w.astype(jnp.float32), axis=1, keepdims=True) * inv_count
    # Single-pass variance; clamp guards rsqrt against tiny negative values
    # from cancellation (a two-pass form would be safer for strongly biased
    # conv outputs, but costs another pass over y).
    var = jnp.maximum(ey2 - mean * mean, 0.0)
    inv_std = jax.lax.rsqrt(var + jnp.float32(EPS))
    scale = gamma_ref[...] * inv_std                          # (TCo, 1)
    shift = beta_ref[...] - mean * scale                      # (TCo, 1)

    # Fold the BN scale into the weight -> single main pass, direct store.
    ws = (w.astype(jnp.float32) * scale).astype(jnp.bfloat16)

    for n in range(n_batch):
        y = jnp.dot(ws, x_ref[n].astype(jnp.bfloat16),
                    preferred_element_type=jnp.float32)       # (TCo, HW) f32
        o_ref[n] = jnp.maximum(
            y + shift + res_ref[n].astype(jnp.float32), 0.0
        ).astype(o_ref.dtype)


@functools.partial(jax.jit, static_argnames=("out_dtype", "tile_co"))
def conv_bn_add_relu(x, residual, weight, gamma, beta, *, out_dtype=None,
                     tile_co=None):
    """Fused 1x1 conv + training-mode BatchNorm + residual add + ReLU.

    x:        (N, Cin, H, W)
    residual: (N, Cout, H, W)   f32 or bf16 (bf16 halves its HBM traffic)
    weight:   (Cout, Cin, 1, 1) cast to bf16 (parameter; cast amortizes)
    gamma, beta: (Cout,)
    out_dtype: None -> x.dtype; pass jnp.bfloat16 for the mem-bound fast path.
    """
    N, Cin, H, W = x.shape
    Cout = weight.shape[0]
    HW = H * W
    if out_dtype is None:
        out_dtype = x.dtype

    if tile_co is None:
        # Two grid steps: fewer per-step overheads, bigger lane-dense DMAs,
        # and an even grid so v7x megacore gets one block per TensorCore.
        tile_co = Cout // 2 if Cout % 2 == 0 else Cout
    assert Cout % tile_co == 0, "Cout must be a multiple of tile_co"
    grid_steps = Cout // tile_co

    # Free reshapes on contiguous NCHW data (no transposes, no extra HBM pass).
    x3d = x.reshape(N, Cin, HW)
    r3d = residual.reshape(N, Cout, HW)
    w2d = weight.reshape(Cout, Cin).astype(jnp.bfloat16)
    gamma2d = gamma.astype(jnp.float32).reshape(Cout, 1)
    beta2d = beta.astype(jnp.float32).reshape(Cout, 1)

    m_total = N * HW
    out_bytes = N * Cout * HW * jnp.dtype(out_dtype).itemsize
    cost = pl.CostEstimate(
        flops=(2 * m_total * Cin * Cout                # main 1x1-conv matmul
               + grid_steps * 2 * m_total * Cin * Cin  # Gram (per grid step)
               + 2 * Cout * Cin * Cin                  # W @ G
               + 4 * m_total * Cout),                  # folded BN + add + relu
        transcendentals=Cout,                          # one rsqrt per channel
        bytes_accessed=(x3d.size * x3d.dtype.itemsize
                        + w2d.size * w2d.dtype.itemsize
                        + r3d.size * r3d.dtype.itemsize
                        + out_bytes
                        + 8 * Cout),                   # gamma + beta
    )

    out3d = pl.pallas_call(
        _fused_kernel,
        out_shape=jax.ShapeDtypeStruct((N, Cout, HW), out_dtype),
        grid_spec=pltpu.PrefetchScalarGridSpec(
            num_scalar_prefetch=0,
            grid=(grid_steps,),
            in_specs=[
                pl.BlockSpec((N, Cin, HW), lambda j: (0, 0, 0)),      # x (invariant)
                pl.BlockSpec((tile_co, Cin), lambda j: (j, 0)),       # weight tile
                pl.BlockSpec((N, tile_co, HW), lambda j: (0, j, 0)),  # residual tile
                pl.BlockSpec((tile_co, 1), lambda j: (j, 0)),         # gamma
                pl.BlockSpec((tile_co, 1), lambda j: (j, 0)),         # beta
            ],
            out_specs=pl.BlockSpec((N, tile_co, HW), lambda j: (0, j, 0)),
        ),
        compiler_params=pltpu.CompilerParams(
            dimension_semantics=("parallel",),
            vmem_limit_bytes=32 * 1024 * 1024,
        ),
        cost_estimate=cost,
    )(x3d, w2d, r3d, gamma2d, beta2d)

    return out3d.reshape(N, Cout, H, W)


def _reference(x, residual, weight, gamma, beta):
    """Pure-JAX f32 reference of the PyTorch forward (training-mode BN)."""
    Cout, Cin = weight.shape[0], weight.shape[1]
    w2d = weight.reshape(Cout, Cin)
    y = jnp.einsum("oc,nchw->nohw", w2d, x)
    mean = jnp.mean(y, axis=(0, 2, 3), keepdims=True)
    var = jnp.mean((y - mean) ** 2, axis=(0, 2, 3), keepdims=True)
    yn = (y - mean) / jnp.sqrt(var + EPS)
    yn = yn * gamma[None, :, None, None] + beta[None, :, None, None]
    return jnp.maximum(yn + residual, 0.0)


if __name__ == "__main__":
    # Small shapes consistent with the module (Cin->Cout 1x1 conv, residual
    # has Cout channels).  Original: N=1, Cin=256, Cout=1024, H=W=28.
    N, Cin, Cout, H, W = 2, 128, 512, 14, 14

    key = jax.random.PRNGKey(0)
    k_x, k_r, k_w, k_g, k_b = jax.random.split(key, 5)

    x218 = jax.random.normal(k_x, (N, Cin, H, W), dtype=jnp.float32)
    x212 = jax.random.normal(k_r, (N, Cout, H, W), dtype=jnp.float32)

    weight = jax.random.normal(k_w, (Cout, Cin, 1, 1), dtype=jnp.float32) * 0.05
    gamma = 1.0 + 0.1 * jax.random.normal(k_g, (Cout,), dtype=jnp.float32)
    beta = 0.1 * jax.random.normal(k_b, (Cout,), dtype=jnp.float32)

    ref = _reference(x218, x212, weight, gamma, beta)

    # --- f32 path: matches the PyTorch module's dtype semantics ---
    out = jax.block_until_ready(conv_bn_add_relu(x218, x212, weight, gamma, beta))
    assert out.shape == (N, Cout, H, W) and out.dtype == jnp.float32
    err = float(jnp.max(jnp.abs(out - ref)))
    assert jnp.allclose(out, ref, atol=4e-2, rtol=4e-2), f"f32 max err {err}"

    # --- bf16 residual / bf16 output path (mem-bound fast path per review) ---
    out_bf16 = jax.block_until_ready(
        conv_bn_add_relu(x218, x212.astype(jnp.bfloat16),
                         weight.astype(jnp.bfloat16), gamma, beta,
                         out_dtype=jnp.bfloat16))
    assert out_bf16.dtype == jnp.bfloat16
    err_bf16 = float(jnp.max(jnp.abs(out_bf16.astype(jnp.float32) - ref)))
    assert jnp.allclose(out_bf16.astype(jnp.float32), ref,
                        atol=1.5e-1, rtol=1.5e-1), f"bf16 max err {err_bf16}"

    print("KERNEL_OK")
</pallas_src>

<mosaic_0001>
module attributes {stable_mosaic.version = 11 : i64} {
  func.func @_fused_kernel(%arg0: i32, %arg1: memref<2x128x196xf32, #tpu.memory_space<vmem>>, %arg2: memref<256x128xbf16, #tpu.memory_space<vmem>>, %arg3: memref<2x256x196xf32, #tpu.memory_space<vmem>>, %arg4: memref<256x1xf32, #tpu.memory_space<vmem>>, %arg5: memref<256x1xf32, #tpu.memory_space<vmem>>, %arg6: memref<2x256x196xf32, #tpu.memory_space<vmem>>) attributes {dimension_semantics = [#tpu.dimension_semantics<parallel>], iteration_bounds = array<i64: 2>, scalar_prefetch = 0 : i64, scratch_operands = 0 : i64, tpu.core_type = #tpu.core_type<tc>, window_params = [{pipeline_mode = #tpu.pipeline_mode<synchronous>, transform_indices = @transform_0, window_bounds = array<i64: 2, 128, 196>}, {transform_indices = @transform_1, window_bounds = array<i64: 256, 128>}, {transform_indices = @transform_2, window_bounds = array<i64: 2, 256, 196>}, {transform_indices = @transform_3, window_bounds = array<i64: 256, 1>}, {transform_indices = @transform_4, window_bounds = array<i64: 256, 1>}, {transform_indices = @transform_5, window_bounds = array<i64: 2, 256, 196>}]} {
    %c0 = arith.constant 0 : index
    %c0_0 = arith.constant 0 : index
    %0 = vector.load %arg2[%c0, %c0_0] : memref<256x128xbf16, #tpu.memory_space<vmem>>, vector<256x128xbf16>
    %cst = arith.constant 0.000000e+00 : f32
    %1 = vector.broadcast %cst : f32 to vector<128x1xf32>
    %cst_1 = arith.constant 0.000000e+00 : f32
    %2 = vector.broadcast %cst_1 : f32 to vector<128x128xf32>
    %c0_2 = arith.constant 0 : index
    %c0_3 = arith.constant 0 : index
    %c0_4 = arith.constant 0 : index
    %3 = vector.load %arg1[%c0_2, %c0_3, %c0_4] : memref<2x128x196xf32, #tpu.memory_space<vmem>>, vector<1x128x196xf32>
    %4 = vector.shape_cast %3 : vector<1x128x196xf32> to vector<128x196xf32>
    %cst_5 = arith.constant dense<0.000000e+00> : vector<128xf32>
    %5 = vector.multi_reduction <add>, %4, %cst_5 [1] : vector<128x196xf32> to vector<128xf32>
    %6 = vector.shape_cast %5 : vector<128xf32> to vector<128x1xf32>
    %7 = arith.addf %1, %6 : vector<128x1xf32>
    %8 = arith.truncf %4 : vector<128x196xf32> to vector<128x196xbf16>
    %cst_6 = arith.constant dense<0.000000e+00> : vector<128x128xf32>
    %9 = tpu.matmul %8, %8, %cst_6 {dimension_numbers = #tpu.dot_dimension_numbers<[1], [1], [0], [0], [0, 0, 1, 0], [], []>} : vector<128x196xbf16>, vector<128x196xbf16>, vector<128x128xf32> -> vector<128x128xf32>
    %10 = arith.addf %2, %9 : vector<128x128xf32>
    %c1 = arith.constant 1 : index
    %c0_7 = arith.constant 0 : index
    %c0_8 = arith.constant 0 : index
    %11 = vector.load %arg1[%c1, %c0_7, %c0_8] : memref<2x128x196xf32, #tpu.memory_space<vmem>>, vector<1x128x196xf32>
    %12 = vector.shape_cast %11 : vector<1x128x196xf32> to vector<128x196xf32>
    %cst_9 = arith.constant dense<0.000000e+00> : vector<128xf32>
    %13 = vector.multi_reduction <add>, %12, %cst_9 [1] : vector<128x196xf32> to vector<128xf32>
    %14 = vector.shape_cast %13 : vector<128xf32> to vector<128x1xf32>
    %15 = arith.addf %7, %14 : vector<128x1xf32>
    %16 = arith.truncf %12 : vector<128x196xf32> to vector<128x196xbf16>
    %cst_10 = arith.constant dense<0.000000e+00> : vector<128x128xf32>
    %17 = tpu.matmul %16, %16, %cst_10 {dimension_numbers = #tpu.dot_dimension_numbers<[1], [1], [0], [0], [0, 0, 1, 0], [], []>} : vector<128x196xbf16>, vector<128x196xbf16>, vector<128x128xf32> -> vector<128x128xf32>
    %18 = arith.addf %10, %17 : vector<128x128xf32>
    %19 = arith.truncf %15 : vector<128x1xf32> to vector<128x1xbf16>
    %cst_11 = arith.constant dense<0.000000e+00> : vector<256x1xf32>
    %20 = tpu.matmul %0, %19, %cst_11 {dimension_numbers = #tpu.dot_dimension_numbers<[1], [0], [0], [1], [0, 0, 1, 1], [], []>} : vector<256x128xbf16>, vector<128x1xbf16>, vector<256x1xf32> -> vector<256x1xf32>
    %cst_12 = arith.constant 0.00255102036 : f32
    %21 = vector.broadcast %cst_12 : f32 to vector<256x1xf32>
    %22 = arith.mulf %20, %21 : vector<256x1xf32>
    %23 = arith.truncf %18 : vector<128x128xf32> to vector<128x128xbf16>
    %cst_13 = arith.constant dense<0.000000e+00> : vector<256x128xf32>
    %24 = tpu.matmul %0, %23, %cst_13 {dimension_numbers = #tpu.dot_dimension_numbers<[1], [0], [0], [1], [0, 0, 1, 1], [], []>} : vector<256x128xbf16>, vector<128x128xbf16>, vector<256x128xf32> -> vector<256x128xf32>
    %25 = arith.extf %0 : vector<256x128xbf16> to vector<256x128xf32>
    %26 = arith.mulf %24, %25 : vector<256x128xf32>
    %cst_14 = arith.constant dense<0.000000e+00> : vector<256xf32>
    %27 = vector.multi_reduction <add>, %26, %cst_14 [1] : vector<256x128xf32> to vector<256xf32>
    %28 = vector.shape_cast %27 : vector<256xf32> to vector<256x1xf32>
    %cst_15 = arith.constant 0.00255102036 : f32
    %29 = vector.broadcast %cst_15 : f32 to vector<256x1xf32>
    %30 = arith.mulf %28, %29 : vector<256x1xf32>
    %31 = arith.mulf %22, %22 : vector<256x1xf32>
    %32 = arith.subf %30, %31 : vector<256x1xf32>
    %cst_16 = arith.constant 0.000000e+00 : f32
    %33 = vector.broadcast %cst_16 : f32 to vector<256x1xf32>
    %34 = arith.maximumf %32, %33 : vector<256x1xf32>
    %cst_17 = arith.constant 9.99999974E-6 : f32
    %35 = vector.broadcast %cst_17 : f32 to vector<256x1xf32>
    %36 = arith.addf %34, %35 : vector<256x1xf32>
    %37 = math.rsqrt %36 : vector<256x1xf32>
    %c0_18 = arith.constant 0 : index
    %c0_19 = arith.constant 0 : index
    %38 = vector.load %arg4[%c0_18, %c0_19] : memref<256x1xf32, #tpu.memory_space<vmem>>, vector<256x1xf32>
    %39 = arith.mulf %38, %37 : vector<256x1xf32>
    %c0_20 = arith.constant 0 : index
    %c0_21 = arith.constant 0 : index
    %40 = vector.load %arg5[%c0_20, %c0_21] : memref<256x1xf32, #tpu.memory_space<vmem>>, vector<256x1xf32>
    %41 = arith.mulf %22, %39 : vector<256x1xf32>
    %42 = arith.subf %40, %41 : vector<256x1xf32>
    %43 = arith.extf %0 : vector<256x128xbf16> to vector<256x128xf32>
    %44 = vector.broadcast %39 : vector<256x1xf32> to vector<256x128xf32>
    %45 = arith.mulf %43, %44 : vector<256x128xf32>
    %46 = arith.truncf %45 : vector<256x128xf32> to vector<256x128xbf16>
    %c0_22 = arith.constant 0 : index
    %c0_23 = arith.constant 0 : index
    %c0_24 = arith.constant 0 : index
    %47 = vector.load %arg1[%c0_22, %c0_23, %c0_24] : memref<2x128x196xf32, #tpu.memory_space<vmem>>, vector<1x128x196xf32>
    %48 = vector.shape_cast %47 : vector<1x128x196xf32> to vector<128x196xf32>
    %49 = arith.truncf %48 : vector<128x196xf32> to vector<128x196xbf16>
    %cst_25 = arith.constant dense<0.000000e+00> : vector<256x196xf32>
    %50 = tpu.matmul %46, %49, %cst_25 {dimension_numbers = #tpu.dot_dimension_numbers<[1], [0], [0], [1], [0, 0, 1, 1], [], []>} : vector<256x128xbf16>, vector<128x196xbf16>, vector<256x196xf32> -> vector<256x196xf32>
    %51 = vector.broadcast %42 : vector<256x1xf32> to vector<256x196xf32>
    %52 = arith.addf %50, %51 : vector<256x196xf32>
    %c0_26 = arith.constant 0 : index
    %c0_27 = arith.constant 0 : index
    %c0_28 = arith.constant 0 : index
    %53 = vector.load %arg3[%c0_26, %c0_27, %c0_28] : memref<2x256x196xf32, #tpu.memory_space<vmem>>, vector<1x256x196xf32>
    %54 = vector.shape_cast %53 : vector<1x256x196xf32> to vector<256x196xf32>
    %55 = arith.addf %52, %54 : vector<256x196xf32>
    %cst_29 = arith.constant 0.000000e+00 : f32
    %56 = vector.broadcast %cst_29 : f32 to vector<256x196xf32>
    %57 = arith.maximumf %55, %56 : vector<256x196xf32>
    %c0_30 = arith.constant 0 : index
    %c0_31 = arith.constant 0 : index
    %c0_32 = arith.constant 0 : index
    %58 = vector.load %arg6[%c0_30, %c0_31, %c0_32] : memref<2x256x196xf32, #tpu.memory_space<vmem>>, vector<1x256x196xf32>
    %59 = vector.shape_cast %58 : vector<1x256x196xf32> to vector<256x196xf32>
    %60 = vector.shape_cast %57 : vector<256x196xf32> to vector<1x256x196xf32>
    tpu.vector_store %arg6[%c0_30, %c0_31, %c0_32], %60 {strides = array<i32>} : memref<2x256x196xf32, #tpu.memory_space<vmem>>, vector<1x256x196xf32>,
    %c1_33 = arith.constant 1 : index
    %c0_34 = arith.constant 0 : index
    %c0_35 = arith.constant 0 : index
    %61 = vector.load %arg1[%c1_33, %c0_34, %c0_35] : memref<2x128x196xf32, #tpu.memory_space<vmem>>, vector<1x128x196xf32>
    %62 = vector.shape_cast %61 : vector<1x128x196xf32> to vector<128x196xf32>
    %63 = arith.truncf %62 : vector<128x196xf32> to vector<128x196xbf16>
    %cst_36 = arith.constant dense<0.000000e+00> : vector<256x196xf32>
    %64 = tpu.matmul %46, %63, %cst_36 {dimension_numbers = #tpu.dot_dimension_numbers<[1], [0], [0], [1], [0, 0, 1, 1], [], []>} : vector<256x128xbf16>, vector<128x196xbf16>, vector<256x196xf32> -> vector<256x196xf32>
    %65 = vector.broadcast %42 : vector<256x1xf32> to vector<256x196xf32>
    %66 = arith.addf %64, %65 : vector<256x196xf32>
    %c1_37 = arith.constant 1 : index
    %c0_38 = arith.constant 0 : index
    %c0_39 = arith.constant 0 : index
    %67 = vector.load %arg3[%c1_37, %c0_38, %c0_39] : memref<2x256x196xf32, #tpu.memory_space<vmem>>, vector<1x256x196xf32>
    %68 = vector.shape_cast %67 : vector<1x256x196xf32> to vector<256x196xf32>
    %69 = arith.addf %66, %68 : vector<256x196xf32>
    %cst_40 = arith.constant 0.000000e+00 : f32
    %70 = vector.broadcast %cst_40 : f32 to vector<256x196xf32>
    %71 = arith.maximumf %69, %70 : vector<256x196xf32>
    %c1_41 = arith.constant 1 : index
    %c0_42 = arith.constant 0 : index
    %c0_43 = arith.constant 0 : index
    %72 = vector.load %arg6[%c1_41, %c0_42, %c0_43] : memref<2x256x196xf32, #tpu.memory_space<vmem>>, vector<1x256x196xf32>
    %73 = vector.shape_cast %72 : vector<1x256x196xf32> to vector<256x196xf32>
    %74 = vector.shape_cast %71 : vector<256x196xf32> to vector<1x256x196xf32>
    tpu.vector_store %arg6[%c1_41, %c0_42, %c0_43], %74 {strides = array<i32>} : memref<2x256x196xf32, #tpu.memory_space<vmem>>, vector<1x256x196xf32>,
    return
  }
  func.func @transform_0(%arg0: i32) -> (i32, i32, i32) {
    %c0_i32 = arith.constant 0 : i32
    %c0_i32_0 = arith.constant 0 : i32
    %c0_i32_1 = arith.constant 0 : i32
    %c0_i32_2 = arith.constant 0 : i32
    return %c0_i32, %c0_i32_0, %c0_i32_1 : i32, i32, i32
  }
  func.func @transform_1(%arg0: i32) -> (i32, i32) {
    %c0_i32 = arith.constant 0 : i32
    %c0_i32_0 = arith.constant 0 : i32
    return %arg0, %c0_i32 : i32, i32
  }
  func.func @transform_2(%arg0: i32) -> (i32, i32, i32) {
    %c0_i32 = arith.constant 0 : i32
    %c0_i32_0 = arith.constant 0 : i32
    %c0_i32_1 = arith.constant 0 : i32
    return %c0_i32, %arg0, %c0_i32_0 : i32, i32, i32
  }
  func.func @transform_3(%arg0: i32) -> (i32, i32) {
    %c0_i32 = arith.constant 0 : i32
    %c0_i32_0 = arith.constant 0 : i32
    return %arg0, %c0_i32 : i32, i32
  }
  func.func @transform_4(%arg0: i32) -> (i32, i32) {
    %c0_i32 = arith.constant 0 : i32
    %c0_i32_0 = arith.constant 0 : i32
    return %arg0, %c0_i32 : i32, i32
  }
  func.func @transform_5(%arg0: i32) -> (i32, i32, i32) {
    %c0_i32 = arith.constant 0 : i32
    %c0_i32_0 = arith.constant 0 : i32
    %c0_i32_1 = arith.constant 0 : i32
    return %c0_i32, %arg0, %c0_i32_0 : i32, i32, i32
  }
}

</mosaic_0001>

<llo_original>
// kernel: conv_bn_add_relu.1
$region0: #{conv_bn_add_relu.1}
  #allocation0 [shape = 'u32[]', space=smem, size = 0x4, offset = 0x4, fixed_abs, tag = 'smem constant byte address 0x4 - core index']
  #allocation1 [shape = 'u32[144,128]{1,0:T(1,128)}', space=vmem, size = 0x12000, scoped, tag = 'internal scratch']
  %s0 = inlined_call_operand.vmem [shape: f32[2,128,196], index: 0, kind: input, shape index: {}]
  %s1 = inlined_call_operand.vmem [shape: bf16[512,128], index: 1, kind: input, shape index: {}]
  %s2 = inlined_call_operand.vmem [shape: f32[2,512,196], index: 2, kind: input, shape index: {}]
  %s3 = inlined_call_operand.vmem [shape: f32[512,1], index: 3, kind: input, shape index: {}]
  %s4 = inlined_call_operand.vmem [shape: f32[512,1], index: 4, kind: input, shape index: {}]
  %s5 = inlined_call_operand.vmem [shape: f32[2,512,196], index: 5, kind: output, shape index: {}]
  %s6 = sld [smem:[#allocation0]]
  $region95: #{conv_bn_add_relu.1} parent=0
    _
  %s8 = ssub.s32 1, %s6
  %s9 = scalar_select 0, %s8, %s6
  $region1: #{conv_bn_add_relu.1} parent=0
    #allocation2 [shape = 'u8[1048576]{0}', space=vmem, size = 0x100000, scoped, tag = 'input window, operand 2']
    #allocation3 [shape = 'u8[1048576]{0}', space=vmem, size = 0x100000, scoped, tag = 'output window, operand 0']
    loop: start=0, step=1, limit=4
    $region2: #{conv_bn_add_relu.1} parent=1 // loop_pre_header
      _
    $region3: #{conv_bn_add_relu.1} parent=1 // loop_header
      %s11 = sphi 0, %s15
      %p12 = scmp.ge.s32.totalorder %s11, 4
      %s19 = sphi 0, %s19
      %s21 = sphi 0, %s19
      %s22 = sphi 0, %s21
      %s36 = sphi 0, %s22
      %s42 = sphi 0, %s44
      %s45 = sphi 0, %s42
      %s46 = sphi 0, %s45
      %s62 = sphi 0, %s46
      %s68 = sphi 0, %s70
      %s71 = sphi 0, %s68
      %s72 = sphi 0, %s71
      %s88 = sphi 0, %s72
      %s94 = sphi 0, %s96
      %s97 = sphi 0, %s94
      %s98 = sphi 0, %s97
      %s114 = sphi 0, %s98
      %s120 = sphi 0, %s122
      %s123 = sphi 0, %s120
      %s124 = sphi 0, %s123
      %s140 = sphi 0, %s124
      %s146 = sphi 0, %s148
      %s149 = sphi 0, %s146
      %s150 = sphi 0, %s149
      %s166 = sphi 0, %s150
    $region4: #{conv_bn_add_relu.1} parent=1 // loop_header_branch
      %14 = sbr.rel (%p12) target = $region8
    $region5: #{conv_bn_add_relu.1} parent=1 // loop_body
      %s16 = ssub.s32 %s11, 1
      %s17 = ssub.s32 %s11, 2
      %s18 = sadd.s32 %s11, 1
      %s20 = sadd.s32 %s19, 1
      %p23 = scmp.eq.s32.totalorder %s11, 1
      %p24 = scmp.ne.s32.totalorder %s19, %s21
      %p25 = scmp.eq.s32.totalorder %s11, 0
      %p26 = por %p24, %p25
      %p27 = scmp.ne.s32.totalorder %s19, %s21
      %p28 = scmp.eq.s32.totalorder %s16, 1
      %p29 = por %p27, %p28
      %p30 = scmp.ne.s32.totalorder %s21, %s22
      %p31 = scmp.eq.s32.totalorder %s16, 0
      %p32 = por %p30, %p31
      %p33 = scmp.ne.s32.totalorder %s21, %s22
      %p34 = scmp.eq.s32.totalorder %s17, 1
      %p35 = por %p33, %p34
      %p37 = scmp.ne.s32.totalorder %s22, %s36
      %p38 = scmp.eq.s32.totalorder %s17, 0
      %p39 = por %p37, %p38
      %s40 = ssub.s32 %s11, %s18
      %p41 = scmp.eq.s32.totalorder %s40, 0
      %s43 = sadd.s32 %s42, 1
      %s44 = scalar_select %p41, %s42, %s43
      %p47 = pneg %p41
      %p48 = scmp.eq.s32.totalorder %s11, 1
      %p49 = por %p47, %p48
      %p50 = scmp.ne.s32.totalorder %s42, %s45
      %p51 = scmp.eq.s32.totalorder %s11, 0
      %p52 = por %p50, %p51
      %p53 = scmp.ne.s32.totalorder %s42, %s45
      %p54 = scmp.eq.s32.totalorder %s16, 1
      %p55 = por %p53, %p54
      %p56 = scmp.ne.s32.totalorder %s45, %s46
      %p57 = scmp.eq.s32.totalorder %s16, 0
      %p58 = por %p56, %p57
      %p59 = scmp.ne.s32.totalorder %s45, %s46
      %p60 = scmp.eq.s32.totalorder %s17, 1
      %p61 = por %p59, %p60
      %p63 = scmp.ne.s32.totalorder %s46, %s62
      %p64 = scmp.eq.s32.totalorder %s17, 0
      %p65 = por %p63, %p64
      %s66 = ssub.s32 %s11, %s18
      %p67 = scmp.eq.s32.totalorder %s66, 0
      %s69 = sadd.s32 %s68, 1
      %s70 = scalar_select %p67, %s68, %s69
      %p73 = pneg %p67
      %p74 = scmp.eq.s32.totalorder %s11, 1
      %p75 = por %p73, %p74
      %p76 = scmp.ne.s32.totalorder %s68, %s71
      %p77 = scmp.eq.s32.totalorder %s11, 0
      %p78 = por %p76, %p77
      %p79 = scmp.ne.s32.totalorder %s68, %s71
      %p80 = scmp.eq.s32.totalorder %s16, 1
      %p81 = por %p79, %p80
      %p82 = scmp.ne.s32.totalorder %s71, %s72
      %p83 = scmp.eq.s32.totalorder %s16, 0
      %p84 = por %p82, %p83
      %p85 = scmp.ne.s32.totalorder %s71, %s72
      %p86 = scmp.eq.s32.totalorder %s17, 1
      %p87 = por %p85, %p86
      %p89 = scmp.ne.s32.totalorder %s72, %s88
      %p90 = scmp.eq.s32.totalorder %s17, 0
      %p91 = por %p89, %p90
      %s92 = ssub.s32 %s11, %s18
      %p93 = scmp.eq.s32.totalorder %s92, 0
      %s95 = sadd.s32 %s94, 1
      %s96 = scalar_select %p93, %s94, %s95
      %p99 = pneg %p93
      %p100 = scmp.eq.s32.totalorder %s11, 1
      %p101 = por %p99, %p100
      %p102 = scmp.ne.s32.totalorder %s94, %s97
      %p103 = scmp.eq.s32.totalorder %s11, 0
      %p104 = por %p102, %p103
      %p105 = scmp.ne.s32.totalorder %s94, %s97
      %p106 = scmp.eq.s32.totalorder %s16, 1
      %p107 = por %p105, %p106
      %p108 = scmp.ne.s32.totalorder %s97, %s98
      %p109 = scmp.eq.s32.totalorder %s16, 0
      %p110 = por %p108, %p109
      %p111 = scmp.ne.s32.totalorder %s97, %s98
      %p112 = scmp.eq.s32.totalorder %s17, 1
      %p113 = por %p111, %p112
      %p115 = scmp.ne.s32.totalorder %s98, %s114
      %p116 = scmp.eq.s32.totalorder %s17, 0
      %p117 = por %p115, %p116
      %s118 = ssub.s32 %s11, %s18
      %p119 = scmp.eq.s32.totalorder %s118, 0
      %s121 = sadd.s32 %s120, 1
      %s122 = scalar_select %p119, %s120, %s121
      %p125 = pneg %p119
      %p126 = scmp.eq.s32.totalorder %s11, 1
      %p127 = por %p125, %p126
      %p128 = scmp.ne.s32.totalorder %s120, %s123
      %p129 = scmp.eq.s32.totalorder %s11, 0
      %p130 = por %p128, %p129
      %p131 = scmp.ne.s32.totalorder %s120, %s123
      %p132 = scmp.eq.s32.totalorder %s16, 1
      %p133 = por %p131, %p132
      %p134 = scmp.ne.s32.totalorder %s123, %s124
      %p135 = scmp.eq.s32.totalorder %s16, 0
      %p136 = por %p134, %p135
      %p137 = scmp.ne.s32.totalorder %s123, %s124
      %p138 = scmp.eq.s32.totalorder %s17, 1
      %p139 = por %p137, %p138
      %p141 = scmp.ne.s32.totalorder %s124, %s140
      %p142 = scmp.eq.s32.totalorder %s17, 0
      %p143 = por %p141, %p142
      %s144 = ssub.s32 %s11, %s18
      %p145 = scmp.eq.s32.totalorder %s144, 0
      %s147 = sadd.s32 %s146, 1
      %s148 = scalar_select %p145, %s146, %s147
      %p151 = pneg %p145
      %p152 = scmp.eq.s32.totalorder %s11, 1
      %p153 = por %p151, %p152
      %p154 = scmp.ne.s32.totalorder %s146, %s149
      %p155 = scmp.eq.s32.totalorder %s11, 0
      %p156 = por %p154, %p155
      %p157 = scmp.ne.s32.totalorder %s146, %s149
      %p158 = scmp.eq.s32.totalorder %s16, 1
      %p159 = por %p157, %p158
      %p160 = scmp.ne.s32.totalorder %s149, %s150
      %p161 = scmp.eq.s32.totalorder %s16, 0
      %p162 = por %p160, %p161
      %p163 = scmp.ne.s32.totalorder %s149, %s150
      %p164 = scmp.eq.s32.totalorder %s17, 1
      %p165 = por %p163, %p164
      %p167 = scmp.ne.s32.totalorder %s150, %s166
      %p168 = scmp.eq.s32.totalorder %s17, 0
      %p169 = por %p167, %p168
      %p170 = scmp.le.s32.totalorder 1, %s11
      %p171 = scmp.lt.s32.totalorder %s11, 3
      %p172 = pnand %p170, %p171
      %p173 = pneg %p172
      // Predicated region
      $region9: #{conv_bn_add_relu.1} parent=5 // pred_check
        _
      $region10: #{conv_bn_add_relu.1} parent=5 // pred_check_branch
        %175 = sbr.rel (%p172) target = $region12
      $region11: #{conv_bn_add_relu.1} parent=5 // pred_region
        %s176 = ssub.s32 %s11, 1
        // Predicated region
        $region13: #{conv_bn_add_relu.1} parent=11 // pred_check
          %p177 = pneg %p32
        $region14: #{conv_bn_add_relu.1} parent=11 // pred_check_branch
          %179 = sbr.rel (%p177) target = $region16
        $region15: #{conv_bn_add_relu.1} parent=11 // pred_region
          _
        $region16: #{conv_bn_add_relu.1} parent=11 // pred_fallthru
          _
      $region12: #{conv_bn_add_relu.1} parent=5 // pred_fallthru
        _
      %p180 = scmp.lt.s32.totalorder %s11, 2
      // Predicated region
      $region17: #{conv_bn_add_relu.1} parent=5 // pred_check
        %p181 = pneg %p180
      $region18: #{conv_bn_add_relu.1} parent=5 // pred_check_branch
        %183 = sbr.rel (%p181) target = $region20
      $region19: #{conv_bn_add_relu.1} parent=5 // pred_region
        // Predicated region
        $region21: #{conv_bn_add_relu.1} parent=19 // pred_check
          %p184 = pneg %p52
        $region22: #{conv_bn_add_relu.1} parent=19 // pred_check_branch
          %186 = sbr.rel (%p184) target = $region24
        $region23: #{conv_bn_add_relu.1} parent=19 // pred_region
          %s187 = smul.u32 32, %s11
          %p188 = scmp.lt.s32.totalorder %s187, 63
          %s189 = scalar_select %p188, %s187, 63
          %s190 = smul.addr %s189, 4
          %s191 = scalar_lea.vmem %s1, %s190
          %s192 = smul.u32 32, %s11
        $region24: #{conv_bn_add_relu.1} parent=19 // pred_fallthru
          _
        // Predicated region
        $region25: #{conv_bn_add_relu.1} parent=19 // pred_check
          %p193 = pneg %p78
        $region26: #{conv_bn_add_relu.1} parent=19 // pred_check_branch
          %195 = sbr.rel (%p193) target = $region28
        $region27: #{conv_bn_add_relu.1} parent=19 // pred_region
          %s196 = sand.u32 %s68, 1
          %s197 = sand.u32 %s68, 1
          %s198 = smul.addr %s197, 1024
          %s199 = scalar_lea.vmem [#allocation2], %s198
          %s200 = smul.u32 32, %s11
          %s201 = smul.addr %s200, 2
          %s202 = smul.addr %s201, 8
          %s203 = scalar_lea.vmem %s2, %s202
          // Predicated region
          $region29: #{conv_bn_add_relu.1} parent=27 // pred_check
            _
          $region30: #{conv_bn_add_relu.1} parent=27 // pred_check_branch
            %205 = sbr.rel (0) target = $region32
          $region31: #{conv_bn_add_relu.1} parent=27 // pred_region
            // Predicated region
            $region33: #{conv_bn_add_relu.1} parent=31 // pred_check
              _
            $region34: #{conv_bn_add_relu.1} parent=31 // pred_check_branch
              %207 = sbr.rel (0) target = $region36
            $region35: #{conv_bn_add_relu.1} parent=31 // pred_region
              loop: start=0, step=1, limit=1
              $region37: #{conv_bn_add_relu.1} parent=35 // loop_pre_header
                _
              $region38: #{conv_bn_add_relu.1} parent=35 // loop_header
                %s209 = sphi 0, %s213
                %p210 = scmp.ge.s32.totalorder %s209, 1
                %s214 = sphi %s203, %s203
                %s215 = sphi %s199, %s199
              $region39: #{conv_bn_add_relu.1} parent=35 // loop_header_branch
                %212 = sbr.rel (%p210) target = $region43
              $region40: #{conv_bn_add_relu.1} parent=35 // loop_body
                %v216 = vld [vmem:[%s214] sm:$0xff]
                %217 = vst [vmem:[%s215] sm:$0xff] %v216
                %v218 = vld [vmem:[%s214 + $0x8] sm:$0xff]
                %219 = vst [vmem:[%s215 + $0x8] sm:$0xff] %v218
                %v220 = vld [vmem:[%s214 + $0x10] sm:$0xff]
                %221 = vst [vmem:[%s215 + $0x10] sm:$0xff] %v220
                %v222 = vld [vmem:[%s214 + $0x18] sm:$0xff]
                %223 = vst [vmem:[%s215 + $0x18] sm:$0xff] %v222
                %v224 = vld [vmem:[%s214 + $0x20] sm:$0xff]
                %225 = vst [vmem:[%s215 + $0x20] sm:$0xff] %v224
                %v226 = vld [vmem:[%s214 + $0x28] sm:$0xff]
                %227 = vst [vmem:[%s215 + $0x28] sm:$0xff] %v226
                %v228 = vld [vmem:[%s214 + $0x30] sm:$0xff]
                %229 = vst [vmem:[%s215 + $0x30] sm:$0xff] %v228
                %v230 = vld [vmem:[%s214 + $0x38] sm:$0xff]
                %231 = vst [vmem:[%s215 + $0x38] sm:$0xff] %v230
                %v232 = vld [vmem:[%s214 + $0x40] sm:$0xff]
                %233 = vst [vmem:[%s215 + $0x40] sm:$0xff] %v232
                %v234 = vld [vmem:[%s214 + $0x48] sm:$0xff]
                %235 = vst [vmem:[%s215 + $0x48] sm:$0xff] %v234
                %v236 = vld [vmem:[%s214 + $0x50] sm:$0xff]
                %237 = vst [vmem:[%s215 + $0x50] sm:$0xff] %v236
                %v238 = vld [vmem:[%s214 + $0x58] sm:$0xff]
                %239 = vst [vmem:[%s215 + $0x58] sm:$0xff] %v238
                %v240 = vld [vmem:[%s214 + $0x60] sm:$0xff]
                %241 = vst [vmem:[%s215 + $0x60] sm:$0xff] %v240
                %v242 = vld [vmem:[%s214 + $0x68] sm:$0xff]
                %243 = vst [vmem:[%s215 + $0x68] sm:$0xff] %v242
                %v244 = vld [vmem:[%s214 + $0x70] sm:$0xff]
                %245 = vst [vmem:[%s215 + $0x70] sm:$0xff] %v244
                %v246 = vld [vmem:[%s214 + $0x78] sm:$0xff]
                %247 = vst [vmem:[%s215 + $0x78] sm:$0xff] %v246
                %v248 = vld [vmem:[%s214 + $0x80] sm:$0xff]
                %249 = vst [vmem:[%s215 + $0x80] sm:$0xff] %v248
                %v250 = vld [vmem:[%s214 + $0x88] sm:$0xff]
                %251 = vst [vmem:[%s215 + $0x88] sm:$0xff] %v250
                %v252 = vld [vmem:[%s214 + $0x90] sm:$0xff]
                %253 = vst [vmem:[%s215 + $0x90] sm:$0xff] %v252
                %v254 = vld [vmem:[%s214 + $0x98] sm:$0xff]
                %255 = vst [vmem:[%s215 + $0x98] sm:$0xff] %v254
                %v256 = vld [vmem:[%s214 + $0xa0] sm:$0xff]
                %257 = vst [vmem:[%s215 + $0xa0] sm:$0xff] %v256
                %v258 = vld [vmem:[%s214 + $0xa8] sm:$0xff]
                %259 = vst [vmem:[%s215 + $0xa8] sm:$0xff] %v258
                %v260 = vld [vmem:[%s214 + $0xb0] sm:$0xff]
                %261 = vst [vmem:[%s215 + $0xb0] sm:$0xff] %v260
                %v262 = vld [vmem:[%s214 + $0xb8] sm:$0xff]
                %263 = vst [vmem:[%s215 + $0xb8] sm:$0xff] %v262
                %v264 = vld [vmem:[%s214 + $0xc0] sm:$0xff]
                %265 = vst [vmem:[%s215 + $0xc0] sm:$0xff] %v264
                %v266 = vld [vmem:[%s214 + $0xc8] sm:$0xff]
                %267 = vst [vmem:[%s215 + $0xc8] sm:$0xff] %v266
                %v268 = vld [vmem:[%s214 + $0xd0] sm:$0xff]
                %269 = vst [vmem:[%s215 + $0xd0] sm:$0xff] %v268
                %v270 = vld [vmem:[%s214 + $0xd8] sm:$0xff]
                %271 = vst [vmem:[%s215 + $0xd8] sm:$0xff] %v270
                %v272 = vld [vmem:[%s214 + $0xe0] sm:$0xff]
                %273 = vst [vmem:[%s215 + $0xe0] sm:$0xff] %v272
                %v274 = vld [vmem:[%s214 + $0xe8] sm:$0xff]
                %275 = vst [vmem:[%s215 + $0xe8] sm:$0xff] %v274
                %v276 = vld [vmem:[%s214 + $0xf0] sm:$0xff]
                %277 = vst [vmem:[%s215 + $0xf0] sm:$0xff] %v276
                %v278 = vld [vmem:[%s214 + $0xf8] sm:$0xff]
                %279 = vst [vmem:[%s215 + $0xf8] sm:$0xff] %v278
                %v280 = vld [vmem:[%s214 + $0x100] sm:$0xff]
                %281 = vst [vmem:[%s215 + $0x100] sm:$0xff] %v280
                %v282 = vld [vmem:[%s214 + $0x108] sm:$0xff]
                %283 = vst [vmem:[%s215 + $0x108] sm:$0xff] %v282
                %v284 = vld [vmem:[%s214 + $0x110] sm:$0xff]
                %285 = vst [vmem:[%s215 + $0x110] sm:$0xff] %v284
                %v286 = vld [vmem:[%s214 + $0x118] sm:$0xff]
                %287 = vst [vmem:[%s215 + $0x118] sm:$0xff] %v286
                %v288 = vld [vmem:[%s214 + $0x120] sm:$0xff]
                %289 = vst [vmem:[%s215 + $0x120] sm:$0xff] %v288
                %v290 = vld [vmem:[%s214 + $0x128] sm:$0xff]
                %291 = vst [vmem:[%s215 + $0x128] sm:$0xff] %v290
                %v292 = vld [vmem:[%s214 + $0x130] sm:$0xff]
                %293 = vst [vmem:[%s215 + $0x130] sm:$0xff] %v292
                %v294 = vld [vmem:[%s214 + $0x138] sm:$0xff]
                %295 = vst [vmem:[%s215 + $0x138] sm:$0xff] %v294
                %v296 = vld [vmem:[%s214 + $0x140] sm:$0xff]
                %297 = vst [vmem:[%s215 + $0x140] sm:$0xff] %v296
                %v298 = vld [vmem:[%s214 + $0x148] sm:$0xff]
                %299 = vst [vmem:[%s215 + $0x148] sm:$0xff] %v298
                %v300 = vld [vmem:[%s214 + $0x150] sm:$0xff]
                %301 = vst [vmem:[%s215 + $0x150] sm:$0xff] %v300
                %v302 = vld [vmem:[%s214 + $0x158] sm:$0xff]
                %303 = vst [vmem:[%s215 + $0x158] sm:$0xff] %v302
                %v304 = vld [vmem:[%s214 + $0x160] sm:$0xff]
                %305 = vst [vmem:[%s215 + $0x160] sm:$0xff] %v304
                %v306 = vld [vmem:[%s214 + $0x168] sm:$0xff]
                %307 = vst [vmem:[%s215 + $0x168] sm:$0xff] %v306
                %v308 = vld [vmem:[%s214 + $0x170] sm:$0xff]
                %309 = vst [vmem:[%s215 + $0x170] sm:$0xff] %v308
                %v310 = vld [vmem:[%s214 + $0x178] sm:$0xff]
                %311 = vst [vmem:[%s215 + $0x178] sm:$0xff] %v310
                %v312 = vld [vmem:[%s214 + $0x180] sm:$0xff]
                %313 = vst [vmem:[%s215 + $0x180] sm:$0xff] %v312
                %v314 = vld [vmem:[%s214 + $0x188] sm:$0xff]
                %315 = vst [vmem:[%s215 + $0x188] sm:$0xff] %v314
                %v316 = vld [vmem:[%s214 + $0x190] sm:$0xff]
                %317 = vst [vmem:[%s215 + $0x190] sm:$0xff] %v316
                %v318 = vld [vmem:[%s214 + $0x198] sm:$0xff]
                %319 = vst [vmem:[%s215 + $0x198] sm:$0xff] %v318
                %v320 = vld [vmem:[%s214 + $0x1a0] sm:$0xff]
                %321 = vst [vmem:[%s215 + $0x1a0] sm:$0xff] %v320
                %v322 = vld [vmem:[%s214 + $0x1a8] sm:$0xff]
                %323 = vst [vmem:[%s215 + $0x1a8] sm:$0xff] %v322
                %v324 = vld [vmem:[%s214 + $0x1b0] sm:$0xff]
                %325 = vst [vmem:[%s215 + $0x1b0] sm:$0xff] %v324
                %v326 = vld [vmem:[%s214 + $0x1b8] sm:$0xff]
                %327 = vst [vmem:[%s215 + $0x1b8] sm:$0xff] %v326
                %v328 = vld [vmem:[%s214 + $0x1c0] sm:$0xff]
                %329 = vst [vmem:[%s215 + $0x1c0] sm:$0xff] %v328
                %v330 = vld [vmem:[%s214 + $0x1c8] sm:$0xff]
                %331 = vst [vmem:[%s215 + $0x1c8] sm:$0xff] %v330
                %v332 = vld [vmem:[%s214 + $0x1d0] sm:$0xff]
                %333 = vst [vmem:[%s215 + $0x1d0] sm:$0xff] %v332
                %v334 = vld [vmem:[%s214 + $0x1d8] sm:$0xff]
                %335 = vst [vmem:[%s215 + $0x1d8] sm:$0xff] %v334
                %v336 = vld [vmem:[%s214 + $0x1e0] sm:$0xff]
                %337 = vst [vmem:[%s215 + $0x1e0] sm:$0xff] %v336
                %v338 = vld [vmem:[%s214 + $0x1e8] sm:$0xff]
                %339 = vst [vmem:[%s215 + $0x1e8] sm:$0xff] %v338
                %v340 = vld [vmem:[%s214 + $0x1f0] sm:$0xff]
                %341 = vst [vmem:[%s215 + $0x1f0] sm:$0xff] %v340
                %v342 = vld [vmem:[%s214 + $0x1f8] sm:$0xff]
                %343 = vst [vmem:[%s215 + $0x1f8] sm:$0xff] %v342
                %v344 = vld [vmem:[%s214 + $0x400] sm:$0xff]
                %345 = vst [vmem:[%s215 + $0x200] sm:$0xff] %v344
                %v346 = vld [vmem:[%s214 + $0x408] sm:$0xff]
                %347 = vst [vmem:[%s215 + $0x208] sm:$0xff] %v346
                %v348 = vld [vmem:[%s214 + $0x410] sm:$0xff]
                %349 = vst [vmem:[%s215 + $0x210] sm:$0xff] %v348
                %v350 = vld [vmem:[%s214 + $0x418] sm:$0xff]
                %351 = vst [vmem:[%s215 + $0x218] sm:$0xff] %v350
                %v352 = vld [vmem:[%s214 + $0x420] sm:$0xff]
                %353 = vst [vmem:[%s215 + $0x220] sm:$0xff] %v352
                %v354 = vld [vmem:[%s214 + $0x428] sm:$0xff]
                %355 = vst [vmem:[%s215 + $0x228] sm:$0xff] %v354
                %v356 = vld [vmem:[%s214 + $0x430] sm:$0xff]
                %357 = vst [vmem:[%s215 + $0x230] sm:$0xff] %v356
                %v358 = vld [vmem:[%s214 + $0x438] sm:$0xff]
                %359 = vst [vmem:[%s215 + $0x238] sm:$0xff] %v358
                %v360 = vld [vmem:[%s214 + $0x440] sm:$0xff]
                %361 = vst [vmem:[%s215 + $0x240] sm:$0xff] %v360
                %v362 = vld [vmem:[%s214 + $0x448] sm:$0xff]
                %363 = vst [vmem:[%s215 + $0x248] sm:$0xff] %v362
                %v364 = vld [vmem:[%s214 + $0x450] sm:$0xff]
                %365 = vst [vmem:[%s215 + $0x250] sm:$0xff] %v364
                %v366 = vld [vmem:[%s214 + $0x458] sm:$0xff]
                %367 = vst [vmem:[%s215 + $0x258] sm:$0xff] %v366
                %v368 = vld [vmem:[%s214 + $0x460] sm:$0xff]
                %369 = vst [vmem:[%s215 + $0x260] sm:$0xff] %v368
                %v370 = vld [vmem:[%s214 + $0x468] sm:$0xff]
                %371 = vst [vmem:[%s215 + $0x268] sm:$0xff] %v370
                %v372 = vld [vmem:[%s214 + $0x470] sm:$0xff]
                %373 = vst [vmem:[%s215 + $0x270] sm:$0xff] %v372
                %v374 = vld [vmem:[%s214 + $0x478] sm:$0xff]
                %375 = vst [vmem:[%s215 + $0x278] sm:$0xff] %v374
                %v376 = vld [vmem:[%s214 + $0x480] sm:$0xff]
                %377 = vst [vmem:[%s215 + $0x280] sm:$0xff] %v376
                %v378 = vld [vmem:[%s214 + $0x488] sm:$0xff]
                %379 = vst [vmem:[%s215 + $0x288] sm:$0xff] %v378
                %v380 = vld [vmem:[%s214 + $0x490] sm:$0xff]
                %381 = vst [vmem:[%s215 + $0x290] sm:$0xff] %v380
                %v382 = vld [vmem:[%s214 + $0x498] sm:$0xff]
                %383 = vst [vmem:[%s215 + $0x298] sm:$0xff] %v382
                %v384 = vld [vmem:[%s214 + $0x4a0] sm:$0xff]
                %385 = vst [vmem:[%s215 + $0x2a0] sm:$0xff] %v384
                %v386 = vld [vmem:[%s214 + $0x4a8] sm:$0xff]
                %387 = vst [vmem:[%s215 + $0x2a8] sm:$0xff] %v386
                %v388 = vld [vmem:[%s214 + $0x4b0] sm:$0xff]
                %389 = vst [vmem:[%s215 + $0x2b0] sm:$0xff] %v388
                %v390 = vld [vmem:[%s214 + $0x4b8] sm:$0xff]
                %391 = vst [vmem:[%s215 + $0x2b8] sm:$0xff] %v390
                %v392 = vld [vmem:[%s214 + $0x4c0] sm:$0xff]
                %393 = vst [vmem:[%s215 + $0x2c0] sm:$0xff] %v392
                %v394 = vld [vmem:[%s214 + $0x4c8] sm:$0xff]
                %395 = vst [vmem:[%s215 + $0x2c8] sm:$0xff] %v394
                %v396 = vld [vmem:[%s214 + $0x4d0] sm:$0xff]
                %397 = vst [vmem:[%s215 + $0x2d0] sm:$0xff] %v396
                %v398 = vld [vmem:[%s214 + $0x4d8] sm:$0xff]
                %399 = vst [vmem:[%s215 + $0x2d8] sm:$0xff] %v398
                %v400 = vld [vmem:[%s214 + $0x4e0] sm:$0xff]
                %401 = vst [vmem:[%s215 + $0x2e0] sm:$0xff] %v400
                %v402 = vld [vmem:[%s214 + $0x4e8] sm:$0xff]
                %403 = vst [vmem:[%s215 + $0x2e8] sm:$0xff] %v402
                %v404 = vld [vmem:[%s214 + $0x4f0] sm:$0xff]
                %405 = vst [vmem:[%s215 + $0x2f0] sm:$0xff] %v404
                %v406 = vld [vmem:[%s214 + $0x4f8] sm:$0xff]
                %407 = vst [vmem:[%s215 + $0x2f8] sm:$0xff] %v406
                %v408 = vld [vmem:[%s214 + $0x500] sm:$0xff]
                %409 = vst [vmem:[%s215 + $0x300] sm:$0xff] %v408
                %v410 = vld [vmem:[%s214 + $0x508] sm:$0xff]
                %411 = vst [vmem:[%s215 + $0x308] sm:$0xff] %v410
                %v412 = vld [vmem:[%s214 + $0x510] sm:$0xff]
                %413 = vst [vmem:[%s215 + $0x310] sm:$0xff] %v412
                %v414 = vld [vmem:[%s214 + $0x518] sm:$0xff]
                %415 = vst [vmem:[%s215 + $0x318] sm:$0xff] %v414
                %v416 = vld [vmem:[%s214 + $0x520] sm:$0xff]
                %417 = vst [vmem:[%s215 + $0x320] sm:$0xff] %v416
                %v418 = vld [vmem:[%s214 + $0x528] sm:$0xff]
                %419 = vst [vmem:[%s215 + $0x328] sm:$0xff] %v418
                %v420 = vld [vmem:[%s214 + $0x530] sm:$0xff]
                %421 = vst [vmem:[%s215 + $0x330] sm:$0xff] %v420
                %v422 = vld [vmem:[%s214 + $0x538] sm:$0xff]
                %423 = vst [vmem:[%s215 + $0x338] sm:$0xff] %v422
                %v424 = vld [vmem:[%s214 + $0x540] sm:$0xff]
                %425 = vst [vmem:[%s215 + $0x340] sm:$0xff] %v424
                %v426 = vld [vmem:[%s214 + $0x548] sm:$0xff]
                %427 = vst [vmem:[%s215 + $0x348] sm:$0xff] %v426
                %v428 = vld [vmem:[%s214 + $0x550] sm:$0xff]
                %429 = vst [vmem:[%s215 + $0x350] sm:$0xff] %v428
                %v430 = vld [vmem:[%s214 + $0x558] sm:$0xff]
                %431 = vst [vmem:[%s215 + $0x358] sm:$0xff] %v430
                %v432 = vld [vmem:[%s214 + $0x560] sm:$0xff]
                %433 = vst [vmem:[%s215 + $0x360] sm:$0xff] %v432
                %v434 = vld [vmem:[%s214 + $0x568] sm:$0xff]
                %435 = vst [vmem:[%s215 + $0x368] sm:$0xff] %v434
                %v436 = vld [vmem:[%s214 + $0x570] sm:$0xff]
                %437 = vst [vmem:[%s215 + $0x370] sm:$0xff] %v436
                %v438 = vld [vmem:[%s214 + $0x578] sm:$0xff]
                %439 = vst [vmem:[%s215 + $0x378] sm:$0xff] %v438
                %v440 = vld [vmem:[%s214 + $0x580] sm:$0xff]
                %441 = vst [vmem:[%s215 + $0x380] sm:$0xff] %v440
                %v442 = vld [vmem:[%s214 + $0x588] sm:$0xff]
                %443 = vst [vmem:[%s215 + $0x388] sm:$0xff] %v442
                %v444 = vld [vmem:[%s214 + $0x590] sm:$0xff]
                %445 = vst [vmem:[%s215 + $0x390] sm:$0xff] %v444
                %v446 = vld [vmem:[%s214 + $0x598] sm:$0xff]
                %447 = vst [vmem:[%s215 + $0x398] sm:$0xff] %v446
                %v448 = vld [vmem:[%s214 + $0x5a0] sm:$0xff]
                %449 = vst [vmem:[%s215 + $0x3a0] sm:$0xff] %v448
                %v450 = vld [vmem:[%s214 + $0x5a8] sm:$0xff]
                %451 = vst [vmem:[%s215 + $0x3a8] sm:$0xff] %v450
                %v452 = vld [vmem:[%s214 + $0x5b0] sm:$0xff]
                %453 = vst [vmem:[%s215 + $0x3b0] sm:$0xff] %v452
                %v454 = vld [vmem:[%s214 + $0x5b8] sm:$0xff]
                %455 = vst [vmem:[%s215 + $0x3b8] sm:$0xff] %v454
                %v456 = vld [vmem:[%s214 + $0x5c0] sm:$0xff]
                %457 = vst [vmem:[%s215 + $0x3c0] sm:$0xff] %v456
                %v458 = vld [vmem:[%s214 + $0x5c8] sm:$0xff]
                %459 = vst [vmem:[%s215 + $0x3c8] sm:$0xff] %v458
                %v460 = vld [vmem:[%s214 + $0x5d0] sm:$0xff]
                %461 = vst [vmem:[%s215 + $0x3d0] sm:$0xff] %v460
                %v462 = vld [vmem:[%s214 + $0x5d8] sm:$0xff]
                %463 = vst [vmem:[%s215 + $0x3d8] sm:$0xff] %v462
                %v464 = vld [vmem:[%s214 + $0x5e0] sm:$0xff]
                %465 = vst [vmem:[%s215 + $0x3e0] sm:$0xff] %v464
                %v466 = vld [vmem:[%s214 + $0x5e8] sm:$0xff]
                %467 = vst [vmem:[%s215 + $0x3e8] sm:$0xff] %v466
                %v468 = vld [vmem:[%s214 + $0x5f0] sm:$0xff]
                %469 = vst [vmem:[%s215 + $0x3f0] sm:$0xff] %v468
                %v470 = vld [vmem:[%s214 + $0x5f8] sm:$0xff]
                %471 = vst [vmem:[%s215 + $0x3f8] sm:$0xff] %v470
              $region41: #{conv_bn_add_relu.1} parent=35 // loop_footer
                %s213 = sadd.s32 1, %s209
              $region42: #{conv_bn_add_relu.1} parent=35 // loop_footer_branch
                %208 = sbr.rel target = $region38
              $region43: #{conv_bn_add_relu.1} parent=35 // loop_exit
                _
            $region36: #{conv_bn_add_relu.1} parent=31 // pred_fallthru
              _
            // Predicated region
            $region44: #{conv_bn_add_relu.1} parent=31 // pred_check
              _
            $region45: #{conv_bn_add_relu.1} parent=31 // pred_check_branch
              %473 = sbr.rel target = $region47
            $region46: #{conv_bn_add_relu.1} parent=31 // pred_region
              _
            $region47: #{conv_bn_add_relu.1} parent=31 // pred_fallthru
              _
          $region32: #{conv_bn_add_relu.1} parent=27 // pred_fallthru
            _
          %474 = vnop
        $region28: #{conv_bn_add_relu.1} parent=19 // pred_fallthru
          _
        // Predicated region
        $region48: #{conv_bn_add_relu.1} parent=19 // pred_check
          %p475 = pneg %p104
        $region49: #{conv_bn_add_relu.1} parent=19 // pred_check_branch
          %477 = sbr.rel (%p475) target = $region51
        $region50: #{conv_bn_add_relu.1} parent=19 // pred_region
          %s478 = smul.u32 32, %s11
          %p479 = scmp.lt.s32.totalorder %s478, 63
          %s480 = scalar_select %p479, %s478, 63
          %s481 = smul.addr %s480, 8
          %s482 = scalar_lea.vmem %s3, %s481
          %s483 = smul.u32 32, %s11
        $region51: #{conv_bn_add_relu.1} parent=19 // pred_fallthru
          _
        // Predicated region
        $region52: #{conv_bn_add_relu.1} parent=19 // pred_check
          %p484 = pneg %p130
        $region53: #{conv_bn_add_relu.1} parent=19 // pred_check_branch
          %486 = sbr.rel (%p484) target = $region55
        $region54: #{conv_bn_add_relu.1} parent=19 // pred_region
          %s487 = smul.u32 32, %s11
          %p488 = scmp.lt.s32.totalorder %s487, 63
          %s489 = scalar_select %p488, %s487, 63
          %s490 = smul.addr %s489, 8
          %s491 = scalar_lea.vmem %s4, %s490
          %s492 = smul.u32 32, %s11
        $region55: #{conv_bn_add_relu.1} parent=19 // pred_fallthru
          _
      $region20: #{conv_bn_add_relu.1} parent=5 // pred_fallthru
        _
      %p493 = scmp.le.s32.totalorder 1, %s11
      %p494 = scmp.lt.s32.totalorder %s11, 3
      %p495 = pnand %p493, %p494
      %p496 = pneg %p495
      // Predicated region
      $region56: #{conv_bn_add_relu.1} parent=5 // pred_check
        _
      $region57: #{conv_bn_add_relu.1} parent=5 // pred_check_branch
        %498 = sbr.rel (%p495) target = $region59
      $region58: #{conv_bn_add_relu.1} parent=5 // pred_region
        %s499 = ssub.s32 %s11, 1
        %s500 = sand.u32 %s71, 1
        %s501 = sand.u32 %s71, 1
        %s502 = smul.addr %s501, 1024
        %s503 = scalar_lea.vmem [#allocation2], %s502
        // Predicated region
        $region60: #{conv_bn_add_relu.1} parent=58 // pred_check
          %p504 = pneg %p84
        $region61: #{conv_bn_add_relu.1} parent=58 // pred_check_branch
          %506 = sbr.rel (%p504) target = $region63
        $region62: #{conv_bn_add_relu.1} parent=58 // pred_region
          _
        $region63: #{conv_bn_add_relu.1} parent=58 // pred_fallthru
          _
        %p507 = pneg %p32
        %p508 = pneg %p29
        %s509 = smul.u32 32, %s16
        %p510 = scmp.lt.s32.totalorder %s509, 63
        %s511 = scalar_select %p510, %s509, 63
        %s512 = smul.addr %s511, 4
        %s513 = scalar_lea.vmem %s1, %s512
        %p514 = pneg %p58
        %p515 = pneg %p55
        %s516 = sand.u32 %s71, 1
        %s517 = sand.u32 %s71, 1
        %s518 = smul.addr %s517, 1024
        %s519 = scalar_lea.vmem [#allocation2], %s518
        %p520 = pneg %p84
        %p521 = pneg %p81
        %s522 = smul.u32 32, %s16
        %p523 = scmp.lt.s32.totalorder %s522, 63
        %s524 = scalar_select %p523, %s522, 63
        %s525 = smul.addr %s524, 8
        %s526 = scalar_lea.vmem %s3, %s525
        %p527 = pneg %p110
        %p528 = pneg %p107
        %s529 = smul.u32 32, %s16
        %p530 = scmp.lt.s32.totalorder %s529, 63
        %s531 = scalar_select %p530, %s529, 63
        %s532 = smul.addr %s531, 8
        %s533 = scalar_lea.vmem %s4, %s532
        %p534 = pneg %p136
        %p535 = pneg %p133
        %p536 = pneg %p162
        %p537 = pneg %p159
        %s538 = sand.u32 %s149, 1
        %s539 = sand.u32 %s149, 1
        %s540 = smul.addr %s539, 1024
        %s541 = scalar_lea.vmem [#allocation3], %s540
        %s542 = smul.u32 32, %s16
        %p543 = scmp.lt.s32.totalorder %s542, 63
        %s544 = scalar_select %p543, %s542, 63
        %s545 = smul.addr %s544, 4
        %s546 = scalar_lea.vmem %s1, %s545
        %s547 = smul.u32 32, %s16
        %s548 = smul.u32 32, %s16
        %s549 = smul.u32 32, %s16
        %p550 = scmp.lt.s32.totalorder %s549, 63
        %s551 = scalar_select %p550, %s549, 63
        %s552 = smul.addr %s551, 8
        %s553 = scalar_lea.vmem %s3, %s552
        %s554 = smul.u32 32, %s16
        %s555 = smul.u32 32, %s16
        %p556 = scmp.lt.s32.totalorder %s555, 63
        %s557 = scalar_select %p556, %s555, 63
        %s558 = smul.addr %s557, 8
        %s559 = scalar_lea.vmem %s4, %s558
        %s560 = smul.u32 32, %s16
        %s561 = smul.u32 32, %s16
        %v563 = vld [vmem:[%s546] sm:$0xf]
        %v564 = vld [vmem:[%s546 + $0x4] sm:$0xf]
        %v565 = vld [vmem:[%s546 + $0x8] sm:$0xf]
        %v566 = vld [vmem:[%s546 + $0xc] sm:$0xf]
        %v567 = vld [vmem:[%s546 + $0x10] sm:$0xf]
        %v568 = vld [vmem:[%s546 + $0x14] sm:$0xf]
        %v569 = vld [vmem:[%s546 + $0x18] sm:$0xf]
        %v570 = vld [vmem:[%s546 + $0x1c] sm:$0xf]
        %v571 = vld [vmem:[%s546 + $0x20] sm:$0xf]
        %v572 = vld [vmem:[%s546 + $0x24] sm:$0xf]
        %v573 = vld [vmem:[%s546 + $0x28] sm:$0xf]
        %v574 = vld [vmem:[%s546 + $0x2c] sm:$0xf]
        %v575 = vld [vmem:[%s546 + $0x30] sm:$0xf]
        %v576 = vld [vmem:[%s546 + $0x34] sm:$0xf]
        %v577 = vld [vmem:[%s546 + $0x38] sm:$0xf]
        %v578 = vld [vmem:[%s546 + $0x3c] sm:$0xf]
        %v579 = vld [vmem:[%s546 + $0x40] sm:$0xf]
        %v580 = vld [vmem:[%s546 + $0x44] sm:$0xf]
        %v581 = vld [vmem:[%s546 + $0x48] sm:$0xf]
        %v582 = vld [vmem:[%s546 + $0x4c] sm:$0xf]
        %v583 = vld [vmem:[%s546 + $0x50] sm:$0xf]
        %v584 = vld [vmem:[%s546 + $0x54] sm:$0xf]
        %v585 = vld [vmem:[%s546 + $0x58] sm:$0xf]
        %v586 = vld [vmem:[%s546 + $0x5c] sm:$0xf]
        %v587 = vld [vmem:[%s546 + $0x60] sm:$0xf]
        %v588 = vld [vmem:[%s546 + $0x64] sm:$0xf]
        %v589 = vld [vmem:[%s546 + $0x68] sm:$0xf]
        %v590 = vld [vmem:[%s546 + $0x6c] sm:$0xf]
        %v591 = vld [vmem:[%s546 + $0x70] sm:$0xf]
        %v592 = vld [vmem:[%s546 + $0x74] sm:$0xf]
        %v593 = vld [vmem:[%s546 + $0x78] sm:$0xf]
        %v594 = vld [vmem:[%s546 + $0x7c] sm:$0xf]
        %v595 = vld [vmem:[%s0] sm:$0xff]
        %v596 = vld [vmem:[%s0 + $0x8] sm:$0xff]
        %v597 = vld [vmem:[%s0 + $0x10] sm:$0xff]
        %v598 = vld [vmem:[%s0 + $0x18] sm:$0xff]
        %v599 = vld [vmem:[%s0 + $0x20] sm:$0xff]
        %v600 = vld [vmem:[%s0 + $0x28] sm:$0xff]
        %v601 = vld [vmem:[%s0 + $0x30] sm:$0xff]
        %v602 = vld [vmem:[%s0 + $0x38] sm:$0xff]
        %v603 = vld [vmem:[%s0 + $0x40] sm:$0xff]
        %v604 = vld [vmem:[%s0 + $0x48] sm:$0xff]
        %v605 = vld [vmem:[%s0 + $0x50] sm:$0xff]
        %v606 = vld [vmem:[%s0 + $0x58] sm:$0xff]
        %v607 = vld [vmem:[%s0 + $0x60] sm:$0xff]
        %v608 = vld [vmem:[%s0 + $0x68] sm:$0xff]
        %v609 = vld [vmem:[%s0 + $0x70] sm:$0xff]
        %v610 = vld [vmem:[%s0 + $0x78] sm:$0xff]
        %v611 = vld [vmem:[%s0 + $0x80] sm:$0xff]
        %v612 = vld [vmem:[%s0 + $0x88] sm:$0xff]
        %v613 = vld [vmem:[%s0 + $0x90] sm:$0xff]
        %v614 = vld [vmem:[%s0 + $0x98] sm:$0xff]
        %v615 = vld [vmem:[%s0 + $0xa0] sm:$0xff]
        %v616 = vld [vmem:[%s0 + $0xa8] sm:$0xff]
        %v617 = vld [vmem:[%s0 + $0xb0] sm:$0xff]
        %v618 = vld [vmem:[%s0 + $0xb8] sm:$0xff]
        %v619 = vld [vmem:[%s0 + $0xc0] sm:$0xff]
        %v620 = vld [vmem:[%s0 + $0xc8] sm:$0xff]
        %v621 = vld [vmem:[%s0 + $0xd0] sm:$0xff]
        %v622 = vld [vmem:[%s0 + $0xd8] sm:$0xff]
        %v623 = vld [vmem:[%s0 + $0xe0] sm:$0xff]
        %v624 = vld [vmem:[%s0 + $0xe8] sm:$0xff]
        %v625 = vld [vmem:[%s0 + $0xf0] sm:$0xff]
        %v626 = vld [vmem:[%s0 + $0xf8] sm:$0xff]
        %vm627 = vcmask 556032
        %v628 = vsel %vm627, %v596, 0.0
        %v629 = vadd.f32 %v595, %v628
        %630 = vadd.xlane.f32.xlu0 %v629
        %v631 = vpop.xlane.xlu0 %630
        %v632 = vsel %vm627, %v598, 0.0
        %v633 = vadd.f32 %v597, %v632
        %634 = vadd.xlane.f32.xlu0 %v633
        %v635 = vpop.xlane.xlu0 %634
        %v636 = vsel %vm627, %v600, 0.0
        %v637 = vadd.f32 %v599, %v636
        %638 = vadd.xlane.f32.xlu0 %v637
        %v639 = vpop.xlane.xlu0 %638
        %v640 = vsel %vm627, %v602, 0.0
        %v641 = vadd.f32 %v601, %v640
        %642 = vadd.xlane.f32.xlu0 %v641
        %v643 = vpop.xlane.xlu0 %642
        %v644 = vsel %vm627, %v604, 0.0
        %v645 = vadd.f32 %v603, %v644
        %646 = vadd.xlane.f32.xlu0 %v645
        %v647 = vpop.xlane.xlu0 %646
        %v648 = vsel %vm627, %v606, 0.0
        %v649 = vadd.f32 %v605, %v648
        %650 = vadd.xlane.f32.xlu0 %v649
        %v651 = vpop.xlane.xlu0 %650
        %v652 = vsel %vm627, %v608, 0.0
        %v653 = vadd.f32 %v607, %v652
        %654 = vadd.xlane.f32.xlu0 %v653
        %v655 = vpop.xlane.xlu0 %654
        %v656 = vsel %vm627, %v610, 0.0
        %v657 = vadd.f32 %v609, %v656
        %658 = vadd.xlane.f32.xlu0 %v657
        %v659 = vpop.xlane.xlu0 %658
        %v660 = vsel %vm627, %v612, 0.0
        %v661 = vadd.f32 %v611, %v660
        %662 = vadd.xlane.f32.xlu0 %v661
        %v663 = vpop.xlane.xlu0 %662
        %v664 = vsel %vm627, %v614, 0.0
        %v665 = vadd.f32 %v613, %v664
        %666 = vadd.xlane.f32.xlu0 %v665
        %v667 = vpop.xlane.xlu0 %666
        %v668 = vsel %vm627, %v616, 0.0
        %v669 = vadd.f32 %v615, %v668
        %670 = vadd.xlane.f32.xlu0 %v669
        %v671 = vpop.xlane.xlu0 %670
        %v672 = vsel %vm627, %v618, 0.0
        %v673 = vadd.f32 %v617, %v672
        %674 = vadd.xlane.f32.xlu0 %v673
        %v675 = vpop.xlane.xlu0 %674
        %v676 = vsel %vm627, %v620, 0.0
        %v677 = vadd.f32 %v619, %v676
        %678 = vadd.xlane.f32.xlu0 %v677
        %v679 = vpop.xlane.xlu0 %678
        %v680 = vsel %vm627, %v622, 0.0
        %v681 = vadd.f32 %v621, %v680
        %682 = vadd.xlane.f32.xlu0 %v681
        %v683 = vpop.xlane.xlu0 %682
        %v684 = vsel %vm627, %v624, 0.0
        %v685 = vadd.f32 %v623, %v684
        %686 = vadd.xlane.f32.xlu0 %v685
        %v687 = vpop.xlane.xlu0 %686
        %v688 = vsel %vm627, %v626, 0.0
        %v689 = vadd.f32 %v625, %v688
        %690 = vadd.xlane.f32.xlu0 %v689
        %v691 = vpop.xlane.xlu0 %690
        %v692 = vadd.f32 %v631, 0.0
        %v693 = vadd.f32 %v635, 0.0
        %v694 = vadd.f32 %v639, 0.0
        %v695 = vadd.f32 %v643, 0.0
        %v696 = vadd.f32 %v647, 0.0
        %v697 = vadd.f32 %v651, 0.0
        %v698 = vadd.f32 %v655, 0.0
        %v699 = vadd.f32 %v659, 0.0
        %v700 = vadd.f32 %v663, 0.0
        %v701 = vadd.f32 %v667, 0.0
        %v702 = vadd.f32 %v671, 0.0
        %v703 = vadd.f32 %v675, 0.0
        %v704 = vadd.f32 %v679, 0.0
        %v705 = vadd.f32 %v683, 0.0
        %v706 = vadd.f32 %v687, 0.0
        %v707 = vadd.f32 %v691, 0.0
        %v708 = vpack.c.bf16 %v597, %v595
        %v709 = vpack.c.bf16 %v598, %v596
        %v710 = vpack.c.bf16 %v601, %v599
        %v711 = vpack.c.bf16 %v602, %v600
        %v712 = vpack.c.bf16 %v605, %v603
        %v713 = vpack.c.bf16 %v606, %v604
        %v714 = vpack.c.bf16 %v609, %v607
        %v715 = vpack.c.bf16 %v610, %v608
        %v716 = vpack.c.bf16 %v613, %v611
        %v717 = vpack.c.bf16 %v614, %v612
        %v718 = vpack.c.bf16 %v617, %v615
        %v719 = vpack.c.bf16 %v618, %v616
        %v720 = vpack.c.bf16 %v621, %v619
        %v721 = vpack.c.bf16 %v622, %v620
        %v722 = vpack.c.bf16 %v625, %v623
        %v723 = vpack.c.bf16 %v626, %v624
        %s724 = scalar_lea.vmem %s0, 256
        %v725 = vld [vmem:[%s724] sm:$0xff]
        %v726 = vld [vmem:[%s724 + $0x8] sm:$0xff]
        %v727 = vld [vmem:[%s724 + $0x10] sm:$0xff]
        %v728 = vld [vmem:[%s724 + $0x18] sm:$0xff]
        %v729 = vld [vmem:[%s724 + $0x20] sm:$0xff]
        %v730 = vld [vmem:[%s724 + $0x28] sm:$0xff]
        %v731 = vld [vmem:[%s724 + $0x30] sm:$0xff]
        %v732 = vld [vmem:[%s724 + $0x38] sm:$0xff]
        %v733 = vld [vmem:[%s724 + $0x40] sm:$0xff]
        %v734 = vld [vmem:[%s724 + $0x48] sm:$0xff]
        %v735 = vld [vmem:[%s724 + $0x50] sm:$0xff]
        %v736 = vld [vmem:[%s724 + $0x58] sm:$0xff]
        %v737 = vld [vmem:[%s724 + $0x60] sm:$0xff]
        %v738 = vld [vmem:[%s724 + $0x68] sm:$0xff]
        %v739 = vld [vmem:[%s724 + $0x70] sm:$0xff]
        %v740 = vld [vmem:[%s724 + $0x78] sm:$0xff]
        %v741 = vld [vmem:[%s724 + $0x80] sm:$0xff]
        %v742 = vld [vmem:[%s724 + $0x88] sm:$0xff]
        %v743 = vld [vmem:[%s724 + $0x90] sm:$0xff]
        %v744 = vld [vmem:[%s724 + $0x98] sm:$0xff]
        %v745 = vld [vmem:[%s724 + $0xa0] sm:$0xff]
        %v746 = vld [vmem:[%s724 + $0xa8] sm:$0xff]
        %v747 = vld [vmem:[%s724 + $0xb0] sm:$0xff]
        %v748 = vld [vmem:[%s724 + $0xb8] sm:$0xff]
        %v749 = vld [vmem:[%s724 + $0xc0] sm:$0xff]
        %v750 = vld [vmem:[%s724 + $0xc8] sm:$0xff]
        %v751 = vld [vmem:[%s724 + $0xd0] sm:$0xff]
        %v752 = vld [vmem:[%s724 + $0xd8] sm:$0xff]
        %v753 = vld [vmem:[%s724 + $0xe0] sm:$0xff]
        %v754 = vld [vmem:[%s724 + $0xe8] sm:$0xff]
        %v755 = vld [vmem:[%s724 + $0xf0] sm:$0xff]
        %v756 = vld [vmem:[%s724 + $0xf8] sm:$0xff]
        %v757 = vsel %vm627, %v726, 0.0
        %v758 = vadd.f32 %v725, %v757
        %759 = vadd.xlane.f32.xlu0 %v758
        %v760 = vpop.xlane.xlu0 %759
        %v761 = vsel %vm627, %v728, 0.0
        %v762 = vadd.f32 %v727, %v761
        %763 = vadd.xlane.f32.xlu0 %v762
        %v764 = vpop.xlane.xlu0 %763
        %v765 = vsel %vm627, %v730, 0.0
        %v766 = vadd.f32 %v729, %v765
        %767 = vadd.xlane.f32.xlu0 %v766
        %v768 = vpop.xlane.xlu0 %767
        %v769 = vsel %vm627, %v732, 0.0
        %v770 = vadd.f32 %v731, %v769
        %771 = vadd.xlane.f32.xlu0 %v770
        %v772 = vpop.xlane.xlu0 %771
        %v773 = vsel %vm627, %v734, 0.0
        %v774 = vadd.f32 %v733, %v773
        %775 = vadd.xlane.f32.xlu0 %v774
        %v776 = vpop.xlane.xlu0 %775
        %v777 = vsel %vm627, %v736, 0.0
        %v778 = vadd.f32 %v735, %v777
        %779 = vadd.xlane.f32.xlu0 %v778
        %v780 = vpop.xlane.xlu0 %779
        %v781 = vsel %vm627, %v738, 0.0
        %v782 = vadd.f32 %v737, %v781
        %783 = vadd.xlane.f32.xlu0 %v782
        %v784 = vpop.xlane.xlu0 %783
        %v785 = vsel %vm627, %v740, 0.0
        %v786 = vadd.f32 %v739, %v785
        %787 = vadd.xlane.f32.xlu0 %v786
        %v788 = vpop.xlane.xlu0 %787
        %v789 = vsel %vm627, %v742, 0.0
        %v790 = vadd.f32 %v741, %v789
        %791 = vadd.xlane.f32.xlu0 %v790
        %v792 = vpop.xlane.xlu0 %791
        %v793 = vsel %vm627, %v744, 0.0
        %v794 = vadd.f32 %v743, %v793
        %795 = vadd.xlane.f32.xlu0 %v794
        %v796 = vpop.xlane.xlu0 %795
        %v797 = vsel %vm627, %v746, 0.0
        %v798 = vadd.f32 %v745, %v797
        %799 = vadd.xlane.f32.xlu0 %v798
        %v800 = vpop.xlane.xlu0 %799
        %v801 = vsel %vm627, %v748, 0.0
        %v802 = vadd.f32 %v747, %v801
        %803 = vadd.xlane.f32.xlu0 %v802
        %v804 = vpop.xlane.xlu0 %803
        %v805 = vsel %vm627, %v750, 0.0
        %v806 = vadd.f32 %v749, %v805
        %807 = vadd.xlane.f32.xlu0 %v806
        %v808 = vpop.xlane.xlu0 %807
        %v809 = vsel %vm627, %v752, 0.0
        %v810 = vadd.f32 %v751, %v809
        %811 = vadd.xlane.f32.xlu0 %v810
        %v812 = vpop.xlane.xlu0 %811
        %v813 = vsel %vm627, %v754, 0.0
        %v814 = vadd.f32 %v753, %v813
        %815 = vadd.xlane.f32.xlu0 %v814
        %v816 = vpop.xlane.xlu0 %815
        %v817 = vsel %vm627, %v756, 0.0
        %v818 = vadd.f32 %v755, %v817
        %819 = vadd.xlane.f32.xlu0 %v818
        %v820 = vpop.xlane.xlu0 %819
        %v821 = vadd.f32 %v692, %v760
        %v822 = vadd.f32 %v693, %v764
        %v823 = vadd.f32 %v694, %v768
        %v824 = vadd.f32 %v695, %v772
        %v825 = vadd.f32 %v696, %v776
        %v826 = vadd.f32 %v697, %v780
        %v827 = vadd.f32 %v698, %v784
        %v828 = vadd.f32 %v699, %v788
        %v829 = vadd.f32 %v700, %v792
        %v830 = vadd.f32 %v701, %v796
        %v831 = vadd.f32 %v702, %v800
        %v832 = vadd.f32 %v703, %v804
        %v833 = vadd.f32 %v704, %v808
        %v834 = vadd.f32 %v705, %v812
        %v835 = vadd.f32 %v706, %v816
        %v836 = vadd.f32 %v707, %v820
        %v837 = vpack.c.bf16 %v727, %v725
        %v838 = vpack.c.bf16 %v728, %v726
        %v839 = vpack.c.bf16 %v731, %v729
        %v840 = vpack.c.bf16 %v732, %v730
        %v841 = vpack.c.bf16 %v735, %v733
        %v842 = vpack.c.bf16 %v736, %v734
        %v843 = vpack.c.bf16 %v739, %v737
        %v844 = vpack.c.bf16 %v740, %v738
        %v845 = vpack.c.bf16 %v743, %v741
        %v846 = vpack.c.bf16 %v744, %v742
        %v847 = vpack.c.bf16 %v747, %v745
        %v848 = vpack.c.bf16 %v748, %v746
        %v849 = vpack.c.bf16 %v751, %v749
        %v850 = vpack.c.bf16 %v752, %v750
        %v851 = vpack.c.bf16 %v755, %v753
        %v852 = vpack.c.bf16 %v756, %v754
        %v854 = vsel %vm627, %v838, 0
        %v857 = vsel %vm627, %v840, 0
        %v860 = vsel %vm627, %v842, 0
        %v863 = vsel %vm627, %v844, 0
        %v866 = vsel %vm627, %v846, 0
        %v869 = vsel %vm627, %v848, 0
        %v872 = vsel %vm627, %v850, 0
        %v875 = vsel %vm627, %v852, 0
        %877 = vmatprep.subr.bf16.mxu0 %v875
        %878 = vmatpush1.bf16.xpose.msra.mxu0 %v851
        %879 = vmatprep.subr.bf16.mxu0 %v872
        %880 = vmatpush1.bf16.xpose.msra.mxu0 %v849
        %881 = vmatprep.subr.bf16.mxu0 %v869
        %882 = vmatpush1.bf16.xpose.msra.mxu0 %v847
        %883 = vmatprep.subr.bf16.mxu0 %v866
        %884 = vmatpush1.bf16.xpose.msra.mxu0 %v845
        %885 = vmatprep.subr.bf16.mxu0 %v863
        %886 = vmatpush1.bf16.xpose.msra.mxu0 %v843
        %887 = vmatprep.subr.bf16.mxu0 %v860
        %888 = vmatpush1.bf16.xpose.msra.mxu0 %v841
        %889 = vmatprep.subr.bf16.mxu0 %v857
        %890 = vmatpush1.bf16.xpose.msra.mxu0 %v839
        %891 = vmatprep.subr.bf16.mxu0 %v854
        %892 = vmatpush1.bf16.xpose.msra.mxu0 %v837
        %893 = vmatprep.subr.bf16.mxu0 0
        %894 = vmatpush2.bf16.xpose.msra.mxu0 0
        %895 = vmatprep.subr.bf16.mxu0 0
        %896 = vmatpush2.bf16.xpose.msra.mxu0 0
        %897 = vmatprep.subr.bf16.mxu0 0
        %898 = vmatpush2.bf16.xpose.msra.mxu0 0
        %899 = vmatprep.subr.bf16.mxu0 0
        %900 = vmatpush2.bf16.xpose.msra.mxu0 0
        %901 = vmatprep.subr.bf16.mxu0 0
        %902 = vmatpush2.bf16.xpose.msra.mxu0 0
        %903 = vmatprep.subr.bf16.mxu0 0
        %904 = vmatpush2.bf16.xpose.msra.mxu0 0
        %905 = vmatprep.subr.bf16.mxu0 0
        %906 = vmatpush2.bf16.xpose.msra.mxu0 0
        %907 = vmatprep.subr.bf16.mxu0 0
        %908 = vmatpush2.bf16.xpose.msra.mxu0 0
        %909 = vmatprep.mubr.bf16.mxu0 %v854
        %910 = vmatmul.mubr.bf16.gmra.mxu0 %v837
        %v911 = vpop.f32.mrf.mxu0
        %v912 = vadd.f32 0.0, %v911
        %v913 = vpop.f32.mrf.mxu0
        %v914 = vpop.f32.mrf.mxu0
        %v915 = vadd.f32 0.0, %v914
        %v916 = vpop.f32.mrf.mxu0
        %917 = vmatprep.mubr.bf16.mxu0 %v857
        %918 = vmatmul.mubr.bf16.gmra.mxu0 %v839
        %v919 = vpop.f32.mrf.mxu0
        %v920 = vadd.f32 0.0, %v919
        %v921 = vpop.f32.mrf.mxu0
        %v922 = vpop.f32.mrf.mxu0
        %v923 = vadd.f32 0.0, %v922
        %v924 = vpop.f32.mrf.mxu0
        %925 = vmatprep.mubr.bf16.mxu0 %v860
        %926 = vmatmul.mubr.bf16.gmra.mxu0 %v841
        %v927 = vpop.f32.mrf.mxu0
        %v928 = vadd.f32 0.0, %v927
        %v929 = vpop.f32.mrf.mxu0
        %v930 = vpop.f32.mrf.mxu0
        %v931 = vadd.f32 0.0, %v930
        %v932 = vpop.f32.mrf.mxu0
        %933 = vmatprep.mubr.bf16.mxu0 %v863
        %934 = vmatmul.mubr.bf16.gmra.mxu0 %v843
        %v935 = vpop.f32.mrf.mxu0
        %v936 = vadd.f32 0.0, %v935
        %v937 = vpop.f32.mrf.mxu0
        %v938 = vpop.f32.mrf.mxu0
        %v939 = vadd.f32 0.0, %v938
        %v940 = vpop.f32.mrf.mxu0
        %941 = vmatprep.mubr.bf16.mxu0 %v866
        %942 = vmatmul.mubr.bf16.gmra.mxu0 %v845
        %v943 = vpop.f32.mrf.mxu0
        %v944 = vadd.f32 0.0, %v943
        %v945 = vpop.f32.mrf.mxu0
        %v946 = vpop.f32.mrf.mxu0
        %v947 = vadd.f32 0.0, %v946
        %v948 = vpop.f32.mrf.mxu0
        %949 = vmatprep.mubr.bf16.mxu0 %v869
        %950 = vmatmul.mubr.bf16.gmra.mxu0 %v847
        %v951 = vpop.f32.mrf.mxu0
        %v952 = vadd.f32 0.0, %v951
        %v953 = vpop.f32.mrf.mxu0
        %v954 = vpop.f32.mrf.mxu0
        %v955 = vadd.f32 0.0, %v954
        %v956 = vpop.f32.mrf.mxu0
        %957 = vmatprep.mubr.bf16.mxu0 %v872
        %958 = vmatmul.mubr.bf16.gmra.mxu0 %v849
        %v959 = vpop.f32.mrf.mxu0
        %v960 = vadd.f32 0.0, %v959
        %v961 = vpop.f32.mrf.mxu0
        %v962 = vpop.f32.mrf.mxu0
        %v963 = vadd.f32 0.0, %v962
        %v964 = vpop.f32.mrf.mxu0
        %965 = vmatprep.mubr.bf16.mxu0 %v875
        %966 = vmatmul.mubr.bf16.gmra.mxu0 %v851
        %v967 = vpop.f32.mrf.mxu0
        %v968 = vadd.f32 0.0, %v967
        %v969 = vpop.f32.mrf.mxu0
        %v970 = vpop.f32.mrf.mxu0
        %v971 = vadd.f32 0.0, %v970
        %v972 = vpop.f32.mrf.mxu0
        %973 = vdwg.mxu0
        %v975 = vsel %vm627, %v709, 0
        %v978 = vsel %vm627, %v711, 0
        %v981 = vsel %vm627, %v713, 0
        %v984 = vsel %vm627, %v715, 0
        %v987 = vsel %vm627, %v717, 0
        %v990 = vsel %vm627, %v719, 0
        %v993 = vsel %vm627, %v721, 0
        %v996 = vsel %vm627, %v723, 0
        %998 = vmatprep.subr.bf16.mxu0 %v996
        %999 = vmatpush1.bf16.xpose.msra.mxu0 %v722
        %1000 = vmatprep.subr.bf16.mxu0 %v993
        %1001 = vmatpush1.bf16.xpose.msra.mxu0 %v720
        %1002 = vmatprep.subr.bf16.mxu0 %v990
        %1003 = vmatpush1.bf16.xpose.msra.mxu0 %v718
        %1004 = vmatprep.subr.bf16.mxu0 %v987
        %1005 = vmatpush1.bf16.xpose.msra.mxu0 %v716
        %1006 = vmatprep.subr.bf16.mxu0 %v984
        %1007 = vmatpush1.bf16.xpose.msra.mxu0 %v714
        %1008 = vmatprep.subr.bf16.mxu0 %v981
        %1009 = vmatpush1.bf16.xpose.msra.mxu0 %v712
        %1010 = vmatprep.subr.bf16.mxu0 %v978
        %1011 = vmatpush1.bf16.xpose.msra.mxu0 %v710
        %1012 = vmatprep.subr.bf16.mxu0 %v975
        %1013 = vmatpush1.bf16.xpose.msra.mxu0 %v708
        %1014 = vmatprep.subr.bf16.mxu0 0
        %1015 = vmatpush2.bf16.xpose.msra.mxu0 0
        %1016 = vmatprep.subr.bf16.mxu0 0
        %1017 = vmatpush2.bf16.xpose.msra.mxu0 0
        %1018 = vmatprep.subr.bf16.mxu0 0
        %1019 = vmatpush2.bf16.xpose.msra.mxu0 0
        %1020 = vmatprep.subr.bf16.mxu0 0
        %1021 = vmatpush2.bf16.xpose.msra.mxu0 0
        %1022 = vmatprep.subr.bf16.mxu0 0
        %1023 = vmatpush2.bf16.xpose.msra.mxu0 0
        %1024 = vmatprep.subr.bf16.mxu0 0
        %1025 = vmatpush2.bf16.xpose.msra.mxu0 0
        %1026 = vmatprep.subr.bf16.mxu0 0
        %1027 = vmatpush2.bf16.xpose.msra.mxu0 0
        %1028 = vmatprep.subr.bf16.mxu0 0
        %1029 = vmatpush2.bf16.xpose.msra.mxu0 0
        %1030 = vmatprep.mubr.bf16.mxu0 %v975
        %1031 = vmatmul.mubr.bf16.gmra.mxu0 %v708
        %v1032 = vpop.f32.mrf.mxu0
        %v1033 = vadd.f32 %v912, %v1032
        %v1034 = vpop.f32.mrf.mxu0
        %v1035 = vpop.f32.mrf.mxu0
        %v1036 = vadd.f32 %v915, %v1035
        %v1037 = vpop.f32.mrf.mxu0
        %1038 = vmatprep.mubr.bf16.mxu0 %v978
        %1039 = vmatmul.mubr.bf16.gmra.mxu0 %v710
        %v1040 = vpop.f32.mrf.mxu0
        %v1041 = vadd.f32 %v920, %v1040
        %v1042 = vpop.f32.mrf.mxu0
        %v1043 = vpop.f32.mrf.mxu0
        %v1044 = vadd.f32 %v923, %v1043
        %v1045 = vpop.f32.mrf.mxu0
        %1046 = vmatprep.mubr.bf16.mxu0 %v981
        %1047 = vmatmul.mubr.bf16.gmra.mxu0 %v712
        %v1048 = vpop.f32.mrf.mxu0
        %v1049 = vadd.f32 %v928, %v1048
        %v1050 = vpop.f32.mrf.mxu0
        %v1051 = vpop.f32.mrf.mxu0
        %v1052 = vadd.f32 %v931, %v1051
        %v1053 = vpop.f32.mrf.mxu0
        %1054 = vmatprep.mubr.bf16.mxu0 %v984
        %1055 = vmatmul.mubr.bf16.gmra.mxu0 %v714
        %v1056 = vpop.f32.mrf.mxu0
        %v1057 = vadd.f32 %v936, %v1056
        %v1058 = vpop.f32.mrf.mxu0
        %v1059 = vpop.f32.mrf.mxu0
        %v1060 = vadd.f32 %v939, %v1059
        %v1061 = vpop.f32.mrf.mxu0
        %1062 = vmatprep.mubr.bf16.mxu0 %v987
        %1063 = vmatmul.mubr.bf16.gmra.mxu0 %v716
        %v1064 = vpop.f32.mrf.mxu0
        %v1065 = vadd.f32 %v944, %v1064
        %v1066 = vpop.f32.mrf.mxu0
        %v1067 = vpop.f32.mrf.mxu0
        %v1068 = vadd.f32 %v947, %v1067
        %v1069 = vpop.f32.mrf.mxu0
        %1070 = vmatprep.mubr.bf16.mxu0 %v990
        %1071 = vmatmul.mubr.bf16.gmra.mxu0 %v718
        %v1072 = vpop.f32.mrf.mxu0
        %v1073 = vadd.f32 %v952, %v1072
        %v1074 = vpop.f32.mrf.mxu0
        %v1075 = vpop.f32.mrf.mxu0
        %v1076 = vadd.f32 %v955, %v1075
        %v1077 = vpop.f32.mrf.mxu0
        %1078 = vmatprep.mubr.bf16.mxu0 %v993
        %1079 = vmatmul.mubr.bf16.gmra.mxu0 %v720
        %v1080 = vpop.f32.mrf.mxu0
        %v1081 = vadd.f32 %v960, %v1080
        %v1082 = vpop.f32.mrf.mxu0
        %v1083 = vpop.f32.mrf.mxu0
        %v1084 = vadd.f32 %v963, %v1083
        %v1085 = vpop.f32.mrf.mxu0
        %1086 = vmatprep.mubr.bf16.mxu0 %v996
        %1087 = vmatmul.mubr.bf16.gmra.mxu0 %v722
        %v1088 = vpop.f32.mrf.mxu0
        %v1089 = vadd.f32 %v968, %v1088
        %v1090 = vpop.f32.mrf.mxu0
        %v1091 = vpop.f32.mrf.mxu0
        %v1092 = vadd.f32 %v971, %v1091
        %v1093 = vpop.f32.mrf.mxu0
        %1094 = vdwg.mxu0
        %v1095 = vpack.c.bf16 %v822, %v821
        %v1096 = vpack.c.bf16 %v824, %v823
        %v1097 = vpack.c.bf16 %v826, %v825
        %v1098 = vpack.c.bf16 %v828, %v827
        %v1099 = vpack.c.bf16 %v830, %v829
        %v1100 = vpack.c.bf16 %v832, %v831
        %v1101 = vpack.c.bf16 %v834, %v833
        %v1102 = vpack.c.bf16 %v836, %v835
        %v1135 = vunpack.c.l.b16 %v563
        %v1136 = vunpack.c.l.b16 %v564
        %v1137 = vunpack.c.l.b16 %v565
        %v1138 = vunpack.c.l.b16 %v566
        %v1139 = vunpack.c.l.b16 %v567
        %v1140 = vunpack.c.l.b16 %v568
        %v1141 = vunpack.c.l.b16 %v569
        %v1142 = vunpack.c.l.b16 %v570
        %v1143 = vunpack.c.l.b16 %v571
        %v1144 = vunpack.c.l.b16 %v572
        %v1145 = vunpack.c.l.b16 %v573
        %v1146 = vunpack.c.l.b16 %v574
        %v1147 = vunpack.c.l.b16 %v575
        %v1148 = vunpack.c.l.b16 %v576
        %v1149 = vunpack.c.l.b16 %v577
        %v1150 = vunpack.c.l.b16 %v578
        %v1151 = vunpack.c.l.b16 %v579
        %v1152 = vunpack.c.l.b16 %v580
        %v1153 = vunpack.c.l.b16 %v581
        %v1154 = vunpack.c.l.b16 %v582
        %v1155 = vunpack.c.l.b16 %v583
        %v1156 = vunpack.c.l.b16 %v584
        %v1157 = vunpack.c.l.b16 %v585
        %v1158 = vunpack.c.l.b16 %v586
        %v1159 = vunpack.c.l.b16 %v587
        %v1160 = vunpack.c.l.b16 %v588
        %v1161 = vunpack.c.l.b16 %v589
        %v1162 = vunpack.c.l.b16 %v590
        %v1163 = vunpack.c.l.b16 %v591
        %v1164 = vunpack.c.l.b16 %v592
        %v1165 = vunpack.c.l.b16 %v593
        %v1166 = vunpack.c.l.b16 %v594
        %v1167 = vpack.c.b16 %v1136, %v1135
        %v1168 = vpack.c.b16 %v1138, %v1137
        %v1169 = vpack.c.b16 %v1140, %v1139
        %v1170 = vpack.c.b16 %v1142, %v1141
        %v1171 = vpack.c.b16 %v1144, %v1143
        %v1172 = vpack.c.b16 %v1146, %v1145
        %v1173 = vpack.c.b16 %v1148, %v1147
        %v1174 = vpack.c.b16 %v1150, %v1149
        %v1175 = vpack.c.b16 %v1152, %v1151
        %v1176 = vpack.c.b16 %v1154, %v1153
        %v1177 = vpack.c.b16 %v1156, %v1155
        %v1178 = vpack.c.b16 %v1158, %v1157
        %v1179 = vpack.c.b16 %v1160, %v1159
        %v1180 = vpack.c.b16 %v1162, %v1161
        %v1181 = vpack.c.b16 %v1164, %v1163
        %v1182 = vpack.c.b16 %v1166, %v1165
        %1199 = vmatprep.subr.bf16.mxu0 0
        %1200 = vmatpush1.bf16.msra.mxu0 %v1102
        %1201 = vmatprep.subr.bf16.mxu0 0
        %1202 = vmatpush1.bf16.msra.mxu0 %v1101
        %1203 = vmatprep.subr.bf16.mxu0 0
        %1204 = vmatpush1.bf16.msra.mxu0 %v1100
        %1205 = vmatprep.subr.bf16.mxu0 0
        %1206 = vmatpush1.bf16.msra.mxu0 %v1099
        %1207 = vmatprep.subr.bf16.mxu0 0
        %1208 = vmatpush1.bf16.msra.mxu0 %v1098
        %1209 = vmatprep.subr.bf16.mxu0 0
        %1210 = vmatpush1.bf16.msra.mxu0 %v1097
        %1211 = vmatprep.subr.bf16.mxu0 0
        %1212 = vmatpush1.bf16.msra.mxu0 %v1096
        %1213 = vmatprep.subr.bf16.mxu0 0
        %1214 = vmatpush1.bf16.msra.mxu0 %v1095
        %1215 = vmatprep.subr.bf16.mxu0 0
        %1216 = vmatpush2.bf16.msra.mxu0 0
        %1217 = vmatprep.subr.bf16.mxu0 0
        %1218 = vmatpush2.bf16.msra.mxu0 0
        %1219 = vmatprep.subr.bf16.mxu0 0
        %1220 = vmatpush2.bf16.msra.mxu0 0
        %1221 = vmatprep.subr.bf16.mxu0 0
        %1222 = vmatpush2.bf16.msra.mxu0 0
        %1223 = vmatprep.subr.bf16.mxu0 0
        %1224 = vmatpush2.bf16.msra.mxu0 0
        %1225 = vmatprep.subr.bf16.mxu0 0
        %1226 = vmatpush2.bf16.msra.mxu0 0
        %1227 = vmatprep.subr.bf16.mxu0 0
        %1228 = vmatpush2.bf16.msra.mxu0 0
        %1229 = vmatprep.subr.bf16.mxu0 0
        %1230 = vmatpush2.bf16.msra.mxu0 0
        %1231 = vmatprep.mubr.bf16.mxu0 0
        %1232 = vmatmul.mubr.bf16.gmra.mxu0 %v1167
        %v1233 = vpop.f32.mrf.mxu0
        %v1234 = vadd.f32 0.0, %v1233
        %v1235 = vpop.f32.mrf.mxu0
        %v1236 = vpop.f32.mrf.mxu0
        %v1237 = vadd.f32 0.0, %v1236
        %v1238 = vpop.f32.mrf.mxu0
        %1239 = vmatprep.mubr.bf16.mxu0 0
        %1240 = vmatmul.mubr.bf16.gmra.mxu0 %v1168
        %v1241 = vpop.f32.mrf.mxu0
        %v1242 = vadd.f32 0.0, %v1241
        %v1243 = vpop.f32.mrf.mxu0
        %v1244 = vpop.f32.mrf.mxu0
        %v1245 = vadd.f32 0.0, %v1244
        %v1246 = vpop.f32.mrf.mxu0
        %1247 = vmatprep.mubr.bf16.mxu0 0
        %1248 = vmatmul.mubr.bf16.gmra.mxu0 %v1169
        %v1249 = vpop.f32.mrf.mxu0
        %v1250 = vadd.f32 0.0, %v1249
        %v1251 = vpop.f32.mrf.mxu0
        %v1252 = vpop.f32.mrf.mxu0
        %v1253 = vadd.f32 0.0, %v1252
        %v1254 = vpop.f32.mrf.mxu0
        %1255 = vmatprep.mubr.bf16.mxu0 0
        %1256 = vmatmul.mubr.bf16.gmra.mxu0 %v1170
        %v1257 = vpop.f32.mrf.mxu0
        %v1258 = vadd.f32 0.0, %v1257
        %v1259 = vpop.f32.mrf.mxu0
        %v1260 = vpop.f32.mrf.mxu0
        %v1261 = vadd.f32 0.0, %v1260
        %v1262 = vpop.f32.mrf.mxu0
        %1263 = vmatprep.mubr.bf16.mxu0 0
        %1264 = vmatmul.mubr.bf16.gmra.mxu0 %v1171
        %v1265 = vpop.f32.mrf.mxu0
        %v1266 = vadd.f32 0.0, %v1265
        %v1267 = vpop.f32.mrf.mxu0
        %v1268 = vpop.f32.mrf.mxu0
        %v1269 = vadd.f32 0.0, %v1268
        %v1270 = vpop.f32.mrf.mxu0
        %1271 = vmatprep.mubr.bf16.mxu0 0
        %1272 = vmatmul.mubr.bf16.gmra.mxu0 %v1172
        %v1273 = vpop.f32.mrf.mxu0
        %v1274 = vadd.f32 0.0, %v1273
        %v1275 = vpop.f32.mrf.mxu0
        %v1276 = vpop.f32.mrf.mxu0
        %v1277 = vadd.f32 0.0, %v1276
        %v1278 = vpop.f32.mrf.mxu0
        %1279 = vmatprep.mubr.bf16.mxu0 0
        %1280 = vmatmul.mubr.bf16.gmra.mxu0 %v1173
        %v1281 = vpop.f32.mrf.mxu0
        %v1282 = vadd.f32 0.0, %v1281
        %v1283 = vpop.f32.mrf.mxu0
        %v1284 = vpop.f32.mrf.mxu0
        %v1285 = vadd.f32 0.0, %v1284
        %v1286 = vpop.f32.mrf.mxu0
        %1287 = vmatprep.mubr.bf16.mxu0 0
        %1288 = vmatmul.mubr.bf16.gmra.mxu0 %v1174
        %v1289 = vpop.f32.mrf.mxu0
        %v1290 = vadd.f32 0.0, %v1289
        %v1291 = vpop.f32.mrf.mxu0
        %v1292 = vpop.f32.mrf.mxu0
        %v1293 = vadd.f32 0.0, %v1292
        %v1294 = vpop.f32.mrf.mxu0
        %1295 = vmatprep.mubr.bf16.mxu0 0
        %1296 = vmatmul.mubr.bf16.gmra.mxu0 %v1175
        %v1297 = vpop.f32.mrf.mxu0
        %v1298 = vadd.f32 0.0, %v1297
        %v1299 = vpop.f32.mrf.mxu0
        %v1300 = vpop.f32.mrf.mxu0
        %v1301 = vadd.f32 0.0, %v1300
        %v1302 = vpop.f32.mrf.mxu0
        %1303 = vmatprep.mubr.bf16.mxu0 0
        %1304 = vmatmul.mubr.bf16.gmra.mxu0 %v1176
        %v1305 = vpop.f32.mrf.mxu0
        %v1306 = vadd.f32 0.0, %v1305
        %v1307 = vpop.f32.mrf.mxu0
        %v1308 = vpop.f32.mrf.mxu0
        %v1309 = vadd.f32 0.0, %v1308
        %v1310 = vpop.f32.mrf.mxu0
        %1311 = vmatprep.mubr.bf16.mxu0 0
        %1312 = vmatmul.mubr.bf16.gmra.mxu0 %v1177
        %v1313 = vpop.f32.mrf.mxu0
        %v1314 = vadd.f32 0.0, %v1313
        %v1315 = vpop.f32.mrf.mxu0
        %v1316 = vpop.f32.mrf.mxu0
        %v1317 = vadd.f32 0.0, %v1316
        %v1318 = vpop.f32.mrf.mxu0
        %1319 = vmatprep.mubr.bf16.mxu0 0
        %1320 = vmatmul.mubr.bf16.gmra.mxu0 %v1178
        %v1321 = vpop.f32.mrf.mxu0
        %v1322 = vadd.f32 0.0, %v1321
        %v1323 = vpop.f32.mrf.mxu0
        %v1324 = vpop.f32.mrf.mxu0
        %v1325 = vadd.f32 0.0, %v1324
        %v1326 = vpop.f32.mrf.mxu0
        %1327 = vmatprep.mubr.bf16.mxu0 0
        %1328 = vmatmul.mubr.bf16.gmra.mxu0 %v1179
        %v1329 = vpop.f32.mrf.mxu0
        %v1330 = vadd.f32 0.0, %v1329
        %v1331 = vpop.f32.mrf.mxu0
        %v1332 = vpop.f32.mrf.mxu0
        %v1333 = vadd.f32 0.0, %v1332
        %v1334 = vpop.f32.mrf.mxu0
        %1335 = vmatprep.mubr.bf16.mxu0 0
        %1336 = vmatmul.mubr.bf16.gmra.mxu0 %v1180
        %v1337 = vpop.f32.mrf.mxu0
        %v1338 = vadd.f32 0.0, %v1337
        %v1339 = vpop.f32.mrf.mxu0
        %v1340 = vpop.f32.mrf.mxu0
        %v1341 = vadd.f32 0.0, %v1340
        %v1342 = vpop.f32.mrf.mxu0
        %1343 = vmatprep.mubr.bf16.mxu0 0
        %1344 = vmatmul.mubr.bf16.gmra.mxu0 %v1181
        %v1345 = vpop.f32.mrf.mxu0
        %v1346 = vadd.f32 0.0, %v1345
        %v1347 = vpop.f32.mrf.mxu0
        %v1348 = vpop.f32.mrf.mxu0
        %v1349 = vadd.f32 0.0, %v1348
        %v1350 = vpop.f32.mrf.mxu0
        %1351 = vmatprep.mubr.bf16.mxu0 0
        %1352 = vmatmul.mubr.bf16.gmra.mxu0 %v1182
        %v1353 = vpop.f32.mrf.mxu0
        %v1354 = vadd.f32 0.0, %v1353
        %v1355 = vpop.f32.mrf.mxu0
        %v1356 = vpop.f32.mrf.mxu0
        %v1357 = vadd.f32 0.0, %v1356
        %v1358 = vpop.f32.mrf.mxu0
        %1359 = vdwg.mxu0
        %v1360 = vmul.f32 %v1234, 0.0025510204
        %v1361 = vmul.f32 %v1237, 0.0025510204
        %v1362 = vmul.f32 %v1242, 0.0025510204
        %v1363 = vmul.f32 %v1245, 0.0025510204
        %v1364 = vmul.f32 %v1250, 0.0025510204
        %v1365 = vmul.f32 %v1253, 0.0025510204
        %v1366 = vmul.f32 %v1258, 0.0025510204
        %v1367 = vmul.f32 %v1261, 0.0025510204
        %v1368 = vmul.f32 %v1266, 0.0025510204
        %v1369 = vmul.f32 %v1269, 0.0025510204
        %v1370 = vmul.f32 %v1274, 0.0025510204
        %v1371 = vmul.f32 %v1277, 0.0025510204
        %v1372 = vmul.f32 %v1282, 0.0025510204
        %v1373 = vmul.f32 %v1285, 0.0025510204
        %v1374 = vmul.f32 %v1290, 0.0025510204
        %v1375 = vmul.f32 %v1293, 0.0025510204
        %v1376 = vmul.f32 %v1298, 0.0025510204
        %v1377 = vmul.f32 %v1301, 0.0025510204
        %v1378 = vmul.f32 %v1306, 0.0025510204
        %v1379 = vmul.f32 %v1309, 0.0025510204
        %v1380 = vmul.f32 %v1314, 0.0025510204
        %v1381 = vmul.f32 %v1317, 0.0025510204
        %v1382 = vmul.f32 %v1322, 0.0025510204
        %v1383 = vmul.f32 %v1325, 0.0025510204
        %v1384 = vmul.f32 %v1330, 0.0025510204
        %v1385 = vmul.f32 %v1333, 0.0025510204
        %v1386 = vmul.f32 %v1338, 0.0025510204
        %v1387 = vmul.f32 %v1341, 0.0025510204
        %v1388 = vmul.f32 %v1346, 0.0025510204
        %v1389 = vmul.f32 %v1349, 0.0025510204
        %v1390 = vmul.f32 %v1354, 0.0025510204
        %v1391 = vmul.f32 %v1357, 0.0025510204
        %v1392 = vpack.c.bf16 %v1036, %v1033
        %v1393 = vpack.c.bf16 %v1044, %v1041
        %v1394 = vpack.c.bf16 %v1052, %v1049
        %v1395 = vpack.c.bf16 %v1060, %v1057
        %v1396 = vpack.c.bf16 %v1068, %v1065
        %v1397 = vpack.c.bf16 %v1076, %v1073
        %v1398 = vpack.c.bf16 %v1084, %v1081
        %v1399 = vpack.c.bf16 %v1092, %v1089
        %1400 = vmatprep.subr.bf16.mxu0 0
        %1401 = vmatpush1.bf16.msra.mxu0 %v1399
        %1402 = vmatprep.subr.bf16.mxu0 0
        %1403 = vmatpush1.bf16.msra.mxu0 %v1398
        %1404 = vmatprep.subr.bf16.mxu0 0
        %1405 = vmatpush1.bf16.msra.mxu0 %v1397
        %1406 = vmatprep.subr.bf16.mxu0 0
        %1407 = vmatpush1.bf16.msra.mxu0 %v1396
        %1408 = vmatprep.subr.bf16.mxu0 0
        %1409 = vmatpush1.bf16.msra.mxu0 %v1395
        %1410 = vmatprep.subr.bf16.mxu0 0
        %1411 = vmatpush1.bf16.msra.mxu0 %v1394
        %1412 = vmatprep.subr.bf16.mxu0 0
        %1413 = vmatpush1.bf16.msra.mxu0 %v1393
        %1414 = vmatprep.subr.bf16.mxu0 0
        %1415 = vmatpush1.bf16.msra.mxu0 %v1392
        %1416 = vmatprep.subr.bf16.mxu0 0
        %1417 = vmatpush2.bf16.msra.mxu0 0
        %1418 = vmatprep.subr.bf16.mxu0 0
        %1419 = vmatpush2.bf16.msra.mxu0 0
        %1420 = vmatprep.subr.bf16.mxu0 0
        %1421 = vmatpush2.bf16.msra.mxu0 0
        %1422 = vmatprep.subr.bf16.mxu0 0
        %1423 = vmatpush2.bf16.msra.mxu0 0
        %1424 = vmatprep.subr.bf16.mxu0 0
        %1425 = vmatpush2.bf16.msra.mxu0 0
        %1426 = vmatprep.subr.bf16.mxu0 0
        %1427 = vmatpush2.bf16.msra.mxu0 0
        %1428 = vmatprep.subr.bf16.mxu0 0
        %1429 = vmatpush2.bf16.msra.mxu0 0
        %1430 = vmatprep.subr.bf16.mxu0 0
        %1431 = vmatpush2.bf16.msra.mxu0 0
        %1432 = vmatprep.mubr.bf16.mxu0 0
        %1433 = vmatmul.mubr.bf16.gmra.mxu0 %v1167
        %v1434 = vpop.f32.mrf.mxu0
        %v1435 = vadd.f32 0.0, %v1434
        %v1436 = vpop.f32.mrf.mxu0
        %v1437 = vpop.f32.mrf.mxu0
        %v1438 = vadd.f32 0.0, %v1437
        %v1439 = vpop.f32.mrf.mxu0
        %1440 = vmatprep.mubr.bf16.mxu0 0
        %1441 = vmatmul.mubr.bf16.gmra.mxu0 %v1168
        %v1442 = vpop.f32.mrf.mxu0
        %v1443 = vadd.f32 0.0, %v1442
        %v1444 = vpop.f32.mrf.mxu0
        %v1445 = vpop.f32.mrf.mxu0
        %v1446 = vadd.f32 0.0, %v1445
        %v1447 = vpop.f32.mrf.mxu0
        %1448 = vmatprep.mubr.bf16.mxu0 0
        %1449 = vmatmul.mubr.bf16.gmra.mxu0 %v1169
        %v1450 = vpop.f32.mrf.mxu0
        %v1451 = vadd.f32 0.0, %v1450
        %v1452 = vpop.f32.mrf.mxu0
        %v1453 = vpop.f32.mrf.mxu0
        %v1454 = vadd.f32 0.0, %v1453
        %v1455 = vpop.f32.mrf.mxu0
        %1456 = vmatprep.mubr.bf16.mxu0 0
        %1457 = vmatmul.mubr.bf16.gmra.mxu0 %v1170
        %v1458 = vpop.f32.mrf.mxu0
        %v1459 = vadd.f32 0.0, %v1458
        %v1460 = vpop.f32.mrf.mxu0
        %v1461 = vpop.f32.mrf.mxu0
        %v1462 = vadd.f32 0.0, %v1461
        %v1463 = vpop.f32.mrf.mxu0
        %1464 = vmatprep.mubr.bf16.mxu0 0
        %1465 = vmatmul.mubr.bf16.gmra.mxu0 %v1171
        %v1466 = vpop.f32.mrf.mxu0
        %v1467 = vadd.f32 0.0, %v1466
        %v1468 = vpop.f32.mrf.mxu0
        %v1469 = vpop.f32.mrf.mxu0
        %v1470 = vadd.f32 0.0, %v1469
        %v1471 = vpop.f32.mrf.mxu0
        %1472 = vmatprep.mubr.bf16.mxu0 0
        %1473 = vmatmul.mubr.bf16.gmra.mxu0 %v1172
        %v1474 = vpop.f32.mrf.mxu0
        %v1475 = vadd.f32 0.0, %v1474
        %v1476 = vpop.f32.mrf.mxu0
        %v1477 = vpop.f32.mrf.mxu0
        %v1478 = vadd.f32 0.0, %v1477
        %v1479 = vpop.f32.mrf.mxu0
        %1480 = vmatprep.mubr.bf16.mxu0 0
        %1481 = vmatmul.mubr.bf16.gmra.mxu0 %v1173
        %v1482 = vpop.f32.mrf.mxu0
        %v1483 = vadd.f32 0.0, %v1482
        %v1484 = vpop.f32.mrf.mxu0
        %v1485 = vpop.f32.mrf.mxu0
        %v1486 = vadd.f32 0.0, %v1485
        %v1487 = vpop.f32.mrf.mxu0
        %1488 = vmatprep.mubr.bf16.mxu0 0
        %1489 = vmatmul.mubr.bf16.gmra.mxu0 %v1174
        %v1490 = vpop.f32.mrf.mxu0
        %v1491 = vadd.f32 0.0, %v1490
        %v1492 = vpop.f32.mrf.mxu0
        %v1493 = vpop.f32.mrf.mxu0
        %v1494 = vadd.f32 0.0, %v1493
        %v1495 = vpop.f32.mrf.mxu0
        %1496 = vmatprep.mubr.bf16.mxu0 0
        %1497 = vmatmul.mubr.bf16.gmra.mxu0 %v1175
        %v1498 = vpop.f32.mrf.mxu0
        %v1499 = vadd.f32 0.0, %v1498
        %v1500 = vpop.f32.mrf.mxu0
        %v1501 = vpop.f32.mrf.mxu0
        %v1502 = vadd.f32 0.0, %v1501
        %v1503 = vpop.f32.mrf.mxu0
        %1504 = vmatprep.mubr.bf16.mxu0 0
        %1505 = vmatmul.mubr.bf16.gmra.mxu0 %v1176
        %v1506 = vpop.f32.mrf.mxu0
        %v1507 = vadd.f32 0.0, %v1506
        %v1508 = vpop.f32.mrf.mxu0
        %v1509 = vpop.f32.mrf.mxu0
        %v1510 = vadd.f32 0.0, %v1509
        %v1511 = vpop.f32.mrf.mxu0
        %1512 = vmatprep.mubr.bf16.mxu0 0
        %1513 = vmatmul.mubr.bf16.gmra.mxu0 %v1177
        %v1514 = vpop.f32.mrf.mxu0
        %v1515 = vadd.f32 0.0, %v1514
        %v1516 = vpop.f32.mrf.mxu0
        %v1517 = vpop.f32.mrf.mxu0
        %v1518 = vadd.f32 0.0, %v1517
        %v1519 = vpop.f32.mrf.mxu0
        %1520 = vmatprep.mubr.bf16.mxu0 0
        %1521 = vmatmul.mubr.bf16.gmra.mxu0 %v1178
        %v1522 = vpop.f32.mrf.mxu0
        %v1523 = vadd.f32 0.0, %v1522
        %v1524 = vpop.f32.mrf.mxu0
        %v1525 = vpop.f32.mrf.mxu0
        %v1526 = vadd.f32 0.0, %v1525
        %v1527 = vpop.f32.mrf.mxu0
        %1528 = vmatprep.mubr.bf16.mxu0 0
        %1529 = vmatmul.mubr.bf16.gmra.mxu0 %v1179
        %v1530 = vpop.f32.mrf.mxu0
        %v1531 = vadd.f32 0.0, %v1530
        %v1532 = vpop.f32.mrf.mxu0
        %v1533 = vpop.f32.mrf.mxu0
        %v1534 = vadd.f32 0.0, %v1533
        %v1535 = vpop.f32.mrf.mxu0
        %1536 = vmatprep.mubr.bf16.mxu0 0
        %1537 = vmatmul.mubr.bf16.gmra.mxu0 %v1180
        %v1538 = vpop.f32.mrf.mxu0
        %v1539 = vadd.f32 0.0, %v1538
        %v1540 = vpop.f32.mrf.mxu0
        %v1541 = vpop.f32.mrf.mxu0
        %v1542 = vadd.f32 0.0, %v1541
        %v1543 = vpop.f32.mrf.mxu0
        %1544 = vmatprep.mubr.bf16.mxu0 0
        %1545 = vmatmul.mubr.bf16.gmra.mxu0 %v1181
        %v1546 = vpop.f32.mrf.mxu0
        %v1547 = vadd.f32 0.0, %v1546
        %v1548 = vpop.f32.mrf.mxu0
        %v1549 = vpop.f32.mrf.mxu0
        %v1550 = vadd.f32 0.0, %v1549
        %v1551 = vpop.f32.mrf.mxu0
        %1552 = vmatprep.mubr.bf16.mxu0 0
        %1553 = vmatmul.mubr.bf16.gmra.mxu0 %v1182
        %v1554 = vpop.f32.mrf.mxu0
        %v1555 = vadd.f32 0.0, %v1554
        %v1556 = vpop.f32.mrf.mxu0
        %v1557 = vpop.f32.mrf.mxu0
        %v1558 = vadd.f32 0.0, %v1557
        %v1559 = vpop.f32.mrf.mxu0
        %1560 = vdwg.mxu0
        %v1561 = vunpack.c.l.bf16 %v563
        %v1562 = vunpack.c.l.bf16 %v564
        %v1563 = vunpack.c.l.bf16 %v565
        %v1564 = vunpack.c.l.bf16 %v566
        %v1565 = vunpack.c.l.bf16 %v567
        %v1566 = vunpack.c.l.bf16 %v568
        %v1567 = vunpack.c.l.bf16 %v569
        %v1568 = vunpack.c.l.bf16 %v570
        %v1569 = vunpack.c.l.bf16 %v571
        %v1570 = vunpack.c.l.bf16 %v572
        %v1571 = vunpack.c.l.bf16 %v573
        %v1572 = vunpack.c.l.bf16 %v574
        %v1573 = vunpack.c.l.bf16 %v575
        %v1574 = vunpack.c.l.bf16 %v576
        %v1575 = vunpack.c.l.bf16 %v577
        %v1576 = vunpack.c.l.bf16 %v578
        %v1577 = vunpack.c.l.bf16 %v579
        %v1578 = vunpack.c.l.bf16 %v580
        %v1579 = vunpack.c.l.bf16 %v581
        %v1580 = vunpack.c.l.bf16 %v582
        %v1581 = vunpack.c.l.bf16 %v583
        %v1582 = vunpack.c.l.bf16 %v584
        %v1583 = vunpack.c.l.bf16 %v585
        %v1584 = vunpack.c.l.bf16 %v586
        %v1585 = vunpack.c.l.bf16 %v587
        %v1586 = vunpack.c.l.bf16 %v588
        %v1587 = vunpack.c.l.bf16 %v589
        %v1588 = vunpack.c.l.bf16 %v590
        %v1589 = vunpack.c.l.bf16 %v591
        %v1590 = vunpack.c.l.bf16 %v592
        %v1591 = vunpack.c.l.bf16 %v593
        %v1592 = vunpack.c.l.bf16 %v594
        %v1593 = vmul.f32 %v1435, %v1561
        %v1594 = vmul.f32 %v1438, %v1562
        %v1595 = vmul.f32 %v1443, %v1563
        %v1596 = vmul.f32 %v1446, %v1564
        %v1597 = vmul.f32 %v1451, %v1565
        %v1598 = vmul.f32 %v1454, %v1566
        %v1599 = vmul.f32 %v1459, %v1567
        %v1600 = vmul.f32 %v1462, %v1568
        %v1601 = vmul.f32 %v1467, %v1569
        %v1602 = vmul.f32 %v1470, %v1570
        %v1603 = vmul.f32 %v1475, %v1571
        %v1604 = vmul.f32 %v1478, %v1572
        %v1605 = vmul.f32 %v1483, %v1573
        %v1606 = vmul.f32 %v1486, %v1574
        %v1607 = vmul.f32 %v1491, %v1575
        %v1608 = vmul.f32 %v1494, %v1576
        %v1609 = vmul.f32 %v1499, %v1577
        %v1610 = vmul.f32 %v1502, %v1578
        %v1611 = vmul.f32 %v1507, %v1579
        %v1612 = vmul.f32 %v1510, %v1580
        %v1613 = vmul.f32 %v1515, %v1581
        %v1614 = vmul.f32 %v1518, %v1582
        %v1615 = vmul.f32 %v1523, %v1583
        %v1616 = vmul.f32 %v1526, %v1584
        %v1617 = vmul.f32 %v1531, %v1585
        %v1618 = vmul.f32 %v1534, %v1586
        %v1619 = vmul.f32 %v1539, %v1587
        %v1620 = vmul.f32 %v1542, %v1588
        %v1621 = vmul.f32 %v1547, %v1589
        %v1622 = vmul.f32 %v1550, %v1590
        %v1623 = vmul.f32 %v1555, %v1591
        %v1624 = vmul.f32 %v1558, %v1592
        %1625 = vadd.xlane.f32.xlu0 %v1593
        %v1626 = vpop.xlane.xlu0 %1625
        %1627 = vadd.xlane.f32.xlu0 %v1594
        %v1628 = vpop.xlane.xlu0 %1627
        %1629 = vadd.xlane.f32.xlu0 %v1595
        %v1630 = vpop.xlane.xlu0 %1629
        %1631 = vadd.xlane.f32.xlu0 %v1596
        %v1632 = vpop.xlane.xlu0 %1631
        %1633 = vadd.xlane.f32.xlu0 %v1597
        %v1634 = vpop.xlane.xlu0 %1633
        %1635 = vadd.xlane.f32.xlu0 %v1598
        %v1636 = vpop.xlane.xlu0 %1635
        %1637 = vadd.xlane.f32.xlu0 %v1599
        %v1638 = vpop.xlane.xlu0 %1637
        %1639 = vadd.xlane.f32.xlu0 %v1600
        %v1640 = vpop.xlane.xlu0 %1639
        %1641 = vadd.xlane.f32.xlu0 %v1601
        %v1642 = vpop.xlane.xlu0 %1641
        %1643 = vadd.xlane.f32.xlu0 %v1602
        %v1644 = vpop.xlane.xlu0 %1643
        %1645 = vadd.xlane.f32.xlu0 %v1603
        %v1646 = vpop.xlane.xlu0 %1645
        %1647 = vadd.xlane.f32.xlu0 %v1604
        %v1648 = vpop.xlane.xlu0 %1647
        %1649 = vadd.xlane.f32.xlu0 %v1605
        %v1650 = vpop.xlane.xlu0 %1649
        %1651 = vadd.xlane.f32.xlu0 %v1606
        %v1652 = vpop.xlane.xlu0 %1651
        %1653 = vadd.xlane.f32.xlu0 %v1607
        %v1654 = vpop.xlane.xlu0 %1653
        %1655 = vadd.xlane.f32.xlu0 %v1608
        %v1656 = vpop.xlane.xlu0 %1655
        %1657 = vadd.xlane.f32.xlu0 %v1609
        %v1658 = vpop.xlane.xlu0 %1657
        %1659 = vadd.xlane.f32.xlu0 %v1610
        %v1660 = vpop.xlane.xlu0 %1659
        %1661 = vadd.xlane.f32.xlu0 %v1611
        %v1662 = vpop.xlane.xlu0 %1661
        %1663 = vadd.xlane.f32.xlu0 %v1612
        %v1664 = vpop.xlane.xlu0 %1663
        %1665 = vadd.xlane.f32.xlu0 %v1613
        %v1666 = vpop.xlane.xlu0 %1665
        %1667 = vadd.xlane.f32.xlu0 %v1614
        %v1668 = vpop.xlane.xlu0 %1667
        %1669 = vadd.xlane.f32.xlu0 %v1615
        %v1670 = vpop.xlane.xlu0 %1669
        %1671 = vadd.xlane.f32.xlu0 %v1616
        %v1672 = vpop.xlane.xlu0 %1671
        %1673 = vadd.xlane.f32.xlu0 %v1617
        %v1674 = vpop.xlane.xlu0 %1673
        %1675 = vadd.xlane.f32.xlu0 %v1618
        %v1676 = vpop.xlane.xlu0 %1675
        %1677 = vadd.xlane.f32.xlu0 %v1619
        %v1678 = vpop.xlane.xlu0 %1677
        %1679 = vadd.xlane.f32.xlu0 %v1620
        %v1680 = vpop.xlane.xlu0 %1679
        %1681 = vadd.xlane.f32.xlu0 %v1621
        %v1682 = vpop.xlane.xlu0 %1681
        %1683 = vadd.xlane.f32.xlu0 %v1622
        %v1684 = vpop.xlane.xlu0 %1683
        %1685 = vadd.xlane.f32.xlu0 %v1623
        %v1686 = vpop.xlane.xlu0 %1685
        %1687 = vadd.xlane.f32.xlu0 %v1624
        %v1688 = vpop.xlane.xlu0 %1687
        %v1689 = vmul.f32 %v1626, 0.0025510204
        %v1690 = vmul.f32 %v1628, 0.0025510204
        %v1691 = vmul.f32 %v1630, 0.0025510204
        %v1692 = vmul.f32 %v1632, 0.0025510204
        %v1693 = vmul.f32 %v1634, 0.0025510204
        %v1694 = vmul.f32 %v1636, 0.0025510204
        %v1695 = vmul.f32 %v1638, 0.0025510204
        %v1696 = vmul.f32 %v1640, 0.0025510204
        %v1697 = vmul.f32 %v1642, 0.0025510204
        %v1698 = vmul.f32 %v1644, 0.0025510204
        %v1699 = vmul.f32 %v1646, 0.0025510204
        %v1700 = vmul.f32 %v1648, 0.0025510204
        %v1701 = vmul.f32 %v1650, 0.0025510204
        %v1702 = vmul.f32 %v1652, 0.0025510204
        %v1703 = vmul.f32 %v1654, 0.0025510204
        %v1704 = vmul.f32 %v1656, 0.0025510204
        %v1705 = vmul.f32 %v1658, 0.0025510204
        %v1706 = vmul.f32 %v1660, 0.0025510204
        %v1707 = vmul.f32 %v1662, 0.0025510204
        %v1708 = vmul.f32 %v1664, 0.0025510204
        %v1709 = vmul.f32 %v1666, 0.0025510204
        %v1710 = vmul.f32 %v1668, 0.0025510204
        %v1711 = vmul.f32 %v1670, 0.0025510204
        %v1712 = vmul.f32 %v1672, 0.0025510204
        %v1713 = vmul.f32 %v1674, 0.0025510204
        %v1714 = vmul.f32 %v1676, 0.0025510204
        %v1715 = vmul.f32 %v1678, 0.0025510204
        %v1716 = vmul.f32 %v1680, 0.0025510204
        %v1717 = vmul.f32 %v1682, 0.0025510204
        %v1718 = vmul.f32 %v1684, 0.0025510204
        %v1719 = vmul.f32 %v1686, 0.0025510204
        %v1720 = vmul.f32 %v1688, 0.0025510204
        %v1721 = vmul.f32 %v1360, %v1360
        %v1722 = vmul.f32 %v1361, %v1361
        %v1723 = vmul.f32 %v1362, %v1362
        %v1724 = vmul.f32 %v1363, %v1363
        %v1725 = vmul.f32 %v1364, %v1364
        %v1726 = vmul.f32 %v1365, %v1365
        %v1727 = vmul.f32 %v1366, %v1366
        %v1728 = vmul.f32 %v1367, %v1367
        %v1729 = vmul.f32 %v1368, %v1368
        %v1730 = vmul.f32 %v1369, %v1369
        %v1731 = vmul.f32 %v1370, %v1370
        %v1732 = vmul.f32 %v1371, %v1371
        %v1733 = vmul.f32 %v1372, %v1372
        %v1734 = vmul.f32 %v1373, %v1373
        %v1735 = vmul.f32 %v1374, %v1374
        %v1736 = vmul.f32 %v1375, %v1375
        %v1737 = vmul.f32 %v1376, %v1376
        %v1738 = vmul.f32 %v1377, %v1377
        %v1739 = vmul.f32 %v1378, %v1378
        %v1740 = vmul.f32 %v1379, %v1379
        %v1741 = vmul.f32 %v1380, %v1380
        %v1742 = vmul.f32 %v1381, %v1381
        %v1743 = vmul.f32 %v1382, %v1382
        %v1744 = vmul.f32 %v1383, %v1383
        %v1745 = vmul.f32 %v1384, %v1384
        %v1746 = vmul.f32 %v1385, %v1385
        %v1747 = vmul.f32 %v1386, %v1386
        %v1748 = vmul.f32 %v1387, %v1387
        %v1749 = vmul.f32 %v1388, %v1388
        %v1750 = vmul.f32 %v1389, %v1389
        %v1751 = vmul.f32 %v1390, %v1390
        %v1752 = vmul.f32 %v1391, %v1391
        %v1753 = vsub.f32 %v1689, %v1721
        %v1754 = vsub.f32 %v1690, %v1722
        %v1755 = vsub.f32 %v1691, %v1723
        %v1756 = vsub.f32 %v1692, %v1724
        %v1757 = vsub.f32 %v1693, %v1725
        %v1758 = vsub.f32 %v1694, %v1726
        %v1759 = vsub.f32 %v1695, %v1727
        %v1760 = vsub.f32 %v1696, %v1728
        %v1761 = vsub.f32 %v1697, %v1729
        %v1762 = vsub.f32 %v1698, %v1730
        %v1763 = vsub.f32 %v1699, %v1731
        %v1764 = vsub.f32 %v1700, %v1732
        %v1765 = vsub.f32 %v1701, %v1733
        %v1766 = vsub.f32 %v1702, %v1734
        %v1767 = vsub.f32 %v1703, %v1735
        %v1768 = vsub.f32 %v1704, %v1736
        %v1769 = vsub.f32 %v1705, %v1737
        %v1770 = vsub.f32 %v1706, %v1738
        %v1771 = vsub.f32 %v1707, %v1739
        %v1772 = vsub.f32 %v1708, %v1740
        %v1773 = vsub.f32 %v1709, %v1741
        %v1774 = vsub.f32 %v1710, %v1742
        %v1775 = vsub.f32 %v1711, %v1743
        %v1776 = vsub.f32 %v1712, %v1744
        %v1777 = vsub.f32 %v1713, %v1745
        %v1778 = vsub.f32 %v1714, %v1746
        %v1779 = vsub.f32 %v1715, %v1747
        %v1780 = vsub.f32 %v1716, %v1748
        %v1781 = vsub.f32 %v1717, %v1749
        %v1782 = vsub.f32 %v1718, %v1750
        %v1783 = vsub.f32 %v1719, %v1751
        %v1784 = vsub.f32 %v1720, %v1752
        %v1785 = vmax.f32 %v1753, 0.0
        %v1786 = vmax.f32 %v1754, 0.0
        %v1787 = vmax.f32 %v1755, 0.0
        %v1788 = vmax.f32 %v1756, 0.0
        %v1789 = vmax.f32 %v1757, 0.0
        %v1790 = vmax.f32 %v1758, 0.0
        %v1791 = vmax.f32 %v1759, 0.0
        %v1792 = vmax.f32 %v1760, 0.0
        %v1793 = vmax.f32 %v1761, 0.0
        %v1794 = vmax.f32 %v1762, 0.0
        %v1795 = vmax.f32 %v1763, 0.0
        %v1796 = vmax.f32 %v1764, 0.0
        %v1797 = vmax.f32 %v1765, 0.0
        %v1798 = vmax.f32 %v1766, 0.0
        %v1799 = vmax.f32 %v1767, 0.0
        %v1800 = vmax.f32 %v1768, 0.0
        %v1801 = vmax.f32 %v1769, 0.0
        %v1802 = vmax.f32 %v1770, 0.0
        %v1803 = vmax.f32 %v1771, 0.0
        %v1804 = vmax.f32 %v1772, 0.0
        %v1805 = vmax.f32 %v1773, 0.0
        %v1806 = vmax.f32 %v1774, 0.0
        %v1807 = vmax.f32 %v1775, 0.0
        %v1808 = vmax.f32 %v1776, 0.0
        %v1809 = vmax.f32 %v1777, 0.0
        %v1810 = vmax.f32 %v1778, 0.0
        %v1811 = vmax.f32 %v1779, 0.0
        %v1812 = vmax.f32 %v1780, 0.0
        %v1813 = vmax.f32 %v1781, 0.0
        %v1814 = vmax.f32 %v1782, 0.0
        %v1815 = vmax.f32 %v1783, 0.0
        %v1816 = vmax.f32 %v1784, 0.0
        %v1817 = vadd.f32 %v1785, 1e-05
        %v1818 = vadd.f32 %v1786, 1e-05
        %v1819 = vadd.f32 %v1787, 1e-05
        %v1820 = vadd.f32 %v1788, 1e-05
        %v1821 = vadd.f32 %v1789, 1e-05
        %v1822 = vadd.f32 %v1790, 1e-05
        %v1823 = vadd.f32 %v1791, 1e-05
        %v1824 = vadd.f32 %v1792, 1e-05
        %v1825 = vadd.f32 %v1793, 1e-05
        %v1826 = vadd.f32 %v1794, 1e-05
        %v1827 = vadd.f32 %v1795, 1e-05
        %v1828 = vadd.f32 %v1796, 1e-05
        %v1829 = vadd.f32 %v1797, 1e-05
        %v1830 = vadd.f32 %v1798, 1e-05
        %v1831 = vadd.f32 %v1799, 1e-05
        %v1832 = vadd.f32 %v1800, 1e-05
        %v1833 = vadd.f32 %v1801, 1e-05
        %v1834 = vadd.f32 %v1802, 1e-05
        %v1835 = vadd.f32 %v1803, 1e-05
        %v1836 = vadd.f32 %v1804, 1e-05
        %v1837 = vadd.f32 %v1805, 1e-05
        %v1838 = vadd.f32 %v1806, 1e-05
        %v1839 = vadd.f32 %v1807, 1e-05
        %v1840 = vadd.f32 %v1808, 1e-05
        %v1841 = vadd.f32 %v1809, 1e-05
        %v1842 = vadd.f32 %v1810, 1e-05
        %v1843 = vadd.f32 %v1811, 1e-05
        %v1844 = vadd.f32 %v1812, 1e-05
        %v1845 = vadd.f32 %v1813, 1e-05
        %v1846 = vadd.f32 %v1814, 1e-05
        %v1847 = vadd.f32 %v1815, 1e-05
        %v1848 = vadd.f32 %v1816, 1e-05
        %v1849 = vrsqrt.pop %v1817
        %v1850 = vrsqrt.pop %v1818
        %v1851 = vrsqrt.pop %v1819
        %v1852 = vrsqrt.pop %v1820
        %v1853 = vrsqrt.pop %v1821
        %v1854 = vrsqrt.pop %v1822
        %v1855 = vrsqrt.pop %v1823
        %v1856 = vrsqrt.pop %v1824
        %v1857 = vrsqrt.pop %v1825
        %v1858 = vrsqrt.pop %v1826
        %v1859 = vrsqrt.pop %v1827
        %v1860 = vrsqrt.pop %v1828
        %v1861 = vrsqrt.pop %v1829
        %v1862 = vrsqrt.pop %v1830
        %v1863 = vrsqrt.pop %v1831
        %v1864 = vrsqrt.pop %v1832
        %v1865 = vrsqrt.pop %v1833
        %v1866 = vrsqrt.pop %v1834
        %v1867 = vrsqrt.pop %v1835
        %v1868 = vrsqrt.pop %v1836
        %v1869 = vrsqrt.pop %v1837
        %v1870 = vrsqrt.pop %v1838
        %v1871 = vrsqrt.pop %v1839
        %v1872 = vrsqrt.pop %v1840
        %v1873 = vrsqrt.pop %v1841
        %v1874 = vrsqrt.pop %v1842
        %v1875 = vrsqrt.pop %v1843
        %v1876 = vrsqrt.pop %v1844
        %v1877 = vrsqrt.pop %v1845
        %v1878 = vrsqrt.pop %v1846
        %v1879 = vrsqrt.pop %v1847
        %v1880 = vrsqrt.pop %v1848
        %v1881 = vld [vmem:[%s553] sm:$0xff]
        %v1882 = vld [vmem:[%s553 + $0x8] sm:$0xff]
        %v1883 = vld [vmem:[%s553 + $0x10] sm:$0xff]
        %v1884 = vld [vmem:[%s553 + $0x18] sm:$0xff]
        %v1885 = vld [vmem:[%s553 + $0x20] sm:$0xff]
        %v1886 = vld [vmem:[%s553 + $0x28] sm:$0xff]
        %v1887 = vld [vmem:[%s553 + $0x30] sm:$0xff]
        %v1888 = vld [vmem:[%s553 + $0x38] sm:$0xff]
        %v1889 = vld [vmem:[%s553 + $0x40] sm:$0xff]
        %v1890 = vld [vmem:[%s553 + $0x48] sm:$0xff]
        %v1891 = vld [vmem:[%s553 + $0x50] sm:$0xff]
        %v1892 = vld [vmem:[%s553 + $0x58] sm:$0xff]
        %v1893 = vld [vmem:[%s553 + $0x60] sm:$0xff]
        %v1894 = vld [vmem:[%s553 + $0x68] sm:$0xff]
        %v1895 = vld [vmem:[%s553 + $0x70] sm:$0xff]
        %v1896 = vld [vmem:[%s553 + $0x78] sm:$0xff]
        %v1897 = vld [vmem:[%s553 + $0x80] sm:$0xff]
        %v1898 = vld [vmem:[%s553 + $0x88] sm:$0xff]
        %v1899 = vld [vmem:[%s553 + $0x90] sm:$0xff]
        %v1900 = vld [vmem:[%s553 + $0x98] sm:$0xff]
        %v1901 = vld [vmem:[%s553 + $0xa0] sm:$0xff]
        %v1902 = vld [vmem:[%s553 + $0xa8] sm:$0xff]
        %v1903 = vld [vmem:[%s553 + $0xb0] sm:$0xff]
        %v1904 = vld [vmem:[%s553 + $0xb8] sm:$0xff]
        %v1905 = vld [vmem:[%s553 + $0xc0] sm:$0xff]
        %v1906 = vld [vmem:[%s553 + $0xc8] sm:$0xff]
        %v1907 = vld [vmem:[%s553 + $0xd0] sm:$0xff]
        %v1908 = vld [vmem:[%s553 + $0xd8] sm:$0xff]
        %v1909 = vld [vmem:[%s553 + $0xe0] sm:$0xff]
        %v1910 = vld [vmem:[%s553 + $0xe8] sm:$0xff]
        %v1911 = vld [vmem:[%s553 + $0xf0] sm:$0xff]
        %v1912 = vld [vmem:[%s553 + $0xf8] sm:$0xff]
        %v1913 = vmul.f32 %v1881, %v1849
        %v1914 = vmul.f32 %v1882, %v1850
        %v1915 = vmul.f32 %v1883, %v1851
        %v1916 = vmul.f32 %v1884, %v1852
        %v1917 = vmul.f32 %v1885, %v1853
        %v1918 = vmul.f32 %v1886, %v1854
        %v1919 = vmul.f32 %v1887, %v1855
        %v1920 = vmul.f32 %v1888, %v1856
        %v1921 = vmul.f32 %v1889, %v1857
        %v1922 = vmul.f32 %v1890, %v1858
        %v1923 = vmul.f32 %v1891, %v1859
        %v1924 = vmul.f32 %v1892, %v1860
        %v1925 = vmul.f32 %v1893, %v1861
        %v1926 = vmul.f32 %v1894, %v1862
        %v1927 = vmul.f32 %v1895, %v1863
        %v1928 = vmul.f32 %v1896, %v1864
        %v1929 = vmul.f32 %v1897, %v1865
        %v1930 = vmul.f32 %v1898, %v1866
        %v1931 = vmul.f32 %v1899, %v1867
        %v1932 = vmul.f32 %v1900, %v1868
        %v1933 = vmul.f32 %v1901, %v1869
        %v1934 = vmul.f32 %v1902, %v1870
        %v1935 = vmul.f32 %v1903, %v1871
        %v1936 = vmul.f32 %v1904, %v1872
        %v1937 = vmul.f32 %v1905, %v1873
        %v1938 = vmul.f32 %v1906, %v1874
        %v1939 = vmul.f32 %v1907, %v1875
        %v1940 = vmul.f32 %v1908, %v1876
        %v1941 = vmul.f32 %v1909, %v1877
        %v1942 = vmul.f32 %v1910, %v1878
        %v1943 = vmul.f32 %v1911, %v1879
        %v1944 = vmul.f32 %v1912, %v1880
        %v1945 = vld [vmem:[%s559] sm:$0xff]
        %v1946 = vld [vmem:[%s559 + $0x8] sm:$0xff]
        %v1947 = vld [vmem:[%s559 + $0x10] sm:$0xff]
        %v1948 = vld [vmem:[%s559 + $0x18] sm:$0xff]
        %v1949 = vld [vmem:[%s559 + $0x20] sm:$0xff]
        %v1950 = vld [vmem:[%s559 + $0x28] sm:$0xff]
        %v1951 = vld [vmem:[%s559 + $0x30] sm:$0xff]
        %v1952 = vld [vmem:[%s559 + $0x38] sm:$0xff]
        %v1953 = vld [vmem:[%s559 + $0x40] sm:$0xff]
        %v1954 = vld [vmem:[%s559 + $0x48] sm:$0xff]
        %v1955 = vld [vmem:[%s559 + $0x50] sm:$0xff]
        %v1956 = vld [vmem:[%s559 + $0x58] sm:$0xff]
        %v1957 = vld [vmem:[%s559 + $0x60] sm:$0xff]
        %v1958 = vld [vmem:[%s559 + $0x68] sm:$0xff]
        %v1959 = vld [vmem:[%s559 + $0x70] sm:$0xff]
        %v1960 = vld [vmem:[%s559 + $0x78] sm:$0xff]
        %v1961 = vld [vmem:[%s559 + $0x80] sm:$0xff]
        %v1962 = vld [vmem:[%s559 + $0x88] sm:$0xff]
        %v1963 = vld [vmem:[%s559 + $0x90] sm:$0xff]
        %v1964 = vld [vmem:[%s559 + $0x98] sm:$0xff]
        %v1965 = vld [vmem:[%s559 + $0xa0] sm:$0xff]
        %v1966 = vld [vmem:[%s559 + $0xa8] sm:$0xff]
        %v1967 = vld [vmem:[%s559 + $0xb0] sm:$0xff]
        %v1968 = vld [vmem:[%s559 + $0xb8] sm:$0xff]
        %v1969 = vld [vmem:[%s559 + $0xc0] sm:$0xff]
        %v1970 = vld [vmem:[%s559 + $0xc8] sm:$0xff]
        %v1971 = vld [vmem:[%s559 + $0xd0] sm:$0xff]
        %v1972 = vld [vmem:[%s559 + $0xd8] sm:$0xff]
        %v1973 = vld [vmem:[%s559 + $0xe0] sm:$0xff]
        %v1974 = vld [vmem:[%s559 + $0xe8] sm:$0xff]
        %v1975 = vld [vmem:[%s559 + $0xf0] sm:$0xff]
        %v1976 = vld [vmem:[%s559 + $0xf8] sm:$0xff]
        %v1977 = vmul.f32 %v1360, %v1913
        %v1978 = vmul.f32 %v1361, %v1914
        %v1979 = vmul.f32 %v1362, %v1915
        %v1980 = vmul.f32 %v1363, %v1916
        %v1981 = vmul.f32 %v1364, %v1917
        %v1982 = vmul.f32 %v1365, %v1918
        %v1983 = vmul.f32 %v1366, %v1919
        %v1984 = vmul.f32 %v1367, %v1920
        %v1985 = vmul.f32 %v1368, %v1921
        %v1986 = vmul.f32 %v1369, %v1922
        %v1987 = vmul.f32 %v1370, %v1923
        %v1988 = vmul.f32 %v1371, %v1924
        %v1989 = vmul.f32 %v1372, %v1925
        %v1990 = vmul.f32 %v1373, %v1926
        %v1991 = vmul.f32 %v1374, %v1927
        %v1992 = vmul.f32 %v1375, %v1928
        %v1993 = vmul.f32 %v1376, %v1929
        %v1994 = vmul.f32 %v1377, %v1930
        %v1995 = vmul.f32 %v1378, %v1931
        %v1996 = vmul.f32 %v1379, %v1932
        %v1997 = vmul.f32 %v1380, %v1933
        %v1998 = vmul.f32 %v1381, %v1934
        %v1999 = vmul.f32 %v1382, %v1935
        %v2000 = vmul.f32 %v1383, %v1936
        %v2001 = vmul.f32 %v1384, %v1937
        %v2002 = vmul.f32 %v1385, %v1938
        %v2003 = vmul.f32 %v1386, %v1939
        %v2004 = vmul.f32 %v1387, %v1940
        %v2005 = vmul.f32 %v1388, %v1941
        %v2006 = vmul.f32 %v1389, %v1942
        %v2007 = vmul.f32 %v1390, %v1943
        %v2008 = vmul.f32 %v1391, %v1944
        %v2009 = vsub.f32 %v1945, %v1977
        %v2010 = vsub.f32 %v1946, %v1978
        %v2011 = vsub.f32 %v1947, %v1979
        %v2012 = vsub.f32 %v1948, %v1980
        %v2013 = vsub.f32 %v1949, %v1981
        %v2014 = vsub.f32 %v1950, %v1982
        %v2015 = vsub.f32 %v1951, %v1983
        %v2016 = vsub.f32 %v1952, %v1984
        %v2017 = vsub.f32 %v1953, %v1985
        %v2018 = vsub.f32 %v1954, %v1986
        %v2019 = vsub.f32 %v1955, %v1987
        %v2020 = vsub.f32 %v1956, %v1988
        %v2021 = vsub.f32 %v1957, %v1989
        %v2022 = vsub.f32 %v1958, %v1990
        %v2023 = vsub.f32 %v1959, %v1991
        %v2024 = vsub.f32 %v1960, %v1992
        %v2025 = vsub.f32 %v1961, %v1993
        %v2026 = vsub.f32 %v1962, %v1994
        %v2027 = vsub.f32 %v1963, %v1995
        %v2028 = vsub.f32 %v1964, %v1996
        %v2029 = vsub.f32 %v1965, %v1997
        %v2030 = vsub.f32 %v1966, %v1998
        %v2031 = vsub.f32 %v1967, %v1999
        %v2032 = vsub.f32 %v1968, %v2000
        %v2033 = vsub.f32 %v1969, %v2001
        %v2034 = vsub.f32 %v1970, %v2002
        %v2035 = vsub.f32 %v1971, %v2003
        %v2036 = vsub.f32 %v1972, %v2004
        %v2037 = vsub.f32 %v1973, %v2005
        %v2038 = vsub.f32 %v1974, %v2006
        %v2039 = vsub.f32 %v1975, %v2007
        %v2040 = vsub.f32 %v1976, %v2008
        %2042 = vset.pattern.permute.xlu0 0
        %2043 = vperm.xlu0 %2042, %v1913
        %v2044 = vpop.permute.xlu0 %2043
        %2047 = vset.pattern.permute.xlu0 0
        %2048 = vperm.xlu0 %2047, %v1914
        %v2049 = vpop.permute.xlu0 %2048
        %2052 = vset.pattern.permute.xlu0 0
        %2053 = vperm.xlu0 %2052, %v1915
        %v2054 = vpop.permute.xlu0 %2053
        %2057 = vset.pattern.permute.xlu0 0
        %2058 = vperm.xlu0 %2057, %v1916
        %v2059 = vpop.permute.xlu0 %2058
        %2062 = vset.pattern.permute.xlu0 0
        %2063 = vperm.xlu0 %2062, %v1917
        %v2064 = vpop.permute.xlu0 %2063
        %2067 = vset.pattern.permute.xlu0 0
        %2068 = vperm.xlu0 %2067, %v1918
        %v2069 = vpop.permute.xlu0 %2068
        %2072 = vset.pattern.permute.xlu0 0
        %2073 = vperm.xlu0 %2072, %v1919
        %v2074 = vpop.permute.xlu0 %2073
        %2077 = vset.pattern.permute.xlu0 0
        %2078 = vperm.xlu0 %2077, %v1920
        %v2079 = vpop.permute.xlu0 %2078
        %2082 = vset.pattern.permute.xlu0 0
        %2083 = vperm.xlu0 %2082, %v1921
        %v2084 = vpop.permute.xlu0 %2083
        %2087 = vset.pattern.permute.xlu0 0
        %2088 = vperm.xlu0 %2087, %v1922
        %v2089 = vpop.permute.xlu0 %2088
        %2092 = vset.pattern.permute.xlu0 0
        %2093 = vperm.xlu0 %2092, %v1923
        %v2094 = vpop.permute.xlu0 %2093
        %2097 = vset.pattern.permute.xlu0 0
        %2098 = vperm.xlu0 %2097, %v1924
        %v2099 = vpop.permute.xlu0 %2098
        %2102 = vset.pattern.permute.xlu0 0
        %2103 = vperm.xlu0 %2102, %v1925
        %v2104 = vpop.permute.xlu0 %2103
        %2107 = vset.pattern.permute.xlu0 0
        %2108 = vperm.xlu0 %2107, %v1926
        %v2109 = vpop.permute.xlu0 %2108
        %2112 = vset.pattern.permute.xlu0 0
        %2113 = vperm.xlu0 %2112, %v1927
        %v2114 = vpop.permute.xlu0 %2113
        %2117 = vset.pattern.permute.xlu0 0
        %2118 = vperm.xlu0 %2117, %v1928
        %v2119 = vpop.permute.xlu0 %2118
        %2122 = vset.pattern.permute.xlu0 0
        %2123 = vperm.xlu0 %2122, %v1929
        %v2124 = vpop.permute.xlu0 %2123
        %2127 = vset.pattern.permute.xlu0 0
        %2128 = vperm.xlu0 %2127, %v1930
        %v2129 = vpop.permute.xlu0 %2128
        %2132 = vset.pattern.permute.xlu0 0
        %2133 = vperm.xlu0 %2132, %v1931
        %v2134 = vpop.permute.xlu0 %2133
        %2137 = vset.pattern.permute.xlu0 0
        %2138 = vperm.xlu0 %2137, %v1932
        %v2139 = vpop.permute.xlu0 %2138
        %2142 = vset.pattern.permute.xlu0 0
        %2143 = vperm.xlu0 %2142, %v1933
        %v2144 = vpop.permute.xlu0 %2143
        %2147 = vset.pattern.permute.xlu0 0
        %2148 = vperm.xlu0 %2147, %v1934
        %v2149 = vpop.permute.xlu0 %2148
        %2152 = vset.pattern.permute.xlu0 0
        %2153 = vperm.xlu0 %2152, %v1935
        %v2154 = vpop.permute.xlu0 %2153
        %2157 = vset.pattern.permute.xlu0 0
        %2158 = vperm.xlu0 %2157, %v1936
        %v2159 = vpop.permute.xlu0 %2158
        %2162 = vset.pattern.permute.xlu0 0
        %2163 = vperm.xlu0 %2162, %v1937
        %v2164 = vpop.permute.xlu0 %2163
        %2167 = vset.pattern.permute.xlu0 0
        %2168 = vperm.xlu0 %2167, %v1938
        %v2169 = vpop.permute.xlu0 %2168
        %2172 = vset.pattern.permute.xlu0 0
        %2173 = vperm.xlu0 %2172, %v1939
        %v2174 = vpop.permute.xlu0 %2173
        %2177 = vset.pattern.permute.xlu0 0
        %2178 = vperm.xlu0 %2177, %v1940
        %v2179 = vpop.permute.xlu0 %2178
        %2182 = vset.pattern.permute.xlu0 0
        %2183 = vperm.xlu0 %2182, %v1941
        %v2184 = vpop.permute.xlu0 %2183
        %2187 = vset.pattern.permute.xlu0 0
        %2188 = vperm.xlu0 %2187, %v1942
        %v2189 = vpop.permute.xlu0 %2188
        %2192 = vset.pattern.permute.xlu0 0
        %2193 = vperm.xlu0 %2192, %v1943
        %v2194 = vpop.permute.xlu0 %2193
        %2197 = vset.pattern.permute.xlu0 0
        %2198 = vperm.xlu0 %2197, %v1944
        %v2199 = vpop.permute.xlu0 %2198
        %v2201 = vmul.f32 %v1561, %v2044
        %v2202 = vmul.f32 %v1562, %v2049
        %v2203 = vmul.f32 %v1563, %v2054
        %v2204 = vmul.f32 %v1564, %v2059
        %v2205 = vmul.f32 %v1565, %v2064
        %v2206 = vmul.f32 %v1566, %v2069
        %v2207 = vmul.f32 %v1567, %v2074
        %v2208 = vmul.f32 %v1568, %v2079
        %v2209 = vmul.f32 %v1569, %v2084
        %v2210 = vmul.f32 %v1570, %v2089
        %v2211 = vmul.f32 %v1571, %v2094
        %v2212 = vmul.f32 %v1572, %v2099
        %v2213 = vmul.f32 %v1573, %v2104
        %v2214 = vmul.f32 %v1574, %v2109
        %v2215 = vmul.f32 %v1575, %v2114
        %v2216 = vmul.f32 %v1576, %v2119
        %v2217 = vmul.f32 %v1577, %v2124
        %v2218 = vmul.f32 %v1578, %v2129
        %v2219 = vmul.f32 %v1579, %v2134
        %v2220 = vmul.f32 %v1580, %v2139
        %v2221 = vmul.f32 %v1581, %v2144
        %v2222 = vmul.f32 %v1582, %v2149
        %v2223 = vmul.f32 %v1583, %v2154
        %v2224 = vmul.f32 %v1584, %v2159
        %v2225 = vmul.f32 %v1585, %v2164
        %v2226 = vmul.f32 %v1586, %v2169
        %v2227 = vmul.f32 %v1587, %v2174
        %v2228 = vmul.f32 %v1588, %v2179
        %v2229 = vmul.f32 %v1589, %v2184
        %v2230 = vmul.f32 %v1590, %v2189
        %v2231 = vmul.f32 %v1591, %v2194
        %v2232 = vmul.f32 %v1592, %v2199
        %v2233 = vpack.c.bf16 %v2202, %v2201
        %v2234 = vpack.c.bf16 %v2204, %v2203
        %v2235 = vpack.c.bf16 %v2206, %v2205
        %v2236 = vpack.c.bf16 %v2208, %v2207
        %v2237 = vpack.c.bf16 %v2210, %v2209
        %v2238 = vpack.c.bf16 %v2212, %v2211
        %v2239 = vpack.c.bf16 %v2214, %v2213
        %v2240 = vpack.c.bf16 %v2216, %v2215
        %v2241 = vpack.c.bf16 %v2218, %v2217
        %v2242 = vpack.c.bf16 %v2220, %v2219
        %v2243 = vpack.c.bf16 %v2222, %v2221
        %v2244 = vpack.c.bf16 %v2224, %v2223
        %v2245 = vpack.c.bf16 %v2226, %v2225
        %v2246 = vpack.c.bf16 %v2228, %v2227
        %v2247 = vpack.c.bf16 %v2230, %v2229
        %v2248 = vpack.c.bf16 %v2232, %v2231
        %2250 = vset.pattern.permute.xlu0 0
        %2251 = vperm.xlu0 %2250, %v2009
        %v2252 = vpop.permute.xlu0 %2251
        %2255 = vset.pattern.permute.xlu0 0
        %2256 = vperm.xlu0 %2255, %v2010
        %v2257 = vpop.permute.xlu0 %2256
        %2260 = vset.pattern.permute.xlu0 0
        %2261 = vperm.xlu0 %2260, %v2011
        %v2262 = vpop.permute.xlu0 %2261
        %2265 = vset.pattern.permute.xlu0 0
        %2266 = vperm.xlu0 %2265, %v2012
        %v2267 = vpop.permute.xlu0 %2266
        %2270 = vset.pattern.permute.xlu0 0
        %2271 = vperm.xlu0 %2270, %v2013
        %v2272 = vpop.permute.xlu0 %2271
        %2275 = vset.pattern.permute.xlu0 0
        %2276 = vperm.xlu0 %2275, %v2014
        %v2277 = vpop.permute.xlu0 %2276
        %2280 = vset.pattern.permute.xlu0 0
        %2281 = vperm.xlu0 %2280, %v2015
        %v2282 = vpop.permute.xlu0 %2281
        %2285 = vset.pattern.permute.xlu0 0
        %2286 = vperm.xlu0 %2285, %v2016
        %v2287 = vpop.permute.xlu0 %2286
        %2290 = vset.pattern.permute.xlu0 0
        %2291 = vperm.xlu0 %2290, %v2017
        %v2292 = vpop.permute.xlu0 %2291
        %2295 = vset.pattern.permute.xlu0 0
        %2296 = vperm.xlu0 %2295, %v2018
        %v2297 = vpop.permute.xlu0 %2296
        %2300 = vset.pattern.permute.xlu0 0
        %2301 = vperm.xlu0 %2300, %v2019
        %v2302 = vpop.permute.xlu0 %2301
        %2305 = vset.pattern.permute.xlu0 0
        %2306 = vperm.xlu0 %2305, %v2020
        %v2307 = vpop.permute.xlu0 %2306
        %2310 = vset.pattern.permute.xlu0 0
        %2311 = vperm.xlu0 %2310, %v2021
        %v2312 = vpop.permute.xlu0 %2311
        %2315 = vset.pattern.permute.xlu0 0
        %2316 = vperm.xlu0 %2315, %v2022
        %v2317 = vpop.permute.xlu0 %2316
        %2320 = vset.pattern.permute.xlu0 0
        %2321 = vperm.xlu0 %2320, %v2023
        %v2322 = vpop.permute.xlu0 %2321
        %2325 = vset.pattern.permute.xlu0 0
        %2326 = vperm.xlu0 %2325, %v2024
        %v2327 = vpop.permute.xlu0 %2326
        %2330 = vset.pattern.permute.xlu0 0
        %2331 = vperm.xlu0 %2330, %v2025
        %v2332 = vpop.permute.xlu0 %2331
        %2335 = vset.pattern.permute.xlu0 0
        %2336 = vperm.xlu0 %2335, %v2026
        %v2337 = vpop.permute.xlu0 %2336
        %2340 = vset.pattern.permute.xlu0 0
        %2341 = vperm.xlu0 %2340, %v2027
        %v2342 = vpop.permute.xlu0 %2341
        %2345 = vset.pattern.permute.xlu0 0
        %2346 = vperm.xlu0 %2345, %v2028
        %v2347 = vpop.permute.xlu0 %2346
        %2350 = vset.pattern.permute.xlu0 0
        %2351 = vperm.xlu0 %2350, %v2029
        %v2352 = vpop.permute.xlu0 %2351
        %2355 = vset.pattern.permute.xlu0 0
        %2356 = vperm.xlu0 %2355, %v2030
        %v2357 = vpop.permute.xlu0 %2356
        %2360 = vset.pattern.permute.xlu0 0
        %2361 = vperm.xlu0 %2360, %v2031
        %v2362 = vpop.permute.xlu0 %2361
        %2365 = vset.pattern.permute.xlu0 0
        %2366 = vperm.xlu0 %2365, %v2032
        %v2367 = vpop.permute.xlu0 %2366
        %2370 = vset.pattern.permute.xlu0 0
        %2371 = vperm.xlu0 %2370, %v2033
        %v2372 = vpop.permute.xlu0 %2371
        %2375 = vset.pattern.permute.xlu0 0
        %2376 = vperm.xlu0 %2375, %v2034
        %v2377 = vpop.permute.xlu0 %2376
        %2380 = vset.pattern.permute.xlu0 0
        %2381 = vperm.xlu0 %2380, %v2035
        %v2382 = vpop.permute.xlu0 %2381
        %2385 = vset.pattern.permute.xlu0 0
        %2386 = vperm.xlu0 %2385, %v2036
        %v2387 = vpop.permute.xlu0 %2386
        %2390 = vset.pattern.permute.xlu0 0
        %2391 = vperm.xlu0 %2390, %v2037
        %v2392 = vpop.permute.xlu0 %2391
        %2395 = vset.pattern.permute.xlu0 0
        %2396 = vperm.xlu0 %2395, %v2038
        %v2397 = vpop.permute.xlu0 %2396
        %2400 = vset.pattern.permute.xlu0 0
        %2401 = vperm.xlu0 %2400, %v2039
        %v2402 = vpop.permute.xlu0 %2401
        %2405 = vset.pattern.permute.xlu0 0
        %2406 = vperm.xlu0 %2405, %v2040
        %v2407 = vpop.permute.xlu0 %2406
        %2409 = vmatprep.subr.bf16.mxu0 %v723
        %2410 = vmatpush1.bf16.msra.mxu0 %v722
        %2411 = vmatprep.subr.bf16.mxu0 %v721
        %2412 = vmatpush1.bf16.msra.mxu0 %v720
        %2413 = vmatprep.subr.bf16.mxu0 %v719
        %2414 = vmatpush1.bf16.msra.mxu0 %v718
        %2415 = vmatprep.subr.bf16.mxu0 %v717
        %2416 = vmatpush1.bf16.msra.mxu0 %v716
        %2417 = vmatprep.subr.bf16.mxu0 %v715
        %2418 = vmatpush1.bf16.msra.mxu0 %v714
        %2419 = vmatprep.subr.bf16.mxu0 %v713
        %2420 = vmatpush1.bf16.msra.mxu0 %v712
        %2421 = vmatprep.subr.bf16.mxu0 %v711
        %2422 = vmatpush1.bf16.msra.mxu0 %v710
        %2423 = vmatprep.subr.bf16.mxu0 %v709
        %2424 = vmatpush1.bf16.msra.mxu0 %v708
        %2425 = vmatprep.subr.bf16.mxu0 0
        %2426 = vmatpush2.bf16.msra.mxu0 0
        %2427 = vmatprep.subr.bf16.mxu0 0
        %2428 = vmatpush2.bf16.msra.mxu0 0
        %2429 = vmatprep.subr.bf16.mxu0 0
        %2430 = vmatpush2.bf16.msra.mxu0 0
        %2431 = vmatprep.subr.bf16.mxu0 0
        %2432 = vmatpush2.bf16.msra.mxu0 0
        %2433 = vmatprep.subr.bf16.mxu0 0
        %2434 = vmatpush2.bf16.msra.mxu0 0
        %2435 = vmatprep.subr.bf16.mxu0 0
        %2436 = vmatpush2.bf16.msra.mxu0 0
        %2437 = vmatprep.subr.bf16.mxu0 0
        %2438 = vmatpush2.bf16.msra.mxu0 0
        %2439 = vmatprep.subr.bf16.mxu0 0
        %2440 = vmatpush2.bf16.msra.mxu0 0
        %2441 = vmatprep.mubr.bf16.mxu0 0
        %2442 = vmatmul.mubr.bf16.gmra.mxu0 %v2233
        %v2443 = vpop.f32.mrf.mxu0
        %v2444 = vadd.f32 %v2252, %v2443
        %v2445 = vpop.f32.mrf.mxu0
        %v2446 = vadd.f32 %v2252, %v2445
        %v2447 = vpop.f32.mrf.mxu0
        %v2448 = vadd.f32 %v2257, %v2447
        %v2449 = vpop.f32.mrf.mxu0
        %v2450 = vadd.f32 %v2257, %v2449
        %2451 = vmatprep.mubr.bf16.mxu0 0
        %2452 = vmatmul.mubr.bf16.gmra.mxu0 %v2234
        %v2453 = vpop.f32.mrf.mxu0
        %v2454 = vadd.f32 %v2262, %v2453
        %v2455 = vpop.f32.mrf.mxu0
        %v2456 = vadd.f32 %v2262, %v2455
        %v2457 = vpop.f32.mrf.mxu0
        %v2458 = vadd.f32 %v2267, %v2457
        %v2459 = vpop.f32.mrf.mxu0
        %v2460 = vadd.f32 %v2267, %v2459
        %2461 = vmatprep.mubr.bf16.mxu0 0
        %2462 = vmatmul.mubr.bf16.gmra.mxu0 %v2235
        %v2463 = vpop.f32.mrf.mxu0
        %v2464 = vadd.f32 %v2272, %v2463
        %v2465 = vpop.f32.mrf.mxu0
        %v2466 = vadd.f32 %v2272, %v2465
        %v2467 = vpop.f32.mrf.mxu0
        %v2468 = vadd.f32 %v2277, %v2467
        %v2469 = vpop.f32.mrf.mxu0
        %v2470 = vadd.f32 %v2277, %v2469
        %2471 = vmatprep.mubr.bf16.mxu0 0
        %2472 = vmatmul.mubr.bf16.gmra.mxu0 %v2236
        %v2473 = vpop.f32.mrf.mxu0
        %v2474 = vadd.f32 %v2282, %v2473
        %v2475 = vpop.f32.mrf.mxu0
        %v2476 = vadd.f32 %v2282, %v2475
        %v2477 = vpop.f32.mrf.mxu0
        %v2478 = vadd.f32 %v2287, %v2477
        %v2479 = vpop.f32.mrf.mxu0
        %v2480 = vadd.f32 %v2287, %v2479
        %2481 = vmatprep.mubr.bf16.mxu0 0
        %2482 = vmatmul.mubr.bf16.gmra.mxu0 %v2237
        %v2483 = vpop.f32.mrf.mxu0
        %v2484 = vadd.f32 %v2292, %v2483
        %v2485 = vpop.f32.mrf.mxu0
        %v2486 = vadd.f32 %v2292, %v2485
        %v2487 = vpop.f32.mrf.mxu0
        %v2488 = vadd.f32 %v2297, %v2487
        %v2489 = vpop.f32.mrf.mxu0
        %v2490 = vadd.f32 %v2297, %v2489
        %2491 = vmatprep.mubr.bf16.mxu0 0
        %2492 = vmatmul.mubr.bf16.gmra.mxu0 %v2238
        %v2493 = vpop.f32.mrf.mxu0
        %v2494 = vadd.f32 %v2302, %v2493
        %v2495 = vpop.f32.mrf.mxu0
        %v2496 = vadd.f32 %v2302, %v2495
        %v2497 = vpop.f32.mrf.mxu0
        %v2498 = vadd.f32 %v2307, %v2497
        %v2499 = vpop.f32.mrf.mxu0
        %v2500 = vadd.f32 %v2307, %v2499
        %2501 = vmatprep.mubr.bf16.mxu0 0
        %2502 = vmatmul.mubr.bf16.gmra.mxu0 %v2239
        %v2503 = vpop.f32.mrf.mxu0
        %v2504 = vadd.f32 %v2312, %v2503
        %v2505 = vpop.f32.mrf.mxu0
        %v2506 = vadd.f32 %v2312, %v2505
        %v2507 = vpop.f32.mrf.mxu0
        %v2508 = vadd.f32 %v2317, %v2507
        %v2509 = vpop.f32.mrf.mxu0
        %v2510 = vadd.f32 %v2317, %v2509
        %2511 = vmatprep.mubr.bf16.mxu0 0
        %2512 = vmatmul.mubr.bf16.gmra.mxu0 %v2240
        %v2513 = vpop.f32.mrf.mxu0
        %v2514 = vadd.f32 %v2322, %v2513
        %v2515 = vpop.f32.mrf.mxu0
        %v2516 = vadd.f32 %v2322, %v2515
        %v2517 = vpop.f32.mrf.mxu0
        %v2518 = vadd.f32 %v2327, %v2517
        %v2519 = vpop.f32.mrf.mxu0
        %v2520 = vadd.f32 %v2327, %v2519
        %2521 = vmatprep.mubr.bf16.mxu0 0
        %2522 = vmatmul.mubr.bf16.gmra.mxu0 %v2241
        %v2523 = vpop.f32.mrf.mxu0
        %v2524 = vadd.f32 %v2332, %v2523
        %v2525 = vpop.f32.mrf.mxu0
        %v2526 = vadd.f32 %v2332, %v2525
        %v2527 = vpop.f32.mrf.mxu0
        %v2528 = vadd.f32 %v2337, %v2527
        %v2529 = vpop.f32.mrf.mxu0
        %v2530 = vadd.f32 %v2337, %v2529
        %2531 = vmatprep.mubr.bf16.mxu0 0
        %2532 = vmatmul.mubr.bf16.gmra.mxu0 %v2242
        %v2533 = vpop.f32.mrf.mxu0
        %v2534 = vadd.f32 %v2342, %v2533
        %v2535 = vpop.f32.mrf.mxu0
        %v2536 = vadd.f32 %v2342, %v2535
        %v2537 = vpop.f32.mrf.mxu0
        %v2538 = vadd.f32 %v2347, %v2537
        %v2539 = vpop.f32.mrf.mxu0
        %v2540 = vadd.f32 %v2347, %v2539
        %2541 = vmatprep.mubr.bf16.mxu0 0
        %2542 = vmatmul.mubr.bf16.gmra.mxu0 %v2243
        %v2543 = vpop.f32.mrf.mxu0
        %v2544 = vadd.f32 %v2352, %v2543
        %v2545 = vpop.f32.mrf.mxu0
        %v2546 = vadd.f32 %v2352, %v2545
        %v2547 = vpop.f32.mrf.mxu0
        %v2548 = vadd.f32 %v2357, %v2547
        %v2549 = vpop.f32.mrf.mxu0
        %v2550 = vadd.f32 %v2357, %v2549
        %2551 = vmatprep.mubr.bf16.mxu0 0
        %2552 = vmatmul.mubr.bf16.gmra.mxu0 %v2244
        %v2553 = vpop.f32.mrf.mxu0
        %v2554 = vadd.f32 %v2362, %v2553
        %v2555 = vpop.f32.mrf.mxu0
        %v2556 = vadd.f32 %v2362, %v2555
        %v2557 = vpop.f32.mrf.mxu0
        %v2558 = vadd.f32 %v2367, %v2557
        %v2559 = vpop.f32.mrf.mxu0
        %v2560 = vadd.f32 %v2367, %v2559
        %2561 = vmatprep.mubr.bf16.mxu0 0
        %2562 = vmatmul.mubr.bf16.gmra.mxu0 %v2245
        %v2563 = vpop.f32.mrf.mxu0
        %v2564 = vadd.f32 %v2372, %v2563
        %v2565 = vpop.f32.mrf.mxu0
        %v2566 = vadd.f32 %v2372, %v2565
        %v2567 = vpop.f32.mrf.mxu0
        %v2568 = vadd.f32 %v2377, %v2567
        %v2569 = vpop.f32.mrf.mxu0
        %v2570 = vadd.f32 %v2377, %v2569
        %2571 = vmatprep.mubr.bf16.mxu0 0
        %2572 = vmatmul.mubr.bf16.gmra.mxu0 %v2246
        %v2573 = vpop.f32.mrf.mxu0
        %v2574 = vadd.f32 %v2382, %v2573
        %v2575 = vpop.f32.mrf.mxu0
        %v2576 = vadd.f32 %v2382, %v2575
        %v2577 = vpop.f32.mrf.mxu0
        %v2578 = vadd.f32 %v2387, %v2577
        %v2579 = vpop.f32.mrf.mxu0
        %v2580 = vadd.f32 %v2387, %v2579
        %2581 = vmatprep.mubr.bf16.mxu0 0
        %2582 = vmatmul.mubr.bf16.gmra.mxu0 %v2247
        %v2583 = vpop.f32.mrf.mxu0
        %v2584 = vadd.f32 %v2392, %v2583
        %v2585 = vpop.f32.mrf.mxu0
        %v2586 = vadd.f32 %v2392, %v2585
        %v2587 = vpop.f32.mrf.mxu0
        %v2588 = vadd.f32 %v2397, %v2587
        %v2589 = vpop.f32.mrf.mxu0
        %v2590 = vadd.f32 %v2397, %v2589
        %2591 = vmatprep.mubr.bf16.mxu0 0
        %2592 = vmatmul.mubr.bf16.gmra.mxu0 %v2248
        %v2593 = vpop.f32.mrf.mxu0
        %v2594 = vadd.f32 %v2402, %v2593
        %v2595 = vpop.f32.mrf.mxu0
        %v2596 = vadd.f32 %v2402, %v2595
        %v2597 = vpop.f32.mrf.mxu0
        %v2598 = vadd.f32 %v2407, %v2597
        %v2599 = vpop.f32.mrf.mxu0
        %v2600 = vadd.f32 %v2407, %v2599
        %2601 = vdwg.mxu0
        %v2602 = vld [vmem:[%s503] sm:$0xff]
        %v2603 = vld [vmem:[%s503 + $0x8] sm:$0xff]
        %v2604 = vld [vmem:[%s503 + $0x10] sm:$0xff]
        %v2605 = vld [vmem:[%s503 + $0x18] sm:$0xff]
        %v2606 = vld [vmem:[%s503 + $0x20] sm:$0xff]
        %v2607 = vld [vmem:[%s503 + $0x28] sm:$0xff]
        %v2608 = vld [vmem:[%s503 + $0x30] sm:$0xff]
        %v2609 = vld [vmem:[%s503 + $0x38] sm:$0xff]
        %v2610 = vld [vmem:[%s503 + $0x40] sm:$0xff]
        %v2611 = vld [vmem:[%s503 + $0x48] sm:$0xff]
        %v2612 = vld [vmem:[%s503 + $0x50] sm:$0xff]
        %v2613 = vld [vmem:[%s503 + $0x58] sm:$0xff]
        %v2614 = vld [vmem:[%s503 + $0x60] sm:$0xff]
        %v2615 = vld [vmem:[%s503 + $0x68] sm:$0xff]
        %v2616 = vld [vmem:[%s503 + $0x70] sm:$0xff]
        %v2617 = vld [vmem:[%s503 + $0x78] sm:$0xff]
        %v2618 = vld [vmem:[%s503 + $0x80] sm:$0xff]
        %v2619 = vld [vmem:[%s503 + $0x88] sm:$0xff]
        %v2620 = vld [vmem:[%s503 + $0x90] sm:$0xff]
        %v2621 = vld [vmem:[%s503 + $0x98] sm:$0xff]
        %v2622 = vld [vmem:[%s503 + $0xa0] sm:$0xff]
        %v2623 = vld [vmem:[%s503 + $0xa8] sm:$0xff]
        %v2624 = vld [vmem:[%s503 + $0xb0] sm:$0xff]
        %v2625 = vld [vmem:[%s503 + $0xb8] sm:$0xff]
        %v2626 = vld [vmem:[%s503 + $0xc0] sm:$0xff]
        %v2627 = vld [vmem:[%s503 + $0xc8] sm:$0xff]
        %v2628 = vld [vmem:[%s503 + $0xd0] sm:$0xff]
        %v2629 = vld [vmem:[%s503 + $0xd8] sm:$0xff]
        %v2630 = vld [vmem:[%s503 + $0xe0] sm:$0xff]
        %v2631 = vld [vmem:[%s503 + $0xe8] sm:$0xff]
        %v2632 = vld [vmem:[%s503 + $0xf0] sm:$0xff]
        %v2633 = vld [vmem:[%s503 + $0xf8] sm:$0xff]
        %v2634 = vld [vmem:[%s503 + $0x100] sm:$0xff]
        %v2635 = vld [vmem:[%s503 + $0x108] sm:$0xff]
        %v2636 = vld [vmem:[%s503 + $0x110] sm:$0xff]
        %v2637 = vld [vmem:[%s503 + $0x118] sm:$0xff]
        %v2638 = vld [vmem:[%s503 + $0x120] sm:$0xff]
        %v2639 = vld [vmem:[%s503 + $0x128] sm:$0xff]
        %v2640 = vld [vmem:[%s503 + $0x130] sm:$0xff]
        %v2641 = vld [vmem:[%s503 + $0x138] sm:$0xff]
        %v2642 = vld [vmem:[%s503 + $0x140] sm:$0xff]
        %v2643 = vld [vmem:[%s503 + $0x148] sm:$0xff]
        %v2644 = vld [vmem:[%s503 + $0x150] sm:$0xff]
        %v2645 = vld [vmem:[%s503 + $0x158] sm:$0xff]
        %v2646 = vld [vmem:[%s503 + $0x160] sm:$0xff]
        %v2647 = vld [vmem:[%s503 + $0x168] sm:$0xff]
        %v2648 = vld [vmem:[%s503 + $0x170] sm:$0xff]
        %v2649 = vld [vmem:[%s503 + $0x178] sm:$0xff]
        %v2650 = vld [vmem:[%s503 + $0x180] sm:$0xff]
        %v2651 = vld [vmem:[%s503 + $0x188] sm:$0xff]
        %v2652 = vld [vmem:[%s503 + $0x190] sm:$0xff]
        %v2653 = vld [vmem:[%s503 + $0x198] sm:$0xff]
        %v2654 = vld [vmem:[%s503 + $0x1a0] sm:$0xff]
        %v2655 = vld [vmem:[%s503 + $0x1a8] sm:$0xff]
        %v2656 = vld [vmem:[%s503 + $0x1b0] sm:$0xff]
        %v2657 = vld [vmem:[%s503 + $0x1b8] sm:$0xff]
        %v2658 = vld [vmem:[%s503 + $0x1c0] sm:$0xff]
        %v2659 = vld [vmem:[%s503 + $0x1c8] sm:$0xff]
        %v2660 = vld [vmem:[%s503 + $0x1d0] sm:$0xff]
        %v2661 = vld [vmem:[%s503 + $0x1d8] sm:$0xff]
        %v2662 = vld [vmem:[%s503 + $0x1e0] sm:$0xff]
        %v2663 = vld [vmem:[%s503 + $0x1e8] sm:$0xff]
        %v2664 = vld [vmem:[%s503 + $0x1f0] sm:$0xff]
        %v2665 = vld [vmem:[%s503 + $0x1f8] sm:$0xff]
        %v2666 = vadd.f32 %v2444, %v2602
        %v2667 = vadd.f32 %v2446, %v2603
        %v2668 = vadd.f32 %v2448, %v2604
        %v2669 = vadd.f32 %v2450, %v2605
        %v2670 = vadd.f32 %v2454, %v2606
        %v2671 = vadd.f32 %v2456, %v2607
        %v2672 = vadd.f32 %v2458, %v2608
        %v2673 = vadd.f32 %v2460, %v2609
        %v2674 = vadd.f32 %v2464, %v2610
        %v2675 = vadd.f32 %v2466, %v2611
        %v2676 = vadd.f32 %v2468, %v2612
        %v2677 = vadd.f32 %v2470, %v2613
        %v2678 = vadd.f32 %v2474, %v2614
        %v2679 = vadd.f32 %v2476, %v2615
        %v2680 = vadd.f32 %v2478, %v2616
        %v2681 = vadd.f32 %v2480, %v2617
        %v2682 = vadd.f32 %v2484, %v2618
        %v2683 = vadd.f32 %v2486, %v2619
        %v2684 = vadd.f32 %v2488, %v2620
        %v2685 = vadd.f32 %v2490, %v2621
        %v2686 = vadd.f32 %v2494, %v2622
        %v2687 = vadd.f32 %v2496, %v2623
        %v2688 = vadd.f32 %v2498, %v2624
        %v2689 = vadd.f32 %v2500, %v2625
        %v2690 = vadd.f32 %v2504, %v2626
        %v2691 = vadd.f32 %v2506, %v2627
        %v2692 = vadd.f32 %v2508, %v2628
        %v2693 = vadd.f32 %v2510, %v2629
        %v2694 = vadd.f32 %v2514, %v2630
        %v2695 = vadd.f32 %v2516, %v2631
        %v2696 = vadd.f32 %v2518, %v2632
        %v2697 = vadd.f32 %v2520, %v2633
        %v2698 = vadd.f32 %v2524, %v2634
        %v2699 = vadd.f32 %v2526, %v2635
        %v2700 = vadd.f32 %v2528, %v2636
        %v2701 = vadd.f32 %v2530, %v2637
        %v2702 = vadd.f32 %v2534, %v2638
        %v2703 = vadd.f32 %v2536, %v2639
        %v2704 = vadd.f32 %v2538, %v2640
        %v2705 = vadd.f32 %v2540, %v2641
        %v2706 = vadd.f32 %v2544, %v2642
        %v2707 = vadd.f32 %v2546, %v2643
        %v2708 = vadd.f32 %v2548, %v2644
        %v2709 = vadd.f32 %v2550, %v2645
        %v2710 = vadd.f32 %v2554, %v2646
        %v2711 = vadd.f32 %v2556, %v2647
        %v2712 = vadd.f32 %v2558, %v2648
        %v2713 = vadd.f32 %v2560, %v2649
        %v2714 = vadd.f32 %v2564, %v2650
        %v2715 = vadd.f32 %v2566, %v2651
        %v2716 = vadd.f32 %v2568, %v2652
        %v2717 = vadd.f32 %v2570, %v2653
        %v2718 = vadd.f32 %v2574, %v2654
        %v2719 = vadd.f32 %v2576, %v2655
        %v2720 = vadd.f32 %v2578, %v2656
        %v2721 = vadd.f32 %v2580, %v2657
        %v2722 = vadd.f32 %v2584, %v2658
        %v2723 = vadd.f32 %v2586, %v2659
        %v2724 = vadd.f32 %v2588, %v2660
        %v2725 = vadd.f32 %v2590, %v2661
        %v2726 = vadd.f32 %v2594, %v2662
        %v2727 = vadd.f32 %v2596, %v2663
        %v2728 = vadd.f32 %v2598, %v2664
        %v2729 = vadd.f32 %v2600, %v2665
        %v2730 = vmax.f32 %v2666, 0.0
        %v2731 = vmax.f32 %v2667, 0.0
        %v2732 = vmax.f32 %v2668, 0.0
        %v2733 = vmax.f32 %v2669, 0.0
        %v2734 = vmax.f32 %v2670, 0.0
        %v2735 = vmax.f32 %v2671, 0.0
        %v2736 = vmax.f32 %v2672, 0.0
        %v2737 = vmax.f32 %v2673, 0.0
        %v2738 = vmax.f32 %v2674, 0.0
        %v2739 = vmax.f32 %v2675, 0.0
        %v2740 = vmax.f32 %v2676, 0.0
        %v2741 = vmax.f32 %v2677, 0.0
        %v2742 = vmax.f32 %v2678, 0.0
        %v2743 = vmax.f32 %v2679, 0.0
        %v2744 = vmax.f32 %v2680, 0.0
        %v2745 = vmax.f32 %v2681, 0.0
        %v2746 = vmax.f32 %v2682, 0.0
        %v2747 = vmax.f32 %v2683, 0.0
        %v2748 = vmax.f32 %v2684, 0.0
        %v2749 = vmax.f32 %v2685, 0.0
        %v2750 = vmax.f32 %v2686, 0.0
        %v2751 = vmax.f32 %v2687, 0.0
        %v2752 = vmax.f32 %v2688, 0.0
        %v2753 = vmax.f32 %v2689, 0.0
        %v2754 = vmax.f32 %v2690, 0.0
        %v2755 = vmax.f32 %v2691, 0.0
        %v2756 = vmax.f32 %v2692, 0.0
        %v2757 = vmax.f32 %v2693, 0.0
        %v2758 = vmax.f32 %v2694, 0.0
        %v2759 = vmax.f32 %v2695, 0.0
        %v2760 = vmax.f32 %v2696, 0.0
        %v2761 = vmax.f32 %v2697, 0.0
        %v2762 = vmax.f32 %v2698, 0.0
        %v2763 = vmax.f32 %v2699, 0.0
        %v2764 = vmax.f32 %v2700, 0.0
        %v2765 = vmax.f32 %v2701, 0.0
        %v2766 = vmax.f32 %v2702, 0.0
        %v2767 = vmax.f32 %v2703, 0.0
        %v2768 = vmax.f32 %v2704, 0.0
        %v2769 = vmax.f32 %v2705, 0.0
        %v2770 = vmax.f32 %v2706, 0.0
        %v2771 = vmax.f32 %v2707, 0.0
        %v2772 = vmax.f32 %v2708, 0.0
        %v2773 = vmax.f32 %v2709, 0.0
        %v2774 = vmax.f32 %v2710, 0.0
        %v2775 = vmax.f32 %v2711, 0.0
        %v2776 = vmax.f32 %v2712, 0.0
        %v2777 = vmax.f32 %v2713, 0.0
        %v2778 = vmax.f32 %v2714, 0.0
        %v2779 = vmax.f32 %v2715, 0.0
        %v2780 = vmax.f32 %v2716, 0.0
        %v2781 = vmax.f32 %v2717, 0.0
        %v2782 = vmax.f32 %v2718, 0.0
        %v2783 = vmax.f32 %v2719, 0.0
        %v2784 = vmax.f32 %v2720, 0.0
        %v2785 = vmax.f32 %v2721, 0.0
        %v2786 = vmax.f32 %v2722, 0.0
        %v2787 = vmax.f32 %v2723, 0.0
        %v2788 = vmax.f32 %v2724, 0.0
        %v2789 = vmax.f32 %v2725, 0.0
        %v2790 = vmax.f32 %v2726, 0.0
        %v2791 = vmax.f32 %v2727, 0.0
        %v2792 = vmax.f32 %v2728, 0.0
        %v2793 = vmax.f32 %v2729, 0.0
        %2794 = vst [vmem:[%s541] sm:$0xff] %v2730
        %2795 = vst.msk [vmem:[%s541 + $0x8] sm:$0xff] %vm627, %v2731
        %2796 = vst [vmem:[%s541 + $0x10] sm:$0xff] %v2732
        %2797 = vst.msk [vmem:[%s541 + $0x18] sm:$0xff] %vm627, %v2733
        %2798 = vst [vmem:[%s541 + $0x20] sm:$0xff] %v2734
        %2799 = vst.msk [vmem:[%s541 + $0x28] sm:$0xff] %vm627, %v2735
        %2800 = vst [vmem:[%s541 + $0x30] sm:$0xff] %v2736
        %2801 = vst.msk [vmem:[%s541 + $0x38] sm:$0xff] %vm627, %v2737
        %2802 = vst [vmem:[%s541 + $0x40] sm:$0xff] %v2738
        %2803 = vst.msk [vmem:[%s541 + $0x48] sm:$0xff] %vm627, %v2739
        %2804 = vst [vmem:[%s541 + $0x50] sm:$0xff] %v2740
        %2805 = vst.msk [vmem:[%s541 + $0x58] sm:$0xff] %vm627, %v2741
        %2806 = vst [vmem:[%s541 + $0x60] sm:$0xff] %v2742
        %2807 = vst.msk [vmem:[%s541 + $0x68] sm:$0xff] %vm627, %v2743
        %2808 = vst [vmem:[%s541 + $0x70] sm:$0xff] %v2744
        %2809 = vst.msk [vmem:[%s541 + $0x78] sm:$0xff] %vm627, %v2745
        %2810 = vst [vmem:[%s541 + $0x80] sm:$0xff] %v2746
        %2811 = vst.msk [vmem:[%s541 + $0x88] sm:$0xff] %vm627, %v2747
        %2812 = vst [vmem:[%s541 + $0x90] sm:$0xff] %v2748
        %2813 = vst.msk [vmem:[%s541 + $0x98] sm:$0xff] %vm627, %v2749
        %2814 = vst [vmem:[%s541 + $0xa0] sm:$0xff] %v2750
        %2815 = vst.msk [vmem:[%s541 + $0xa8] sm:$0xff] %vm627, %v2751
        %2816 = vst [vmem:[%s541 + $0xb0] sm:$0xff] %v2752
        %2817 = vst.msk [vmem:[%s541 + $0xb8] sm:$0xff] %vm627, %v2753
        %2818 = vst [vmem:[%s541 + $0xc0] sm:$0xff] %v2754
        %2819 = vst.msk [vmem:[%s541 + $0xc8] sm:$0xff] %vm627, %v2755
        %2820 = vst [vmem:[%s541 + $0xd0] sm:$0xff] %v2756
        %2821 = vst.msk [vmem:[%s541 + $0xd8] sm:$0xff] %vm627, %v2757
        %2822 = vst [vmem:[%s541 + $0xe0] sm:$0xff] %v2758
        %2823 = vst.msk [vmem:[%s541 + $0xe8] sm:$0xff] %vm627, %v2759
        %2824 = vst [vmem:[%s541 + $0xf0] sm:$0xff] %v2760
        %2825 = vst.msk [vmem:[%s541 + $0xf8] sm:$0xff] %vm627, %v2761
        %2826 = vst [vmem:[%s541 + $0x100] sm:$0xff] %v2762
        %2827 = vst.msk [vmem:[%s541 + $0x108] sm:$0xff] %vm627, %v2763
        %2828 = vst [vmem:[%s541 + $0x110] sm:$0xff] %v2764
        %2829 = vst.msk [vmem:[%s541 + $0x118] sm:$0xff] %vm627, %v2765
        %2830 = vst [vmem:[%s541 + $0x120] sm:$0xff] %v2766
        %2831 = vst.msk [vmem:[%s541 + $0x128] sm:$0xff] %vm627, %v2767
        %2832 = vst [vmem:[%s541 + $0x130] sm:$0xff] %v2768
        %2833 = vst.msk [vmem:[%s541 + $0x138] sm:$0xff] %vm627, %v2769
        %2834 = vst [vmem:[%s541 + $0x140] sm:$0xff] %v2770
        %2835 = vst.msk [vmem:[%s541 + $0x148] sm:$0xff] %vm627, %v2771
        %2836 = vst [vmem:[%s541 + $0x150] sm:$0xff] %v2772
        %2837 = vst.msk [vmem:[%s541 + $0x158] sm:$0xff] %vm627, %v2773
        %2838 = vst [vmem:[%s541 + $0x160] sm:$0xff] %v2774
        %2839 = vst.msk [vmem:[%s541 + $0x168] sm:$0xff] %vm627, %v2775
        %2840 = vst [vmem:[%s541 + $0x170] sm:$0xff] %v2776
        %2841 = vst.msk [vmem:[%s541 + $0x178] sm:$0xff] %vm627, %v2777
        %2842 = vst [vmem:[%s541 + $0x180] sm:$0xff] %v2778
        %2843 = vst.msk [vmem:[%s541 + $0x188] sm:$0xff] %vm627, %v2779
        %2844 = vst [vmem:[%s541 + $0x190] sm:$0xff] %v2780
        %2845 = vst.msk [vmem:[%s541 + $0x198] sm:$0xff] %vm627, %v2781
        %2846 = vst [vmem:[%s541 + $0x1a0] sm:$0xff] %v2782
        %2847 = vst.msk [vmem:[%s541 + $0x1a8] sm:$0xff] %vm627, %v2783
        %2848 = vst [vmem:[%s541 + $0x1b0] sm:$0xff] %v2784
        %2849 = vst.msk [vmem:[%s541 + $0x1b8] sm:$0xff] %vm627, %v2785
        %2850 = vst [vmem:[%s541 + $0x1c0] sm:$0xff] %v2786
        %2851 = vst.msk [vmem:[%s541 + $0x1c8] sm:$0xff] %vm627, %v2787
        %2852 = vst [vmem:[%s541 + $0x1d0] sm:$0xff] %v2788
        %2853 = vst.msk [vmem:[%s541 + $0x1d8] sm:$0xff] %vm627, %v2789
        %2854 = vst [vmem:[%s541 + $0x1e0] sm:$0xff] %v2790
        %2855 = vst.msk [vmem:[%s541 + $0x1e8] sm:$0xff] %vm627, %v2791
        %2856 = vst [vmem:[%s541 + $0x1f0] sm:$0xff] %v2792
        %2857 = vst.msk [vmem:[%s541 + $0x1f8] sm:$0xff] %vm627, %v2793
        %v2858 = vld [vmem:[%s724] sm:$0xff]
        %v2859 = vld [vmem:[%s724 + $0x8] sm:$0xff]
        %v2860 = vld [vmem:[%s724 + $0x10] sm:$0xff]
        %v2861 = vld [vmem:[%s724 + $0x18] sm:$0xff]
        %v2862 = vld [vmem:[%s724 + $0x20] sm:$0xff]
        %v2863 = vld [vmem:[%s724 + $0x28] sm:$0xff]
        %v2864 = vld [vmem:[%s724 + $0x30] sm:$0xff]
        %v2865 = vld [vmem:[%s724 + $0x38] sm:$0xff]
        %v2866 = vld [vmem:[%s724 + $0x40] sm:$0xff]
        %v2867 = vld [vmem:[%s724 + $0x48] sm:$0xff]
        %v2868 = vld [vmem:[%s724 + $0x50] sm:$0xff]
        %v2869 = vld [vmem:[%s724 + $0x58] sm:$0xff]
        %v2870 = vld [vmem:[%s724 + $0x60] sm:$0xff]
        %v2871 = vld [vmem:[%s724 + $0x68] sm:$0xff]
        %v2872 = vld [vmem:[%s724 + $0x70] sm:$0xff]
        %v2873 = vld [vmem:[%s724 + $0x78] sm:$0xff]
        %v2874 = vld [vmem:[%s724 + $0x80] sm:$0xff]
        %v2875 = vld [vmem:[%s724 + $0x88] sm:$0xff]
        %v2876 = vld [vmem:[%s724 + $0x90] sm:$0xff]
        %v2877 = vld [vmem:[%s724 + $0x98] sm:$0xff]
        %v2878 = vld [vmem:[%s724 + $0xa0] sm:$0xff]
        %v2879 = vld [vmem:[%s724 + $0xa8] sm:$0xff]
        %v2880 = vld [vmem:[%s724 + $0xb0] sm:$0xff]
        %v2881 = vld [vmem:[%s724 + $0xb8] sm:$0xff]
        %v2882 = vld [vmem:[%s724 + $0xc0] sm:$0xff]
        %v2883 = vld [vmem:[%s724 + $0xc8] sm:$0xff]
        %v2884 = vld [vmem:[%s724 + $0xd0] sm:$0xff]
        %v2885 = vld [vmem:[%s724 + $0xd8] sm:$0xff]
        %v2886 = vld [vmem:[%s724 + $0xe0] sm:$0xff]
        %v2887 = vld [vmem:[%s724 + $0xe8] sm:$0xff]
        %v2888 = vld [vmem:[%s724 + $0xf0] sm:$0xff]
        %v2889 = vld [vmem:[%s724 + $0xf8] sm:$0xff]
        %v2890 = vpack.c.bf16 %v2860, %v2858
        %v2891 = vpack.c.bf16 %v2861, %v2859
        %v2892 = vpack.c.bf16 %v2864, %v2862
        %v2893 = vpack.c.bf16 %v2865, %v2863
        %v2894 = vpack.c.bf16 %v2868, %v2866
        %v2895 = vpack.c.bf16 %v2869, %v2867
        %v2896 = vpack.c.bf16 %v2872, %v2870
        %v2897 = vpack.c.bf16 %v2873, %v2871
        %v2898 = vpack.c.bf16 %v2876, %v2874
        %v2899 = vpack.c.bf16 %v2877, %v2875
        %v2900 = vpack.c.bf16 %v2880, %v2878
        %v2901 = vpack.c.bf16 %v2881, %v2879
        %v2902 = vpack.c.bf16 %v2884, %v2882
        %v2903 = vpack.c.bf16 %v2885, %v2883
        %v2904 = vpack.c.bf16 %v2888, %v2886
        %v2905 = vpack.c.bf16 %v2889, %v2887
        %2906 = vmatprep.subr.bf16.mxu0 %v2905
        %2907 = vmatpush1.bf16.msra.mxu0 %v2904
        %2908 = vmatprep.subr.bf16.mxu0 %v2903
        %2909 = vmatpush1.bf16.msra.mxu0 %v2902
        %2910 = vmatprep.subr.bf16.mxu0 %v2901
        %2911 = vmatpush1.bf16.msra.mxu0 %v2900
        %2912 = vmatprep.subr.bf16.mxu0 %v2899
        %2913 = vmatpush1.bf16.msra.mxu0 %v2898
        %2914 = vmatprep.subr.bf16.mxu0 %v2897
        %2915 = vmatpush1.bf16.msra.mxu0 %v2896
        %2916 = vmatprep.subr.bf16.mxu0 %v2895
        %2917 = vmatpush1.bf16.msra.mxu0 %v2894
        %2918 = vmatprep.subr.bf16.mxu0 %v2893
        %2919 = vmatpush1.bf16.msra.mxu0 %v2892
        %2920 = vmatprep.subr.bf16.mxu0 %v2891
        %2921 = vmatpush1.bf16.msra.mxu0 %v2890
        %2922 = vmatprep.subr.bf16.mxu0 0
        %2923 = vmatpush2.bf16.msra.mxu0 0
        %2924 = vmatprep.subr.bf16.mxu0 0
        %2925 = vmatpush2.bf16.msra.mxu0 0
        %2926 = vmatprep.subr.bf16.mxu0 0
        %2927 = vmatpush2.bf16.msra.mxu0 0
        %2928 = vmatprep.subr.bf16.mxu0 0
        %2929 = vmatpush2.bf16.msra.mxu0 0
        %2930 = vmatprep.subr.bf16.mxu0 0
        %2931 = vmatpush2.bf16.msra.mxu0 0
        %2932 = vmatprep.subr.bf16.mxu0 0
        %2933 = vmatpush2.bf16.msra.mxu0 0
        %2934 = vmatprep.subr.bf16.mxu0 0
        %2935 = vmatpush2.bf16.msra.mxu0 0
        %2936 = vmatprep.subr.bf16.mxu0 0
        %2937 = vmatpush2.bf16.msra.mxu0 0
        %2938 = vmatprep.mubr.bf16.mxu0 0
        %2939 = vmatmul.mubr.bf16.gmra.mxu0 %v2233
        %v2940 = vpop.f32.mrf.mxu0
        %v2941 = vadd.f32 %v2252, %v2940
        %v2942 = vpop.f32.mrf.mxu0
        %v2943 = vadd.f32 %v2252, %v2942
        %v2944 = vpop.f32.mrf.mxu0
        %v2945 = vadd.f32 %v2257, %v2944
        %v2946 = vpop.f32.mrf.mxu0
        %v2947 = vadd.f32 %v2257, %v2946
        %2948 = vmatprep.mubr.bf16.mxu0 0
        %2949 = vmatmul.mubr.bf16.gmra.mxu0 %v2234
        %v2950 = vpop.f32.mrf.mxu0
        %v2951 = vadd.f32 %v2262, %v2950
        %v2952 = vpop.f32.mrf.mxu0
        %v2953 = vadd.f32 %v2262, %v2952
        %v2954 = vpop.f32.mrf.mxu0
        %v2955 = vadd.f32 %v2267, %v2954
        %v2956 = vpop.f32.mrf.mxu0
        %v2957 = vadd.f32 %v2267, %v2956
        %2958 = vmatprep.mubr.bf16.mxu0 0
        %2959 = vmatmul.mubr.bf16.gmra.mxu0 %v2235
        %v2960 = vpop.f32.mrf.mxu0
        %v2961 = vadd.f32 %v2272, %v2960
        %v2962 = vpop.f32.mrf.mxu0
        %v2963 = vadd.f32 %v2272, %v2962
        %v2964 = vpop.f32.mrf.mxu0
        %v2965 = vadd.f32 %v2277, %v2964
        %v2966 = vpop.f32.mrf.mxu0
        %v2967 = vadd.f32 %v2277, %v2966
        %2968 = vmatprep.mubr.bf16.mxu0 0
        %2969 = vmatmul.mubr.bf16.gmra.mxu0 %v2236
        %v2970 = vpop.f32.mrf.mxu0
        %v2971 = vadd.f32 %v2282, %v2970
        %v2972 = vpop.f32.mrf.mxu0
        %v2973 = vadd.f32 %v2282, %v2972
        %v2974 = vpop.f32.mrf.mxu0
        %v2975 = vadd.f32 %v2287, %v2974
        %v2976 = vpop.f32.mrf.mxu0
        %v2977 = vadd.f32 %v2287, %v2976
        %2978 = vmatprep.mubr.bf16.mxu0 0
        %2979 = vmatmul.mubr.bf16.gmra.mxu0 %v2237
        %v2980 = vpop.f32.mrf.mxu0
        %v2981 = vadd.f32 %v2292, %v2980
        %v2982 = vpop.f32.mrf.mxu0
        %v2983 = vadd.f32 %v2292, %v2982
        %v2984 = vpop.f32.mrf.mxu0
        %v2985 = vadd.f32 %v2297, %v2984
        %v2986 = vpop.f32.mrf.mxu0
        %v2987 = vadd.f32 %v2297, %v2986
        %2988 = vmatprep.mubr.bf16.mxu0 0
        %2989 = vmatmul.mubr.bf16.gmra.mxu0 %v2238
        %v2990 = vpop.f32.mrf.mxu0
        %v2991 = vadd.f32 %v2302, %v2990
        %v2992 = vpop.f32.mrf.mxu0
        %v2993 = vadd.f32 %v2302, %v2992
        %v2994 = vpop.f32.mrf.mxu0
        %v2995 = vadd.f32 %v2307, %v2994
        %v2996 = vpop.f32.mrf.mxu0
        %v2997 = vadd.f32 %v2307, %v2996
        %2998 = vmatprep.mubr.bf16.mxu0 0
        %2999 = vmatmul.mubr.bf16.gmra.mxu0 %v2239
        %v3000 = vpop.f32.mrf.mxu0
        %v3001 = vadd.f32 %v2312, %v3000
        %v3002 = vpop.f32.mrf.mxu0
        %v3003 = vadd.f32 %v2312, %v3002
        %v3004 = vpop.f32.mrf.mxu0
        %v3005 = vadd.f32 %v2317, %v3004
        %v3006 = vpop.f32.mrf.mxu0
        %v3007 = vadd.f32 %v2317, %v3006
        %3008 = vmatprep.mubr.bf16.mxu0 0
        %3009 = vmatmul.mubr.bf16.gmra.mxu0 %v2240
        %v3010 = vpop.f32.mrf.mxu0
        %v3011 = vadd.f32 %v2322, %v3010
        %v3012 = vpop.f32.mrf.mxu0
        %v3013 = vadd.f32 %v2322, %v3012
        %v3014 = vpop.f32.mrf.mxu0
        %v3015 = vadd.f32 %v2327, %v3014
        %v3016 = vpop.f32.mrf.mxu0
        %v3017 = vadd.f32 %v2327, %v3016
        %3018 = vmatprep.mubr.bf16.mxu0 0
        %3019 = vmatmul.mubr.bf16.gmra.mxu0 %v2241
        %v3020 = vpop.f32.mrf.mxu0
        %v3021 = vadd.f32 %v2332, %v3020
        %v3022 = vpop.f32.mrf.mxu0
        %v3023 = vadd.f32 %v2332, %v3022
        %v3024 = vpop.f32.mrf.mxu0
        %v3025 = vadd.f32 %v2337, %v3024
        %v3026 = vpop.f32.mrf.mxu0
        %v3027 = vadd.f32 %v2337, %v3026
        %3028 = vmatprep.mubr.bf16.mxu0 0
        %3029 = vmatmul.mubr.bf16.gmra.mxu0 %v2242
        %v3030 = vpop.f32.mrf.mxu0
        %v3031 = vadd.f32 %v2342, %v3030
        %v3032 = vpop.f32.mrf.mxu0
        %v3033 = vadd.f32 %v2342, %v3032
        %v3034 = vpop.f32.mrf.mxu0
        %v3035 = vadd.f32 %v2347, %v3034
        %v3036 = vpop.f32.mrf.mxu0
        %v3037 = vadd.f32 %v2347, %v3036
        %3038 = vmatprep.mubr.bf16.mxu0 0
        %3039 = vmatmul.mubr.bf16.gmra.mxu0 %v2243
        %v3040 = vpop.f32.mrf.mxu0
        %v3041 = vadd.f32 %v2352, %v3040
        %v3042 = vpop.f32.mrf.mxu0
        %v3043 = vadd.f32 %v2352, %v3042
        %v3044 = vpop.f32.mrf.mxu0
        %v3045 = vadd.f32 %v2357, %v3044
        %v3046 = vpop.f32.mrf.mxu0
        %v3047 = vadd.f32 %v2357, %v3046
        %3048 = vmatprep.mubr.bf16.mxu0 0
        %3049 = vmatmul.mubr.bf16.gmra.mxu0 %v2244
        %v3050 = vpop.f32.mrf.mxu0
        %v3051 = vadd.f32 %v2362, %v3050
        %v3052 = vpop.f32.mrf.mxu0
        %v3053 = vadd.f32 %v2362, %v3052
        %v3054 = vpop.f32.mrf.mxu0
        %v3055 = vadd.f32 %v2367, %v3054
        %v3056 = vpop.f32.mrf.mxu0
        %v3057 = vadd.f32 %v2367, %v3056
        %3058 = vmatprep.mubr.bf16.mxu0 0
        %3059 = vmatmul.mubr.bf16.gmra.mxu0 %v2245
        %v3060 = vpop.f32.mrf.mxu0
        %v3061 = vadd.f32 %v2372, %v3060
        %v3062 = vpop.f32.mrf.mxu0
        %v3063 = vadd.f32 %v2372, %v3062
        %v3064 = vpop.f32.mrf.mxu0
        %v3065 = vadd.f32 %v2377, %v3064
        %v3066 = vpop.f32.mrf.mxu0
        %v3067 = vadd.f32 %v2377, %v3066
        %3068 = vmatprep.mubr.bf16.mxu0 0
        %3069 = vmatmul.mubr.bf16.gmra.mxu0 %v2246
        %v3070 = vpop.f32.mrf.mxu0
        %v3071 = vadd.f32 %v2382, %v3070
        %v3072 = vpop.f32.mrf.mxu0
        %v3073 = vadd.f32 %v2382, %v3072
        %v3074 = vpop.f32.mrf.mxu0
        %v3075 = vadd.f32 %v2387, %v3074
        %v3076 = vpop.f32.mrf.mxu0
        %v3077 = vadd.f32 %v2387, %v3076
        %3078 = vmatprep.mubr.bf16.mxu0 0
        %3079 = vmatmul.mubr.bf16.gmra.mxu0 %v2247
        %v3080 = vpop.f32.mrf.mxu0
        %v3081 = vadd.f32 %v2392, %v3080
        %v3082 = vpop.f32.mrf.mxu0
        %v3083 = vadd.f32 %v2392, %v3082
        %v3084 = vpop.f32.mrf.mxu0
        %v3085 = vadd.f32 %v2397, %v3084
        %v3086 = vpop.f32.mrf.mxu0
        %v3087 = vadd.f32 %v2397, %v3086
        %3088 = vmatprep.mubr.bf16.mxu0 0
        %3089 = vmatmul.mubr.bf16.gmra.mxu0 %v2248
        %v3090 = vpop.f32.mrf.mxu0
        %v3091 = vadd.f32 %v2402, %v3090
        %v3092 = vpop.f32.mrf.mxu0
        %v3093 = vadd.f32 %v2402, %v3092
        %v3094 = vpop.f32.mrf.mxu0
        %v3095 = vadd.f32 %v2407, %v3094
        %v3096 = vpop.f32.mrf.mxu0
        %v3097 = vadd.f32 %v2407, %v3096
        %3098 = vdwg.mxu0
        %s3099 = scalar_lea.vmem %s503, 512 [#allocation2]
        %v3100 = vld [vmem:[%s3099] sm:$0xff]
        %v3101 = vld [vmem:[%s3099 + $0x8] sm:$0xff]
        %v3102 = vld [vmem:[%s3099 + $0x10] sm:$0xff]
        %v3103 = vld [vmem:[%s3099 + $0x18] sm:$0xff]
        %v3104 = vld [vmem:[%s3099 + $0x20] sm:$0xff]
        %v3105 = vld [vmem:[%s3099 + $0x28] sm:$0xff]
        %v3106 = vld [vmem:[%s3099 + $0x30] sm:$0xff]
        %v3107 = vld [vmem:[%s3099 + $0x38] sm:$0xff]
        %v3108 = vld [vmem:[%s3099 + $0x40] sm:$0xff]
        %v3109 = vld [vmem:[%s3099 + $0x48] sm:$0xff]
        %v3110 = vld [vmem:[%s3099 + $0x50] sm:$0xff]
        %v3111 = vld [vmem:[%s3099 + $0x58] sm:$0xff]
        %v3112 = vld [vmem:[%s3099 + $0x60] sm:$0xff]
        %v3113 = vld [vmem:[%s3099 + $0x68] sm:$0xff]
        %v3114 = vld [vmem:[%s3099 + $0x70] sm:$0xff]
        %v3115 = vld [vmem:[%s3099 + $0x78] sm:$0xff]
        %v3116 = vld [vmem:[%s3099 + $0x80] sm:$0xff]
        %v3117 = vld [vmem:[%s3099 + $0x88] sm:$0xff]
        %v3118 = vld [vmem:[%s3099 + $0x90] sm:$0xff]
        %v3119 = vld [vmem:[%s3099 + $0x98] sm:$0xff]
        %v3120 = vld [vmem:[%s3099 + $0xa0] sm:$0xff]
        %v3121 = vld [vmem:[%s3099 + $0xa8] sm:$0xff]
        %v3122 = vld [vmem:[%s3099 + $0xb0] sm:$0xff]
        %v3123 = vld [vmem:[%s3099 + $0xb8] sm:$0xff]
        %v3124 = vld [vmem:[%s3099 + $0xc0] sm:$0xff]
        %v3125 = vld [vmem:[%s3099 + $0xc8] sm:$0xff]
        %v3126 = vld [vmem:[%s3099 + $0xd0] sm:$0xff]
        %v3127 = vld [vmem:[%s3099 + $0xd8] sm:$0xff]
        %v3128 = vld [vmem:[%s3099 + $0xe0] sm:$0xff]
        %v3129 = vld [vmem:[%s3099 + $0xe8] sm:$0xff]
        %v3130 = vld [vmem:[%s3099 + $0xf0] sm:$0xff]
        %v3131 = vld [vmem:[%s3099 + $0xf8] sm:$0xff]
        %v3132 = vld [vmem:[%s3099 + $0x100] sm:$0xff]
        %v3133 = vld [vmem:[%s3099 + $0x108] sm:$0xff]
        %v3134 = vld [vmem:[%s3099 + $0x110] sm:$0xff]
        %v3135 = vld [vmem:[%s3099 + $0x118] sm:$0xff]
        %v3136 = vld [vmem:[%s3099 + $0x120] sm:$0xff]
        %v3137 = vld [vmem:[%s3099 + $0x128] sm:$0xff]
        %v3138 = vld [vmem:[%s3099 + $0x130] sm:$0xff]
        %v3139 = vld [vmem:[%s3099 + $0x138] sm:$0xff]
        %v3140 = vld [vmem:[%s3099 + $0x140] sm:$0xff]
        %v3141 = vld [vmem:[%s3099 + $0x148] sm:$0xff]
        %v3142 = vld [vmem:[%s3099 + $0x150] sm:$0xff]
        %v3143 = vld [vmem:[%s3099 + $0x158] sm:$0xff]
        %v3144 = vld [vmem:[%s3099 + $0x160] sm:$0xff]
        %v3145 = vld [vmem:[%s3099 + $0x168] sm:$0xff]
        %v3146 = vld [vmem:[%s3099 + $0x170] sm:$0xff]
        %v3147 = vld [vmem:[%s3099 + $0x178] sm:$0xff]
        %v3148 = vld [vmem:[%s3099 + $0x180] sm:$0xff]
        %v3149 = vld [vmem:[%s3099 + $0x188] sm:$0xff]
        %v3150 = vld [vmem:[%s3099 + $0x190] sm:$0xff]
        %v3151 = vld [vmem:[%s3099 + $0x198] sm:$0xff]
        %v3152 = vld [vmem:[%s3099 + $0x1a0] sm:$0xff]
        %v3153 = vld [vmem:[%s3099 + $0x1a8] sm:$0xff]
        %v3154 = vld [vmem:[%s3099 + $0x1b0] sm:$0xff]
        %v3155 = vld [vmem:[%s3099 + $0x1b8] sm:$0xff]
        %v3156 = vld [vmem:[%s3099 + $0x1c0] sm:$0xff]
        %v3157 = vld [vmem:[%s3099 + $0x1c8] sm:$0xff]
        %v3158 = vld [vmem:[%s3099 + $0x1d0] sm:$0xff]
        %v3159 = vld [vmem:[%s3099 + $0x1d8] sm:$0xff]
        %v3160 = vld [vmem:[%s3099 + $0x1e0] sm:$0xff]
        %v3161 = vld [vmem:[%s3099 + $0x1e8] sm:$0xff]
        %v3162 = vld [vmem:[%s3099 + $0x1f0] sm:$0xff]
        %v3163 = vld [vmem:[%s3099 + $0x1f8] sm:$0xff]
        %v3164 = vadd.f32 %v2941, %v3100
        %v3165 = vadd.f32 %v2943, %v3101
        %v3166 = vadd.f32 %v2945, %v3102
        %v3167 = vadd.f32 %v2947, %v3103
        %v3168 = vadd.f32 %v2951, %v3104
        %v3169 = vadd.f32 %v2953, %v3105
        %v3170 = vadd.f32 %v2955, %v3106
        %v3171 = vadd.f32 %v2957, %v3107
        %v3172 = vadd.f32 %v2961, %v3108
        %v3173 = vadd.f32 %v2963, %v3109
        %v3174 = vadd.f32 %v2965, %v3110
        %v3175 = vadd.f32 %v2967, %v3111
        %v3176 = vadd.f32 %v2971, %v3112
        %v3177 = vadd.f32 %v2973, %v3113
        %v3178 = vadd.f32 %v2975, %v3114
        %v3179 = vadd.f32 %v2977, %v3115
        %v3180 = vadd.f32 %v2981, %v3116
        %v3181 = vadd.f32 %v2983, %v3117
        %v3182 = vadd.f32 %v2985, %v3118
        %v3183 = vadd.f32 %v2987, %v3119
        %v3184 = vadd.f32 %v2991, %v3120
        %v3185 = vadd.f32 %v2993, %v3121
        %v3186 = vadd.f32 %v2995, %v3122
        %v3187 = vadd.f32 %v2997, %v3123
        %v3188 = vadd.f32 %v3001, %v3124
        %v3189 = vadd.f32 %v3003, %v3125
        %v3190 = vadd.f32 %v3005, %v3126
        %v3191 = vadd.f32 %v3007, %v3127
        %v3192 = vadd.f32 %v3011, %v3128
        %v3193 = vadd.f32 %v3013, %v3129
        %v3194 = vadd.f32 %v3015, %v3130
        %v3195 = vadd.f32 %v3017, %v3131
        %v3196 = vadd.f32 %v3021, %v3132
        %v3197 = vadd.f32 %v3023, %v3133
        %v3198 = vadd.f32 %v3025, %v3134
        %v3199 = vadd.f32 %v3027, %v3135
        %v3200 = vadd.f32 %v3031, %v3136
        %v3201 = vadd.f32 %v3033, %v3137
        %v3202 = vadd.f32 %v3035, %v3138
        %v3203 = vadd.f32 %v3037, %v3139
        %v3204 = vadd.f32 %v3041, %v3140
        %v3205 = vadd.f32 %v3043, %v3141
        %v3206 = vadd.f32 %v3045, %v3142
        %v3207 = vadd.f32 %v3047, %v3143
        %v3208 = vadd.f32 %v3051, %v3144
        %v3209 = vadd.f32 %v3053, %v3145
        %v3210 = vadd.f32 %v3055, %v3146
        %v3211 = vadd.f32 %v3057, %v3147
        %v3212 = vadd.f32 %v3061, %v3148
        %v3213 = vadd.f32 %v3063, %v3149
        %v3214 = vadd.f32 %v3065, %v3150
        %v3215 = vadd.f32 %v3067, %v3151
        %v3216 = vadd.f32 %v3071, %v3152
        %v3217 = vadd.f32 %v3073, %v3153
        %v3218 = vadd.f32 %v3075, %v3154
        %v3219 = vadd.f32 %v3077, %v3155
        %v3220 = vadd.f32 %v3081, %v3156
        %v3221 = vadd.f32 %v3083, %v3157
        %v3222 = vadd.f32 %v3085, %v3158
        %v3223 = vadd.f32 %v3087, %v3159
        %v3224 = vadd.f32 %v3091, %v3160
        %v3225 = vadd.f32 %v3093, %v3161
        %v3226 = vadd.f32 %v3095, %v3162
        %v3227 = vadd.f32 %v3097, %v3163
        %v3228 = vmax.f32 %v3164, 0.0
        %v3229 = vmax.f32 %v3165, 0.0
        %v3230 = vmax.f32 %v3166, 0.0
        %v3231 = vmax.f32 %v3167, 0.0
        %v3232 = vmax.f32 %v3168, 0.0
        %v3233 = vmax.f32 %v3169, 0.0
        %v3234 = vmax.f32 %v3170, 0.0
        %v3235 = vmax.f32 %v3171, 0.0
        %v3236 = vmax.f32 %v3172, 0.0
        %v3237 = vmax.f32 %v3173, 0.0
        %v3238 = vmax.f32 %v3174, 0.0
        %v3239 = vmax.f32 %v3175, 0.0
        %v3240 = vmax.f32 %v3176, 0.0
        %v3241 = vmax.f32 %v3177, 0.0
        %v3242 = vmax.f32 %v3178, 0.0
        %v3243 = vmax.f32 %v3179, 0.0
        %v3244 = vmax.f32 %v3180, 0.0
        %v3245 = vmax.f32 %v3181, 0.0
        %v3246 = vmax.f32 %v3182, 0.0
        %v3247 = vmax.f32 %v3183, 0.0
        %v3248 = vmax.f32 %v3184, 0.0
        %v3249 = vmax.f32 %v3185, 0.0
        %v3250 = vmax.f32 %v3186, 0.0
        %v3251 = vmax.f32 %v3187, 0.0
        %v3252 = vmax.f32 %v3188, 0.0
        %v3253 = vmax.f32 %v3189, 0.0
        %v3254 = vmax.f32 %v3190, 0.0
        %v3255 = vmax.f32 %v3191, 0.0
        %v3256 = vmax.f32 %v3192, 0.0
        %v3257 = vmax.f32 %v3193, 0.0
        %v3258 = vmax.f32 %v3194, 0.0
        %v3259 = vmax.f32 %v3195, 0.0
        %v3260 = vmax.f32 %v3196, 0.0
        %v3261 = vmax.f32 %v3197, 0.0
        %v3262 = vmax.f32 %v3198, 0.0
        %v3263 = vmax.f32 %v3199, 0.0
        %v3264 = vmax.f32 %v3200, 0.0
        %v3265 = vmax.f32 %v3201, 0.0
        %v3266 = vmax.f32 %v3202, 0.0
        %v3267 = vmax.f32 %v3203, 0.0
        %v3268 = vmax.f32 %v3204, 0.0
        %v3269 = vmax.f32 %v3205, 0.0
        %v3270 = vmax.f32 %v3206, 0.0
        %v3271 = vmax.f32 %v3207, 0.0
        %v3272 = vmax.f32 %v3208, 0.0
        %v3273 = vmax.f32 %v3209, 0.0
        %v3274 = vmax.f32 %v3210, 0.0
        %v3275 = vmax.f32 %v3211, 0.0
        %v3276 = vmax.f32 %v3212, 0.0
        %v3277 = vmax.f32 %v3213, 0.0
        %v3278 = vmax.f32 %v3214, 0.0
        %v3279 = vmax.f32 %v3215, 0.0
        %v3280 = vmax.f32 %v3216, 0.0
        %v3281 = vmax.f32 %v3217, 0.0
        %v3282 = vmax.f32 %v3218, 0.0
        %v3283 = vmax.f32 %v3219, 0.0
        %v3284 = vmax.f32 %v3220, 0.0
        %v3285 = vmax.f32 %v3221, 0.0
        %v3286 = vmax.f32 %v3222, 0.0
        %v3287 = vmax.f32 %v3223, 0.0
        %v3288 = vmax.f32 %v3224, 0.0
        %v3289 = vmax.f32 %v3225, 0.0
        %v3290 = vmax.f32 %v3226, 0.0
        %v3291 = vmax.f32 %v3227, 0.0
        %s3292 = scalar_lea.vmem %s541, 512 [#allocation3]
        %3293 = vst [vmem:[%s3292] sm:$0xff] %v3228
        %3294 = vst.msk [vmem:[%s3292 + $0x8] sm:$0xff] %vm627, %v3229
        %3295 = vst [vmem:[%s3292 + $0x10] sm:$0xff] %v3230
        %3296 = vst.msk [vmem:[%s3292 + $0x18] sm:$0xff] %vm627, %v3231
        %3297 = vst [vmem:[%s3292 + $0x20] sm:$0xff] %v3232
        %3298 = vst.msk [vmem:[%s3292 + $0x28] sm:$0xff] %vm627, %v3233
        %3299 = vst [vmem:[%s3292 + $0x30] sm:$0xff] %v3234
        %3300 = vst.msk [vmem:[%s3292 + $0x38] sm:$0xff] %vm627, %v3235
        %3301 = vst [vmem:[%s3292 + $0x40] sm:$0xff] %v3236
        %3302 = vst.msk [vmem:[%s3292 + $0x48] sm:$0xff] %vm627, %v3237
        %3303 = vst [vmem:[%s3292 + $0x50] sm:$0xff] %v3238
        %3304 = vst.msk [vmem:[%s3292 + $0x58] sm:$0xff] %vm627, %v3239
        %3305 = vst [vmem:[%s3292 + $0x60] sm:$0xff] %v3240
        %3306 = vst.msk [vmem:[%s3292 + $0x68] sm:$0xff] %vm627, %v3241
        %3307 = vst [vmem:[%s3292 + $0x70] sm:$0xff] %v3242
        %3308 = vst.msk [vmem:[%s3292 + $0x78] sm:$0xff] %vm627, %v3243
        %3309 = vst [vmem:[%s3292 + $0x80] sm:$0xff] %v3244
        %3310 = vst.msk [vmem:[%s3292 + $0x88] sm:$0xff] %vm627, %v3245
        %3311 = vst [vmem:[%s3292 + $0x90] sm:$0xff] %v3246
        %3312 = vst.msk [vmem:[%s3292 + $0x98] sm:$0xff] %vm627, %v3247
        %3313 = vst [vmem:[%s3292 + $0xa0] sm:$0xff] %v3248
        %3314 = vst.msk [vmem:[%s3292 + $0xa8] sm:$0xff] %vm627, %v3249
        %3315 = vst [vmem:[%s3292 + $0xb0] sm:$0xff] %v3250
        %3316 = vst.msk [vmem:[%s3292 + $0xb8] sm:$0xff] %vm627, %v3251
        %3317 = vst [vmem:[%s3292 + $0xc0] sm:$0xff] %v3252
        %3318 = vst.msk [vmem:[%s3292 + $0xc8] sm:$0xff] %vm627, %v3253
        %3319 = vst [vmem:[%s3292 + $0xd0] sm:$0xff] %v3254
        %3320 = vst.msk [vmem:[%s3292 + $0xd8] sm:$0xff] %vm627, %v3255
        %3321 = vst [vmem:[%s3292 + $0xe0] sm:$0xff] %v3256
        %3322 = vst.msk [vmem:[%s3292 + $0xe8] sm:$0xff] %vm627, %v3257
        %3323 = vst [vmem:[%s3292 + $0xf0] sm:$0xff] %v3258
        %3324 = vst.msk [vmem:[%s3292 + $0xf8] sm:$0xff] %vm627, %v3259
        %3325 = vst [vmem:[%s3292 + $0x100] sm:$0xff] %v3260
        %3326 = vst.msk [vmem:[%s3292 + $0x108] sm:$0xff] %vm627, %v3261
        %3327 = vst [vmem:[%s3292 + $0x110] sm:$0xff] %v3262
        %3328 = vst.msk [vmem:[%s3292 + $0x118] sm:$0xff] %vm627, %v3263
        %3329 = vst [vmem:[%s3292 + $0x120] sm:$0xff] %v3264
        %3330 = vst.msk [vmem:[%s3292 + $0x128] sm:$0xff] %vm627, %v3265
        %3331 = vst [vmem:[%s3292 + $0x130] sm:$0xff] %v3266
        %3332 = vst.msk [vmem:[%s3292 + $0x138] sm:$0xff] %vm627, %v3267
        %3333 = vst [vmem:[%s3292 + $0x140] sm:$0xff] %v3268
        %3334 = vst.msk [vmem:[%s3292 + $0x148] sm:$0xff] %vm627, %v3269
        %3335 = vst [vmem:[%s3292 + $0x150] sm:$0xff] %v3270
        %3336 = vst.msk [vmem:[%s3292 + $0x158] sm:$0xff] %vm627, %v3271
        %3337 = vst [vmem:[%s3292 + $0x160] sm:$0xff] %v3272
        %3338 = vst.msk [vmem:[%s3292 + $0x168] sm:$0xff] %vm627, %v3273
        %3339 = vst [vmem:[%s3292 + $0x170] sm:$0xff] %v3274
        %3340 = vst.msk [vmem:[%s3292 + $0x178] sm:$0xff] %vm627, %v3275
        %3341 = vst [vmem:[%s3292 + $0x180] sm:$0xff] %v3276
        %3342 = vst.msk [vmem:[%s3292 + $0x188] sm:$0xff] %vm627, %v3277
        %3343 = vst [vmem:[%s3292 + $0x190] sm:$0xff] %v3278
        %3344 = vst.msk [vmem:[%s3292 + $0x198] sm:$0xff] %vm627, %v3279
        %3345 = vst [vmem:[%s3292 + $0x1a0] sm:$0xff] %v3280
        %3346 = vst.msk [vmem:[%s3292 + $0x1a8] sm:$0xff] %vm627, %v3281
        %3347 = vst [vmem:[%s3292 + $0x1b0] sm:$0xff] %v3282
        %3348 = vst.msk [vmem:[%s3292 + $0x1b8] sm:$0xff] %vm627, %v3283
        %3349 = vst [vmem:[%s3292 + $0x1c0] sm:$0xff] %v3284
        %3350 = vst.msk [vmem:[%s3292 + $0x1c8] sm:$0xff] %vm627, %v3285
        %3351 = vst [vmem:[%s3292 + $0x1d0] sm:$0xff] %v3286
        %3352 = vst.msk [vmem:[%s3292 + $0x1d8] sm:$0xff] %vm627, %v3287
        %3353 = vst [vmem:[%s3292 + $0x1e0] sm:$0xff] %v3288
        %3354 = vst.msk [vmem:[%s3292 + $0x1e8] sm:$0xff] %vm627, %v3289
        %3355 = vst [vmem:[%s3292 + $0x1f0] sm:$0xff] %v3290
        %3356 = vst.msk [vmem:[%s3292 + $0x1f8] sm:$0xff] %vm627, %v3291
        %s3357 = sand.u32 %s149, 1
        %s3358 = sand.u32 %s149, 1
        %s3359 = smul.addr %s3358, 1024
        %s3360 = scalar_lea.vmem [#allocation3], %s3359
        // Predicated region
        $region64: #{conv_bn_add_relu.1} parent=58 // pred_check
          %p3361 = pneg %p159
        $region65: #{conv_bn_add_relu.1} parent=58 // pred_check_branch
          %3363 = sbr.rel (%p3361) target = $region67
        $region66: #{conv_bn_add_relu.1} parent=58 // pred_region
          %s3364 = smul.u32 32, %s16
          %s3365 = smul.addr %s3364, 2
          %s3366 = smul.addr %s3365, 8
          %s3367 = scalar_lea.vmem %s5, %s3366
          // Predicated region
          $region68: #{conv_bn_add_relu.1} parent=66 // pred_check
            _
          $region69: #{conv_bn_add_relu.1} parent=66 // pred_check_branch
            %3369 = sbr.rel (0) target = $region71
          $region70: #{conv_bn_add_relu.1} parent=66 // pred_region
            // Predicated region
            $region72: #{conv_bn_add_relu.1} parent=70 // pred_check
              _
            $region73: #{conv_bn_add_relu.1} parent=70 // pred_check_branch
              %3371 = sbr.rel (0) target = $region75
            $region74: #{conv_bn_add_relu.1} parent=70 // pred_region
              loop: start=0, step=1, limit=1
              $region76: #{conv_bn_add_relu.1} parent=74 // loop_pre_header
                _
              $region77: #{conv_bn_add_relu.1} parent=74 // loop_header
                %s3373 = sphi 0, %s3377
                %p3374 = scmp.ge.s32.totalorder %s3373, 1
                %s3378 = sphi %s3360, %s3360
                %s3379 = sphi %s3367, %s3367
              $region78: #{conv_bn_add_relu.1} parent=74 // loop_header_branch
                %3376 = sbr.rel (%p3374) target = $region82
              $region79: #{conv_bn_add_relu.1} parent=74 // loop_body
                %v3380 = vld [vmem:[%s3378] sm:$0xff]
                %3381 = vst [vmem:[%s3379] sm:$0xff] %v3380
                %v3382 = vld [vmem:[%s3378 + $0x8] sm:$0xff]
                %3383 = vst [vmem:[%s3379 + $0x8] sm:$0xff] %v3382
                %v3384 = vld [vmem:[%s3378 + $0x10] sm:$0xff]
                %3385 = vst [vmem:[%s3379 + $0x10] sm:$0xff] %v3384
                %v3386 = vld [vmem:[%s3378 + $0x18] sm:$0xff]
                %3387 = vst [vmem:[%s3379 + $0x18] sm:$0xff] %v3386
                %v3388 = vld [vmem:[%s3378 + $0x20] sm:$0xff]
                %3389 = vst [vmem:[%s3379 + $0x20] sm:$0xff] %v3388
                %v3390 = vld [vmem:[%s3378 + $0x28] sm:$0xff]
                %3391 = vst [vmem:[%s3379 + $0x28] sm:$0xff] %v3390
                %v3392 = vld [vmem:[%s3378 + $0x30] sm:$0xff]
                %3393 = vst [vmem:[%s3379 + $0x30] sm:$0xff] %v3392
                %v3394 = vld [vmem:[%s3378 + $0x38] sm:$0xff]
                %3395 = vst [vmem:[%s3379 + $0x38] sm:$0xff] %v3394
                %v3396 = vld [vmem:[%s3378 + $0x40] sm:$0xff]
                %3397 = vst [vmem:[%s3379 + $0x40] sm:$0xff] %v3396
                %v3398 = vld [vmem:[%s3378 + $0x48] sm:$0xff]
                %3399 = vst [vmem:[%s3379 + $0x48] sm:$0xff] %v3398
                %v3400 = vld [vmem:[%s3378 + $0x50] sm:$0xff]
                %3401 = vst [vmem:[%s3379 + $0x50] sm:$0xff] %v3400
                %v3402 = vld [vmem:[%s3378 + $0x58] sm:$0xff]
                %3403 = vst [vmem:[%s3379 + $0x58] sm:$0xff] %v3402
                %v3404 = vld [vmem:[%s3378 + $0x60] sm:$0xff]
                %3405 = vst [vmem:[%s3379 + $0x60] sm:$0xff] %v3404
                %v3406 = vld [vmem:[%s3378 + $0x68] sm:$0xff]
                %3407 = vst [vmem:[%s3379 + $0x68] sm:$0xff] %v3406
                %v3408 = vld [vmem:[%s3378 + $0x70] sm:$0xff]
                %3409 = vst [vmem:[%s3379 + $0x70] sm:$0xff] %v3408
                %v3410 = vld [vmem:[%s3378 + $0x78] sm:$0xff]
                %3411 = vst [vmem:[%s3379 + $0x78] sm:$0xff] %v3410
                %v3412 = vld [vmem:[%s3378 + $0x80] sm:$0xff]
                %3413 = vst [vmem:[%s3379 + $0x80] sm:$0xff] %v3412
                %v3414 = vld [vmem:[%s3378 + $0x88] sm:$0xff]
                %3415 = vst [vmem:[%s3379 + $0x88] sm:$0xff] %v3414
                %v3416 = vld [vmem:[%s3378 + $0x90] sm:$0xff]
                %3417 = vst [vmem:[%s3379 + $0x90] sm:$0xff] %v3416
                %v3418 = vld [vmem:[%s3378 + $0x98] sm:$0xff]
                %3419 = vst [vmem:[%s3379 + $0x98] sm:$0xff] %v3418
                %v3420 = vld [vmem:[%s3378 + $0xa0] sm:$0xff]
                %3421 = vst [vmem:[%s3379 + $0xa0] sm:$0xff] %v3420
                %v3422 = vld [vmem:[%s3378 + $0xa8] sm:$0xff]
                %3423 = vst [vmem:[%s3379 + $0xa8] sm:$0xff] %v3422
                %v3424 = vld [vmem:[%s3378 + $0xb0] sm:$0xff]
                %3425 = vst [vmem:[%s3379 + $0xb0] sm:$0xff] %v3424
                %v3426 = vld [vmem:[%s3378 + $0xb8] sm:$0xff]
                %3427 = vst [vmem:[%s3379 + $0xb8] sm:$0xff] %v3426
                %v3428 = vld [vmem:[%s3378 + $0xc0] sm:$0xff]
                %3429 = vst [vmem:[%s3379 + $0xc0] sm:$0xff] %v3428
                %v3430 = vld [vmem:[%s3378 + $0xc8] sm:$0xff]
                %3431 = vst [vmem:[%s3379 + $0xc8] sm:$0xff] %v3430
                %v3432 = vld [vmem:[%s3378 + $0xd0] sm:$0xff]
                %3433 = vst [vmem:[%s3379 + $0xd0] sm:$0xff] %v3432
                %v3434 = vld [vmem:[%s3378 + $0xd8] sm:$0xff]
                %3435 = vst [vmem:[%s3379 + $0xd8] sm:$0xff] %v3434
                %v3436 = vld [vmem:[%s3378 + $0xe0] sm:$0xff]
                %3437 = vst [vmem:[%s3379 + $0xe0] sm:$0xff] %v3436
                %v3438 = vld [vmem:[%s3378 + $0xe8] sm:$0xff]
                %3439 = vst [vmem:[%s3379 + $0xe8] sm:$0xff] %v3438
                %v3440 = vld [vmem:[%s3378 + $0xf0] sm:$0xff]
                %3441 = vst [vmem:[%s3379 + $0xf0] sm:$0xff] %v3440
                %v3442 = vld [vmem:[%s3378 + $0xf8] sm:$0xff]
                %3443 = vst [vmem:[%s3379 + $0xf8] sm:$0xff] %v3442
                %v3444 = vld [vmem:[%s3378 + $0x100] sm:$0xff]
                %3445 = vst [vmem:[%s3379 + $0x100] sm:$0xff] %v3444
                %v3446 = vld [vmem:[%s3378 + $0x108] sm:$0xff]
                %3447 = vst [vmem:[%s3379 + $0x108] sm:$0xff] %v3446
                %v3448 = vld [vmem:[%s3378 + $0x110] sm:$0xff]
                %3449 = vst [vmem:[%s3379 + $0x110] sm:$0xff] %v3448
                %v3450 = vld [vmem:[%s3378 + $0x118] sm:$0xff]
                %3451 = vst [vmem:[%s3379 + $0x118] sm:$0xff] %v3450
                %v3452 = vld [vmem:[%s3378 + $0x120] sm:$0xff]
                %3453 = vst [vmem:[%s3379 + $0x120] sm:$0xff] %v3452
                %v3454 = vld [vmem:[%s3378 + $0x128] sm:$0xff]
                %3455 = vst [vmem:[%s3379 + $0x128] sm:$0xff] %v3454
                %v3456 = vld [vmem:[%s3378 + $0x130] sm:$0xff]
                %3457 = vst [vmem:[%s3379 + $0x130] sm:$0xff] %v3456
                %v3458 = vld [vmem:[%s3378 + $0x138] sm:$0xff]
                %3459 = vst [vmem:[%s3379 + $0x138] sm:$0xff] %v3458
                %v3460 = vld [vmem:[%s3378 + $0x140] sm:$0xff]
                %3461 = vst [vmem:[%s3379 + $0x140] sm:$0xff] %v3460
                %v3462 = vld [vmem:[%s3378 + $0x148] sm:$0xff]
                %3463 = vst [vmem:[%s3379 + $0x148] sm:$0xff] %v3462
                %v3464 = vld [vmem:[%s3378 + $0x150] sm:$0xff]
                %3465 = vst [vmem:[%s3379 + $0x150] sm:$0xff] %v3464
                %v3466 = vld [vmem:[%s3378 + $0x158] sm:$0xff]
                %3467 = vst [vmem:[%s3379 + $0x158] sm:$0xff] %v3466
                %v3468 = vld [vmem:[%s3378 + $0x160] sm:$0xff]
                %3469 = vst [vmem:[%s3379 + $0x160] sm:$0xff] %v3468
                %v3470 = vld [vmem:[%s3378 + $0x168] sm:$0xff]
                %3471 = vst [vmem:[%s3379 + $0x168] sm:$0xff] %v3470
                %v3472 = vld [vmem:[%s3378 + $0x170] sm:$0xff]
                %3473 = vst [vmem:[%s3379 + $0x170] sm:$0xff] %v3472
                %v3474 = vld [vmem:[%s3378 + $0x178] sm:$0xff]
                %3475 = vst [vmem:[%s3379 + $0x178] sm:$0xff] %v3474
                %v3476 = vld [vmem:[%s3378 + $0x180] sm:$0xff]
                %3477 = vst [vmem:[%s3379 + $0x180] sm:$0xff] %v3476
                %v3478 = vld [vmem:[%s3378 + $0x188] sm:$0xff]
                %3479 = vst [vmem:[%s3379 + $0x188] sm:$0xff] %v3478
                %v3480 = vld [vmem:[%s3378 + $0x190] sm:$0xff]
                %3481 = vst [vmem:[%s3379 + $0x190] sm:$0xff] %v3480
                %v3482 = vld [vmem:[%s3378 + $0x198] sm:$0xff]
                %3483 = vst [vmem:[%s3379 + $0x198] sm:$0xff] %v3482
                %v3484 = vld [vmem:[%s3378 + $0x1a0] sm:$0xff]
                %3485 = vst [vmem:[%s3379 + $0x1a0] sm:$0xff] %v3484
                %v3486 = vld [vmem:[%s3378 + $0x1a8] sm:$0xff]
                %3487 = vst [vmem:[%s3379 + $0x1a8] sm:$0xff] %v3486
                %v3488 = vld [vmem:[%s3378 + $0x1b0] sm:$0xff]
                %3489 = vst [vmem:[%s3379 + $0x1b0] sm:$0xff] %v3488
                %v3490 = vld [vmem:[%s3378 + $0x1b8] sm:$0xff]
                %3491 = vst [vmem:[%s3379 + $0x1b8] sm:$0xff] %v3490
                %v3492 = vld [vmem:[%s3378 + $0x1c0] sm:$0xff]
                %3493 = vst [vmem:[%s3379 + $0x1c0] sm:$0xff] %v3492
                %v3494 = vld [vmem:[%s3378 + $0x1c8] sm:$0xff]
                %3495 = vst [vmem:[%s3379 + $0x1c8] sm:$0xff] %v3494
                %v3496 = vld [vmem:[%s3378 + $0x1d0] sm:$0xff]
                %3497 = vst [vmem:[%s3379 + $0x1d0] sm:$0xff] %v3496
                %v3498 = vld [vmem:[%s3378 + $0x1d8] sm:$0xff]
                %3499 = vst [vmem:[%s3379 + $0x1d8] sm:$0xff] %v3498
                %v3500 = vld [vmem:[%s3378 + $0x1e0] sm:$0xff]
                %3501 = vst [vmem:[%s3379 + $0x1e0] sm:$0xff] %v3500
                %v3502 = vld [vmem:[%s3378 + $0x1e8] sm:$0xff]
                %3503 = vst [vmem:[%s3379 + $0x1e8] sm:$0xff] %v3502
                %v3504 = vld [vmem:[%s3378 + $0x1f0] sm:$0xff]
                %3505 = vst [vmem:[%s3379 + $0x1f0] sm:$0xff] %v3504
                %v3506 = vld [vmem:[%s3378 + $0x1f8] sm:$0xff]
                %3507 = vst [vmem:[%s3379 + $0x1f8] sm:$0xff] %v3506
                %v3508 = vld [vmem:[%s3378 + $0x200] sm:$0xff]
                %3509 = vst [vmem:[%s3379 + $0x400] sm:$0xff] %v3508
                %v3510 = vld [vmem:[%s3378 + $0x208] sm:$0xff]
                %3511 = vst [vmem:[%s3379 + $0x408] sm:$0xff] %v3510
                %v3512 = vld [vmem:[%s3378 + $0x210] sm:$0xff]
                %3513 = vst [vmem:[%s3379 + $0x410] sm:$0xff] %v3512
                %v3514 = vld [vmem:[%s3378 + $0x218] sm:$0xff]
                %3515 = vst [vmem:[%s3379 + $0x418] sm:$0xff] %v3514
                %v3516 = vld [vmem:[%s3378 + $0x220] sm:$0xff]
                %3517 = vst [vmem:[%s3379 + $0x420] sm:$0xff] %v3516
                %v3518 = vld [vmem:[%s3378 + $0x228] sm:$0xff]
                %3519 = vst [vmem:[%s3379 + $0x428] sm:$0xff] %v3518
                %v3520 = vld [vmem:[%s3378 + $0x230] sm:$0xff]
                %3521 = vst [vmem:[%s3379 + $0x430] sm:$0xff] %v3520
                %v3522 = vld [vmem:[%s3378 + $0x238] sm:$0xff]
                %3523 = vst [vmem:[%s3379 + $0x438] sm:$0xff] %v3522
                %v3524 = vld [vmem:[%s3378 + $0x240] sm:$0xff]
                %3525 = vst [vmem:[%s3379 + $0x440] sm:$0xff] %v3524
                %v3526 = vld [vmem:[%s3378 + $0x248] sm:$0xff]
                %3527 = vst [vmem:[%s3379 + $0x448] sm:$0xff] %v3526
                %v3528 = vld [vmem:[%s3378 + $0x250] sm:$0xff]
                %3529 = vst [vmem:[%s3379 + $0x450] sm:$0xff] %v3528
                %v3530 = vld [vmem:[%s3378 + $0x258] sm:$0xff]
                %3531 = vst [vmem:[%s3379 + $0x458] sm:$0xff] %v3530
                %v3532 = vld [vmem:[%s3378 + $0x260] sm:$0xff]
                %3533 = vst [vmem:[%s3379 + $0x460] sm:$0xff] %v3532
                %v3534 = vld [vmem:[%s3378 + $0x268] sm:$0xff]
                %3535 = vst [vmem:[%s3379 + $0x468] sm:$0xff] %v3534
                %v3536 = vld [vmem:[%s3378 + $0x270] sm:$0xff]
                %3537 = vst [vmem:[%s3379 + $0x470] sm:$0xff] %v3536
                %v3538 = vld [vmem:[%s3378 + $0x278] sm:$0xff]
                %3539 = vst [vmem:[%s3379 + $0x478] sm:$0xff] %v3538
                %v3540 = vld [vmem:[%s3378 + $0x280] sm:$0xff]
                %3541 = vst [vmem:[%s3379 + $0x480] sm:$0xff] %v3540
                %v3542 = vld [vmem:[%s3378 + $0x288] sm:$0xff]
                %3543 = vst [vmem:[%s3379 + $0x488] sm:$0xff] %v3542
                %v3544 = vld [vmem:[%s3378 + $0x290] sm:$0xff]
                %3545 = vst [vmem:[%s3379 + $0x490] sm:$0xff] %v3544
                %v3546 = vld [vmem:[%s3378 + $0x298] sm:$0xff]
                %3547 = vst [vmem:[%s3379 + $0x498] sm:$0xff] %v3546
                %v3548 = vld [vmem:[%s3378 + $0x2a0] sm:$0xff]
                %3549 = vst [vmem:[%s3379 + $0x4a0] sm:$0xff] %v3548
                %v3550 = vld [vmem:[%s3378 + $0x2a8] sm:$0xff]
                %3551 = vst [vmem:[%s3379 + $0x4a8] sm:$0xff] %v3550
                %v3552 = vld [vmem:[%s3378 + $0x2b0] sm:$0xff]
                %3553 = vst [vmem:[%s3379 + $0x4b0] sm:$0xff] %v3552
                %v3554 = vld [vmem:[%s3378 + $0x2b8] sm:$0xff]
                %3555 = vst [vmem:[%s3379 + $0x4b8] sm:$0xff] %v3554
                %v3556 = vld [vmem:[%s3378 + $0x2c0] sm:$0xff]
                %3557 = vst [vmem:[%s3379 + $0x4c0] sm:$0xff] %v3556
                %v3558 = vld [vmem:[%s3378 + $0x2c8] sm:$0xff]
                %3559 = vst [vmem:[%s3379 + $0x4c8] sm:$0xff] %v3558
                %v3560 = vld [vmem:[%s3378 + $0x2d0] sm:$0xff]
                %3561 = vst [vmem:[%s3379 + $0x4d0] sm:$0xff] %v3560
                %v3562 = vld [vmem:[%s3378 + $0x2d8] sm:$0xff]
                %3563 = vst [vmem:[%s3379 + $0x4d8] sm:$0xff] %v3562
                %v3564 = vld [vmem:[%s3378 + $0x2e0] sm:$0xff]
                %3565 = vst [vmem:[%s3379 + $0x4e0] sm:$0xff] %v3564
                %v3566 = vld [vmem:[%s3378 + $0x2e8] sm:$0xff]
                %3567 = vst [vmem:[%s3379 + $0x4e8] sm:$0xff] %v3566
                %v3568 = vld [vmem:[%s3378 + $0x2f0] sm:$0xff]
                %3569 = vst [vmem:[%s3379 + $0x4f0] sm:$0xff] %v3568
                %v3570 = vld [vmem:[%s3378 + $0x2f8] sm:$0xff]
                %3571 = vst [vmem:[%s3379 + $0x4f8] sm:$0xff] %v3570
                %v3572 = vld [vmem:[%s3378 + $0x300] sm:$0xff]
                %3573 = vst [vmem:[%s3379 + $0x500] sm:$0xff] %v3572
                %v3574 = vld [vmem:[%s3378 + $0x308] sm:$0xff]
                %3575 = vst [vmem:[%s3379 + $0x508] sm:$0xff] %v3574
                %v3576 = vld [vmem:[%s3378 + $0x310] sm:$0xff]
                %3577 = vst [vmem:[%s3379 + $0x510] sm:$0xff] %v3576
                %v3578 = vld [vmem:[%s3378 + $0x318] sm:$0xff]
                %3579 = vst [vmem:[%s3379 + $0x518] sm:$0xff] %v3578
                %v3580 = vld [vmem:[%s3378 + $0x320] sm:$0xff]
                %3581 = vst [vmem:[%s3379 + $0x520] sm:$0xff] %v3580
                %v3582 = vld [vmem:[%s3378 + $0x328] sm:$0xff]
                %3583 = vst [vmem:[%s3379 + $0x528] sm:$0xff] %v3582
                %v3584 = vld [vmem:[%s3378 + $0x330] sm:$0xff]
                %3585 = vst [vmem:[%s3379 + $0x530] sm:$0xff] %v3584
                %v3586 = vld [vmem:[%s3378 + $0x338] sm:$0xff]
                %3587 = vst [vmem:[%s3379 + $0x538] sm:$0xff] %v3586
                %v3588 = vld [vmem:[%s3378 + $0x340] sm:$0xff]
                %3589 = vst [vmem:[%s3379 + $0x540] sm:$0xff] %v3588
                %v3590 = vld [vmem:[%s3378 + $0x348] sm:$0xff]
                %3591 = vst [vmem:[%s3379 + $0x548] sm:$0xff] %v3590
                %v3592 = vld [vmem:[%s3378 + $0x350] sm:$0xff]
                %3593 = vst [vmem:[%s3379 + $0x550] sm:$0xff] %v3592
                %v3594 = vld [vmem:[%s3378 + $0x358] sm:$0xff]
                %3595 = vst [vmem:[%s3379 + $0x558] sm:$0xff] %v3594
                %v3596 = vld [vmem:[%s3378 + $0x360] sm:$0xff]
                %3597 = vst [vmem:[%s3379 + $0x560] sm:$0xff] %v3596
                %v3598 = vld [vmem:[%s3378 + $0x368] sm:$0xff]
                %3599 = vst [vmem:[%s3379 + $0x568] sm:$0xff] %v3598
                %v3600 = vld [vmem:[%s3378 + $0x370] sm:$0xff]
                %3601 = vst [vmem:[%s3379 + $0x570] sm:$0xff] %v3600
                %v3602 = vld [vmem:[%s3378 + $0x378] sm:$0xff]
                %3603 = vst [vmem:[%s3379 + $0x578] sm:$0xff] %v3602
                %v3604 = vld [vmem:[%s3378 + $0x380] sm:$0xff]
                %3605 = vst [vmem:[%s3379 + $0x580] sm:$0xff] %v3604
                %v3606 = vld [vmem:[%s3378 + $0x388] sm:$0xff]
                %3607 = vst [vmem:[%s3379 + $0x588] sm:$0xff] %v3606
                %v3608 = vld [vmem:[%s3378 + $0x390] sm:$0xff]
                %3609 = vst [vmem:[%s3379 + $0x590] sm:$0xff] %v3608
                %v3610 = vld [vmem:[%s3378 + $0x398] sm:$0xff]
                %3611 = vst [vmem:[%s3379 + $0x598] sm:$0xff] %v3610
                %v3612 = vld [vmem:[%s3378 + $0x3a0] sm:$0xff]
                %3613 = vst [vmem:[%s3379 + $0x5a0] sm:$0xff] %v3612
                %v3614 = vld [vmem:[%s3378 + $0x3a8] sm:$0xff]
                %3615 = vst [vmem:[%s3379 + $0x5a8] sm:$0xff] %v3614
                %v3616 = vld [vmem:[%s3378 + $0x3b0] sm:$0xff]
                %3617 = vst [vmem:[%s3379 + $0x5b0] sm:$0xff] %v3616
                %v3618 = vld [vmem:[%s3378 + $0x3b8] sm:$0xff]
                %3619 = vst [vmem:[%s3379 + $0x5b8] sm:$0xff] %v3618
                %v3620 = vld [vmem:[%s3378 + $0x3c0] sm:$0xff]
                %3621 = vst [vmem:[%s3379 + $0x5c0] sm:$0xff] %v3620
                %v3622 = vld [vmem:[%s3378 + $0x3c8] sm:$0xff]
                %3623 = vst [vmem:[%s3379 + $0x5c8] sm:$0xff] %v3622
                %v3624 = vld [vmem:[%s3378 + $0x3d0] sm:$0xff]
                %3625 = vst [vmem:[%s3379 + $0x5d0] sm:$0xff] %v3624
                %v3626 = vld [vmem:[%s3378 + $0x3d8] sm:$0xff]
                %3627 = vst [vmem:[%s3379 + $0x5d8] sm:$0xff] %v3626
                %v3628 = vld [vmem:[%s3378 + $0x3e0] sm:$0xff]
                %3629 = vst [vmem:[%s3379 + $0x5e0] sm:$0xff] %v3628
                %v3630 = vld [vmem:[%s3378 + $0x3e8] sm:$0xff]
                %3631 = vst [vmem:[%s3379 + $0x5e8] sm:$0xff] %v3630
                %v3632 = vld [vmem:[%s3378 + $0x3f0] sm:$0xff]
                %3633 = vst [vmem:[%s3379 + $0x5f0] sm:$0xff] %v3632
                %v3634 = vld [vmem:[%s3378 + $0x3f8] sm:$0xff]
                %3635 = vst [vmem:[%s3379 + $0x5f8] sm:$0xff] %v3634
              $region80: #{conv_bn_add_relu.1} parent=74 // loop_footer
                %s3377 = sadd.s32 1, %s3373
              $region81: #{conv_bn_add_relu.1} parent=74 // loop_footer_branch
                %3372 = sbr.rel target = $region77
              $region82: #{conv_bn_add_relu.1} parent=74 // loop_exit
                _
            $region75: #{conv_bn_add_relu.1} parent=70 // pred_fallthru
              _
            // Predicated region
            $region83: #{conv_bn_add_relu.1} parent=70 // pred_check
              _
            $region84: #{conv_bn_add_relu.1} parent=70 // pred_check_branch
              %3637 = sbr.rel target = $region86
            $region85: #{conv_bn_add_relu.1} parent=70 // pred_region
              _
            $region86: #{conv_bn_add_relu.1} parent=70 // pred_fallthru
              _
          $region71: #{conv_bn_add_relu.1} parent=66 // pred_fallthru
            _
          %3638 = vnop
        $region67: #{conv_bn_add_relu.1} parent=58 // pred_fallthru
          _
      $region59: #{conv_bn_add_relu.1} parent=5 // pred_fallthru
        _
      %p3639 = scmp.le.s32.totalorder 2, %s11
      // Predicated region
      $region87: #{conv_bn_add_relu.1} parent=5 // pred_check
        %p3640 = pneg %p3639
      $region88: #{conv_bn_add_relu.1} parent=5 // pred_check_branch
        %3642 = sbr.rel (%p3640) target = $region90
      $region89: #{conv_bn_add_relu.1} parent=5 // pred_region
        %s3643 = ssub.s32 %s11, 2
        // Predicated region
        $region91: #{conv_bn_add_relu.1} parent=89 // pred_check
          %p3644 = pneg %p165
        $region92: #{conv_bn_add_relu.1} parent=89 // pred_check_branch
          %3646 = sbr.rel (%p3644) target = $region94
        $region93: #{conv_bn_add_relu.1} parent=89 // pred_region
          %s3647 = sand.u32 %s150, 1
          %s3648 = sand.u32 %s150, 1
          %s3649 = smul.addr %s3648, 1024
          %s3650 = scalar_lea.vmem [#allocation3], %s3649
        $region94: #{conv_bn_add_relu.1} parent=89 // pred_fallthru
          _
      $region90: #{conv_bn_add_relu.1} parent=5 // pred_fallthru
        _
    $region6: #{conv_bn_add_relu.1} parent=1 // loop_footer
      %s15 = sadd.s32 1, %s11
    $region7: #{conv_bn_add_relu.1} parent=1 // loop_footer_branch
      %10 = sbr.rel target = $region3
    $region8: #{conv_bn_add_relu.1} parent=1 // loop_exit
      _

</llo_original>
